<compile_context>
chip_gen: v5e
topology: v5e:2x2
jax: 0.10.0
libtpu: 0.0.40
codegen_flags: <defaults>
</compile_context>

<pallas_src>
import functools

import jax
import jax.numpy as jnp
from jax.experimental import pallas as pl
from jax.experimental.pallas import tpu as pltpu


def _round_up(x, m):
    return (x + m - 1) // m * m


def _pick_tb(B, block_b):
    """Pick a batch tile: round small batches up to a sublane multiple,
    otherwise choose the candidate minimizing padded rows (ties -> larger)."""
    if B <= block_b:
        return _round_up(max(B, 1), 16)
    cands = sorted({c for c in (128, 256, 512, block_b) if c <= block_b})
    best_bp, best_tb = None, None
    for tb in cands:
        bp = _round_up(B, tb)
        if best_bp is None or bp < best_bp or (bp == best_bp and tb > best_tb):
            best_bp, best_tb = bp, tb
    return best_tb


def adapter_kernel(x_ref, wb_ref, bb_ref, wl_ref, bl_ref,
                   logits_ref, hidden_ref):
    # x_ref:  [TB, INp]    bf16 flattened-input block (streams over the grid)
    # wb_ref: [INp, HIDp]  bf16 backbone weight (resident across the grid)
    # bb_ref: [1, HIDp]    f32 backbone bias
    # wl_ref: [HIDp, OUTp] bf16 adapter Linear(1000,10) weight (resident)
    # bl_ref: [1, OUTp]    f32 adapter Linear bias
    x = x_ref[...]  # already bf16 — no in-kernel cast

    # Synthetic backbone: linear + ReLU (bf16 MXU matmul, f32 accumulation).
    h = jnp.dot(x, wb_ref[...], preferred_element_type=jnp.float32) + bb_ref[...]
    h = jnp.maximum(h, 0.0)
    hidden_ref[...] = h.astype(hidden_ref.dtype)

    # Adapter head: Linear(1000, 10), lane-padded to 128 outputs.
    logits = jnp.dot(h.astype(jnp.bfloat16), wl_ref[...],
                     preferred_element_type=jnp.float32) + bl_ref[...]
    logits_ref[...] = logits.astype(logits_ref.dtype)


def prepare_adapter_params(w_bone, b_bone, w_lin, b_lin):
    """One-time weight preparation — call at init, NOT per forward.

    w_bone: [HID, IN]  (torch Linear convention, [out_features, in_features])
    b_bone: [HID]
    w_lin:  [OUT, HID] (torch Linear(1000, 10) weight)
    b_lin:  [OUT]
    Transposes to [in, out], zero-pads every dim to a multiple of 128, and
    casts the weight matrices to bf16 (biases kept f32).
    """
    HID, IN = w_bone.shape
    OUT = w_lin.shape[0]
    INp = _round_up(IN, 128)
    HIDp = _round_up(HID, 128)
    OUTp = _round_up(OUT, 128)

    wb = jnp.zeros((INp, HIDp), jnp.bfloat16).at[:IN, :HID].set(
        jnp.transpose(w_bone).astype(jnp.bfloat16))
    bb = jnp.zeros((1, HIDp), jnp.float32).at[0, :HID].set(
        b_bone.astype(jnp.float32))
    wl = jnp.zeros((HIDp, OUTp), jnp.bfloat16).at[:HID, :OUT].set(
        jnp.transpose(w_lin).astype(jnp.bfloat16))
    bl = jnp.zeros((1, OUTp), jnp.float32).at[0, :OUT].set(
        b_lin.astype(jnp.float32))
    return {"wb": wb, "bb": bb, "wl": wl, "bl": bl,
            "IN": IN, "HID": HID, "OUT": OUT}


@functools.partial(jax.jit, static_argnames=("in_dim", "hid", "out", "tb"))
def _adapter_forward_impl(x_flat, wb, bb, wl, bl, *, in_dim, hid, out, tb):
    B = x_flat.shape[0]
    INp, HIDp = wb.shape
    OUTp = wl.shape[1]

    TB = tb
    Bp = _round_up(B, TB)

    # Input prep: cast to bf16 (half the HBM traffic of the old f32 stream);
    # skip the zero-pad copy entirely when no padding is needed.
    if B == Bp and in_dim == INp:
        x_p = x_flat.astype(jnp.bfloat16)
    else:
        x_p = jnp.zeros((Bp, INp), jnp.bfloat16).at[:B, :in_dim].set(
            x_flat.astype(jnp.bfloat16))

    grid = (Bp // TB,)

    # Cost estimate reflects what the kernel actually does (padded shapes,
    # bf16 inputs/weights, f32 outputs).
    flops = 2 * Bp * INp * HIDp + 2 * Bp * HIDp * OUTp
    bytes_accessed = (Bp * INp * 2                 # x (bf16)
                      + INp * HIDp * 2             # wb (bf16)
                      + HIDp * OUTp * 2            # wl (bf16)
                      + (HIDp + OUTp) * 4          # biases (f32)
                      + Bp * (HIDp + OUTp) * 4)    # hidden + logits (f32)

    logits_p, hidden_p = pl.pallas_call(
        adapter_kernel,
        out_shape=(
            jax.ShapeDtypeStruct((Bp, OUTp), jnp.float32),
            jax.ShapeDtypeStruct((Bp, HIDp), jnp.float32),
        ),
        grid=grid,
        in_specs=[
            pl.BlockSpec((TB, INp), lambda i: (i, 0)),      # x block streams
            pl.BlockSpec((INp, HIDp), lambda i: (0, 0)),    # weights resident
            pl.BlockSpec((1, HIDp), lambda i: (0, 0)),
            pl.BlockSpec((HIDp, OUTp), lambda i: (0, 0)),
            pl.BlockSpec((1, OUTp), lambda i: (0, 0)),
        ],
        out_specs=(
            pl.BlockSpec((TB, OUTp), lambda i: (i, 0)),     # logits block
            pl.BlockSpec((TB, HIDp), lambda i: (i, 0)),     # hidden block
        ),
        compiler_params=pltpu.CompilerParams(
            dimension_semantics=("parallel",),
            vmem_limit_bytes=32 << 20,   # ~14 MiB used at TB=512; safe on v7x 64 MiB/TC
        ),
        cost_estimate=pl.CostEstimate(
            flops=flops, transcendentals=0, bytes_accessed=bytes_accessed),
    )(x_p, wb, bb, wl, bl)

    # Slice away batch / lane padding (padded lanes are exactly zero-weighted).
    return logits_p[:B, :out], hidden_p[:B, :hid]


def adapter_forward(x_nchw, params, *, block_b=512):
    """x_nchw: [B, C, H, W] float32 (PyTorch NCHW). Returns (logits, hidden)."""
    B = x_nchw.shape[0]
    x_flat = x_nchw.reshape(B, -1).astype(jnp.float32)   # torch.flatten(x, 1)
    tb = _pick_tb(B, block_b)
    return _adapter_forward_impl(
        x_flat, params["wb"], params["bb"], params["wl"], params["bl"],
        in_dim=params["IN"], hid=params["HID"], out=params["OUT"], tb=tb)


if __name__ == "__main__":
    key = jax.random.PRNGKey(0)
    k_x, k_wb, k_bb, k_wl, k_bl = jax.random.split(key, 5)

    B, C, H, W = 2, 4, 16, 16        # input image, NCHW like PyTorch
    IN = C * H * W                   # 1024 after flatten
    HID = 1000                       # backbone output dim (Linear(1000, 10) input)
    OUT = 10

    x = jax.random.normal(k_x, (B, C, H, W), dtype=jnp.float32)
    w_bone = jax.random.normal(k_wb, (HID, IN), dtype=jnp.float32) * 0.02
    b_bone = jax.random.normal(k_bb, (HID,), dtype=jnp.float32) * 0.02
    w_lin = jax.random.normal(k_wl, (OUT, HID), dtype=jnp.float32) * 0.02
    b_lin = jax.random.normal(k_bl, (OUT,), dtype=jnp.float32) * 0.02

    # One-time weight prep (transpose + pad + bf16 cast), then the forward.
    params = prepare_adapter_params(w_bone, b_bone, w_lin, b_lin)
    logits, hidden = adapter_forward(x, params)
    jax.block_until_ready((logits, hidden))

    assert logits.shape == (B, OUT) and hidden.shape == (B, HID)

    x_flat = x.reshape(B, -1)

    # Reference mirroring the kernel's numerics (bf16 weights/inputs, f32 acc).
    wb_bf = w_bone.astype(jnp.bfloat16)
    wl_bf = w_lin.astype(jnp.bfloat16)
    h_ref = jnp.maximum(
        jnp.dot(x_flat.astype(jnp.bfloat16), wb_bf.T,
                preferred_element_type=jnp.float32) + b_bone, 0.0)
    l_ref = jnp.dot(h_ref.astype(jnp.bfloat16), wl_bf.T,
                    preferred_element_type=jnp.float32) + b_lin
    assert jnp.allclose(hidden, h_ref, atol=5e-3, rtol=5e-3)
    assert jnp.allclose(logits, l_ref, atol=5e-3, rtol=5e-3)

    # Loose check against the pure-f32 PyTorch-style reference (bf16 weights
    # introduce ~1e-3 level differences at this scale).
    h_f32 = jnp.maximum(x_flat @ w_bone.T + b_bone, 0.0)
    l_f32 = h_f32 @ w_lin.T + b_lin
    assert jnp.allclose(hidden, h_f32, atol=3e-2, rtol=3e-2)
    assert jnp.allclose(logits, l_f32, atol=3e-2, rtol=3e-2)

    print("KERNEL_OK")
</pallas_src>

<mosaic_0001>
module attributes {stable_mosaic.version = 11 : i64} {
  func.func @adapter_kernel(%arg0: i32, %arg1: memref<16x1024xbf16, #tpu.memory_space<vmem>>, %arg2: memref<1024x1024xbf16, #tpu.memory_space<vmem>>, %arg3: memref<1x1024xf32, #tpu.memory_space<vmem>>, %arg4: memref<1024x128xbf16, #tpu.memory_space<vmem>>, %arg5: memref<1x128xf32, #tpu.memory_space<vmem>>, %arg6: memref<16x128xf32, #tpu.memory_space<vmem>>, %arg7: memref<16x1024xf32, #tpu.memory_space<vmem>>) attributes {dimension_semantics = [#tpu.dimension_semantics<parallel>], iteration_bounds = array<i64: 1>, scalar_prefetch = 0 : i64, scratch_operands = 0 : i64, tpu.core_type = #tpu.core_type<tc>, window_params = [{transform_indices = @transform_0, window_bounds = array<i64: 16, 1024>}, {pipeline_mode = #tpu.pipeline_mode<synchronous>, transform_indices = @transform_1, window_bounds = array<i64: 1024, 1024>}, {pipeline_mode = #tpu.pipeline_mode<synchronous>, transform_indices = @transform_2, window_bounds = array<i64: 1, 1024>}, {pipeline_mode = #tpu.pipeline_mode<synchronous>, transform_indices = @transform_3, window_bounds = array<i64: 1024, 128>}, {pipeline_mode = #tpu.pipeline_mode<synchronous>, transform_indices = @transform_4, window_bounds = array<i64: 1, 128>}, {transform_indices = @transform_5, window_bounds = array<i64: 16, 128>}, {transform_indices = @transform_6, window_bounds = array<i64: 16, 1024>}]} {
    %c0 = arith.constant 0 : index
    %c0_0 = arith.constant 0 : index
    %0 = vector.load %arg1[%c0, %c0_0] : memref<16x1024xbf16, #tpu.memory_space<vmem>>, vector<16x1024xbf16>
    %c0_1 = arith.constant 0 : index
    %c0_2 = arith.constant 0 : index
    %1 = vector.load %arg2[%c0_1, %c0_2] : memref<1024x1024xbf16, #tpu.memory_space<vmem>>, vector<1024x1024xbf16>
    %cst = arith.constant dense<0.000000e+00> : vector<16x1024xf32>
    %2 = tpu.matmul %0, %1, %cst {dimension_numbers = #tpu.dot_dimension_numbers<[1], [0], [0], [1], [0, 0, 1, 1], [], []>} : vector<16x1024xbf16>, vector<1024x1024xbf16>, vector<16x1024xf32> -> vector<16x1024xf32>
    %c0_3 = arith.constant 0 : index
    %c0_4 = arith.constant 0 : index
    %3 = vector.load %arg3[%c0_3, %c0_4] : memref<1x1024xf32, #tpu.memory_space<vmem>>, vector<1x1024xf32>
    %4 = vector.broadcast %3 : vector<1x1024xf32> to vector<16x1024xf32>
    %5 = arith.addf %2, %4 : vector<16x1024xf32>
    %cst_5 = arith.constant 0.000000e+00 : f32
    %6 = vector.broadcast %cst_5 : f32 to vector<16x1024xf32>
    %7 = arith.maximumf %5, %6 : vector<16x1024xf32>
    %c0_6 = arith.constant 0 : index
    %c0_7 = arith.constant 0 : index
    %8 = vector.load %arg7[%c0_6, %c0_7] : memref<16x1024xf32, #tpu.memory_space<vmem>>, vector<16x1024xf32>
    tpu.vector_store %arg7[%c0_6, %c0_7], %7 {strides = array<i32>} : memref<16x1024xf32, #tpu.memory_space<vmem>>, vector<16x1024xf32>,
    %9 = arith.truncf %7 : vector<16x1024xf32> to vector<16x1024xbf16>
    %c0_8 = arith.constant 0 : index
    %c0_9 = arith.constant 0 : index
    %10 = vector.load %arg4[%c0_8, %c0_9] : memref<1024x128xbf16, #tpu.memory_space<vmem>>, vector<1024x128xbf16>
    %cst_10 = arith.constant dense<0.000000e+00> : vector<16x128xf32>
    %11 = tpu.matmul %9, %10, %cst_10 {dimension_numbers = #tpu.dot_dimension_numbers<[1], [0], [0], [1], [0, 0, 1, 1], [], []>} : vector<16x1024xbf16>, vector<1024x128xbf16>, vector<16x128xf32> -> vector<16x128xf32>
    %c0_11 = arith.constant 0 : index
    %c0_12 = arith.constant 0 : index
    %12 = vector.load %arg5[%c0_11, %c0_12] : memref<1x128xf32, #tpu.memory_space<vmem>>, vector<1x128xf32>
    %13 = vector.broadcast %12 : vector<1x128xf32> to vector<16x128xf32>
    %14 = arith.addf %11, %13 : vector<16x128xf32>
    %c0_13 = arith.constant 0 : index
    %c0_14 = arith.constant 0 : index
    %15 = vector.load %arg6[%c0_13, %c0_14] : memref<16x128xf32, #tpu.memory_space<vmem>>, vector<16x128xf32>
    tpu.vector_store %arg6[%c0_13, %c0_14], %14 {strides = array<i32>} : memref<16x128xf32, #tpu.memory_space<vmem>>, vector<16x128xf32>,
    return
  }
  func.func @transform_0(%arg0: i32) -> (i32, i32) {
    %c0_i32 = arith.constant 0 : i32
    %c0_i32_0 = arith.constant 0 : i32
    return %arg0, %c0_i32 : i32, i32
  }
  func.func @transform_1(%arg0: i32) -> (i32, i32) {
    %c0_i32 = arith.constant 0 : i32
    %c0_i32_0 = arith.constant 0 : i32
    %c0_i32_1 = arith.constant 0 : i32
    return %c0_i32, %c0_i32_0 : i32, i32
  }
  func.func @transform_2(%arg0: i32) -> (i32, i32) {
    %c0_i32 = arith.constant 0 : i32
    %c0_i32_0 = arith.constant 0 : i32
    %c0_i32_1 = arith.constant 0 : i32
    return %c0_i32, %c0_i32_0 : i32, i32
  }
  func.func @transform_3(%arg0: i32) -> (i32, i32) {
    %c0_i32 = arith.constant 0 : i32
    %c0_i32_0 = arith.constant 0 : i32
    %c0_i32_1 = arith.constant 0 : i32
    return %c0_i32, %c0_i32_0 : i32, i32
  }
  func.func @transform_4(%arg0: i32) -> (i32, i32) {
    %c0_i32 = arith.constant 0 : i32
    %c0_i32_0 = arith.constant 0 : i32
    %c0_i32_1 = arith.constant 0 : i32
    return %c0_i32, %c0_i32_0 : i32, i32
  }
  func.func @transform_5(%arg0: i32) -> (i32, i32) {
    %c0_i32 = arith.constant 0 : i32
    %c0_i32_0 = arith.constant 0 : i32
    return %arg0, %c0_i32 : i32, i32
  }
  func.func @transform_6(%arg0: i32) -> (i32, i32) {
    %c0_i32 = arith.constant 0 : i32
    %c0_i32_0 = arith.constant 0 : i32
    return %arg0, %c0_i32 : i32, i32
  }
}

</mosaic_0001>

<llo_original>
// kernel: _adapter_forward_impl.1
$region0: #{_adapter_forward_impl.1}
  #allocation0 [shape = 'u32[]', space=smem, size = 0x4, offset = 0x4, fixed_abs, tag = 'smem constant byte address 0x4 - core index']
  #allocation1 [shape = 'u32[72,128]{1,0:T(1,128)}', space=vmem, size = 0x9000, scoped, tag = 'internal scratch']
  %s0 = inlined_call_operand.vmem [shape: bf16[16,1024], index: 0, kind: input, shape index: {}]
  %s1 = inlined_call_operand.hbm [shape: bf16[1024,1024], index: 1, kind: input, shape index: {}]
  %s2 = inlined_call_operand.hbm [shape: f32[1,1024], index: 2, kind: input, shape index: {}]
  %s3 = inlined_call_operand.hbm [shape: bf16[1024,128], index: 3, kind: input, shape index: {}]
  %s4 = inlined_call_operand.hbm [shape: f32[1,128], index: 4, kind: input, shape index: {}]
  %s5 = inlined_call_operand.vmem [shape: f32[16,128], index: 5, kind: output, shape index: {0}]
  %s6 = inlined_call_operand.vmem [shape: f32[16,1024], index: 6, kind: output, shape index: {1}]
  %7 = xla_tuple %s5, %s6
  %s8 = sld [smem:[#allocation0]]
  $region54: #{_adapter_forward_impl.1} parent=0
    _
  %s10 = ssub.s32 1, %s8
  %s11 = scalar_select 0, %s10, %s8
  $region1: #{_adapter_forward_impl.1} parent=0
    #allocation2 [shape = 'u8[2097152]{0}', space=vmem, size = 0x200000, scoped, tag = 'input window, operand 1, single buffered']
    #allocation3 [shape = 's32[1]{0}', space=sflag, size = 0x4, scoped, tag = 'scoped memory for _adapter_forward_impl.1']
    #allocation4 [shape = 'u8[4096]{0}', space=vmem, size = 0x1000, scoped, tag = 'input window, operand 2, single buffered']
    #allocation5 [shape = 's32[1]{0}', space=sflag, size = 0x4, scoped, tag = 'scoped memory for _adapter_forward_impl.1']
    #allocation6 [shape = 'u8[262144]{0}', space=vmem, size = 0x40000, scoped, tag = 'input window, operand 3, single buffered']
    #allocation7 [shape = 'u8[512]{0}', space=vmem, size = 0x400, scoped, tag = 'input window, operand 4, single buffered']
    #allocation8 [shape = 's32[1]{0}', space=sflag, size = 0x4, scoped, tag = 'scoped memory for _adapter_forward_impl.1']
    %12 = vsyncpa [#allocation3], 0
    %13 = vsyncpa [#allocation5], 0
    %14 = vsyncpa [#allocation8], 0
    // Predicated region
    $region2: #{_adapter_forward_impl.1} parent=1 // pred_check
      _
    $region3: #{_adapter_forward_impl.1} parent=1 // pred_check_branch
      %16 = sbr.rel (0) target = $region5
    $region4: #{_adapter_forward_impl.1} parent=1 // pred_region
      _
    $region5: #{_adapter_forward_impl.1} parent=1 // pred_fallthru
      _
    // Predicated region
    $region6: #{_adapter_forward_impl.1} parent=1 // pred_check
      _
    $region7: #{_adapter_forward_impl.1} parent=1 // pred_check_branch
      %18 = sbr.rel (0) target = $region9
    $region8: #{_adapter_forward_impl.1} parent=1 // pred_region
      %20 = vsyncadd [#allocation3], 0
      %s21 = sshll.u32 %s1, 4
      %s22 = int_to_ptr.hbm [resolvable:$true] %s21
      %s23 = sshll.u32 [#allocation2], 4
      %s24 = int_to_ptr.vmem [resolvable:$true] %s23
      %29 = dma.hbm_to_vmem [thread:$0]  %s22, 65536, %s24, [#allocation3], 512, 512, 32
    $region9: #{_adapter_forward_impl.1} parent=1 // pred_fallthru
      _
    // Predicated region
    $region10: #{_adapter_forward_impl.1} parent=1 // pred_check
      _
    $region11: #{_adapter_forward_impl.1} parent=1 // pred_check_branch
      %31 = sbr.rel (0) target = $region13
    $region12: #{_adapter_forward_impl.1} parent=1 // pred_region
      %33 = vsyncadd [#allocation5], 0
      %s35 = sshll.u32 %s2, 4
      %s36 = int_to_ptr.hbm [resolvable:$true] %s35
      %s37 = sshll.u32 [#allocation4], 4
      %s38 = int_to_ptr.vmem [resolvable:$true] %s37
      %40 = dma.hbm_to_vmem [thread:$0]  %s36, 128, %s38, [#allocation5]
    $region13: #{_adapter_forward_impl.1} parent=1 // pred_fallthru
      _
    // Predicated region
    $region14: #{_adapter_forward_impl.1} parent=1 // pred_check
      _
    $region15: #{_adapter_forward_impl.1} parent=1 // pred_check_branch
      %42 = sbr.rel (0) target = $region17
    $region16: #{_adapter_forward_impl.1} parent=1 // pred_region
      %44 = vsyncadd [#allocation5], 0
      %s45 = sshll.u32 %s3, 4
      %s46 = int_to_ptr.hbm [resolvable:$true] %s45
      %s47 = sshll.u32 [#allocation6], 4
      %s48 = int_to_ptr.vmem [resolvable:$true] %s47
      %53 = dma.hbm_to_vmem [thread:$0]  %s46, 8192, %s48, [#allocation5], 64, 64, 4
    $region17: #{_adapter_forward_impl.1} parent=1 // pred_fallthru
      _
    // Predicated region
    $region18: #{_adapter_forward_impl.1} parent=1 // pred_check
      _
    $region19: #{_adapter_forward_impl.1} parent=1 // pred_check_branch
      %55 = sbr.rel (0) target = $region21
    $region20: #{_adapter_forward_impl.1} parent=1 // pred_region
      %57 = vsyncadd [#allocation8], 0
      %s59 = sshll.u32 %s4, 4
      %s60 = int_to_ptr.hbm [resolvable:$true] %s59
      %s61 = sshll.u32 [#allocation7], 4
      %s62 = int_to_ptr.vmem [resolvable:$true] %s61
      %64 = dma.hbm_to_vmem [thread:$0]  %s60, 16, %s62, [#allocation8]
    $region21: #{_adapter_forward_impl.1} parent=1 // pred_fallthru
      _
    // Predicated region
    $region22: #{_adapter_forward_impl.1} parent=1 // pred_check
      _
    $region23: #{_adapter_forward_impl.1} parent=1 // pred_check_branch
      %66 = sbr.rel (0) target = $region25
    $region24: #{_adapter_forward_impl.1} parent=1 // pred_region
      %68 = dma.done [#allocation3], 65536
    $region25: #{_adapter_forward_impl.1} parent=1 // pred_fallthru
      _
    // Predicated region
    $region26: #{_adapter_forward_impl.1} parent=1 // pred_check
      _
    $region27: #{_adapter_forward_impl.1} parent=1 // pred_check_branch
      %70 = sbr.rel (0) target = $region29
    $region28: #{_adapter_forward_impl.1} parent=1 // pred_region
      %72 = dma.done [#allocation5], 128
    $region29: #{_adapter_forward_impl.1} parent=1 // pred_fallthru
      _
    // Predicated region
    $region30: #{_adapter_forward_impl.1} parent=1 // pred_check
      _
    $region31: #{_adapter_forward_impl.1} parent=1 // pred_check_branch
      %74 = sbr.rel (0) target = $region33
    $region32: #{_adapter_forward_impl.1} parent=1 // pred_region
      %76 = dma.done [#allocation5], 8192
    $region33: #{_adapter_forward_impl.1} parent=1 // pred_fallthru
      _
    // Predicated region
    $region34: #{_adapter_forward_impl.1} parent=1 // pred_check
      _
    $region35: #{_adapter_forward_impl.1} parent=1 // pred_check_branch
      %78 = sbr.rel (0) target = $region37
    $region36: #{_adapter_forward_impl.1} parent=1 // pred_region
      %80 = dma.done [#allocation8], 16
    $region37: #{_adapter_forward_impl.1} parent=1 // pred_fallthru
      _
    %v81 = vld [vmem:[%s0] sm:$0xff]
    %v82 = vld [vmem:[%s0 + $0x8] sm:$0xff]
    %v83 = vld [vmem:[%s0 + $0x10] sm:$0xff]
    %v84 = vld [vmem:[%s0 + $0x18] sm:$0xff]
    %v85 = vld [vmem:[%s0 + $0x20] sm:$0xff]
    %v86 = vld [vmem:[%s0 + $0x28] sm:$0xff]
    %v87 = vld [vmem:[%s0 + $0x30] sm:$0xff]
    %v88 = vld [vmem:[%s0 + $0x38] sm:$0xff]
    %v89 = vld [vmem:[#allocation2] sm:$0xff]
    %v90 = vld [vmem:[#allocation2 + $0x8] sm:$0xff]
    %v91 = vld [vmem:[#allocation2 + $0x10] sm:$0xff]
    %v92 = vld [vmem:[#allocation2 + $0x18] sm:$0xff]
    %v93 = vld [vmem:[#allocation2 + $0x20] sm:$0xff]
    %v94 = vld [vmem:[#allocation2 + $0x28] sm:$0xff]
    %v95 = vld [vmem:[#allocation2 + $0x30] sm:$0xff]
    %v96 = vld [vmem:[#allocation2 + $0x38] sm:$0xff]
    %v97 = vld [vmem:[#allocation2 + $0x40] sm:$0xff]
    %v98 = vld [vmem:[#allocation2 + $0x48] sm:$0xff]
    %v99 = vld [vmem:[#allocation2 + $0x50] sm:$0xff]
    %v100 = vld [vmem:[#allocation2 + $0x58] sm:$0xff]
    %v101 = vld [vmem:[#allocation2 + $0x60] sm:$0xff]
    %v102 = vld [vmem:[#allocation2 + $0x68] sm:$0xff]
    %v103 = vld [vmem:[#allocation2 + $0x70] sm:$0xff]
    %v104 = vld [vmem:[#allocation2 + $0x78] sm:$0xff]
    %v105 = vld [vmem:[#allocation2 + $0x80] sm:$0xff]
    %v106 = vld [vmem:[#allocation2 + $0x88] sm:$0xff]
    %v107 = vld [vmem:[#allocation2 + $0x90] sm:$0xff]
    %v108 = vld [vmem:[#allocation2 + $0x98] sm:$0xff]
    %v109 = vld [vmem:[#allocation2 + $0xa0] sm:$0xff]
    %v110 = vld [vmem:[#allocation2 + $0xa8] sm:$0xff]
    %v111 = vld [vmem:[#allocation2 + $0xb0] sm:$0xff]
    %v112 = vld [vmem:[#allocation2 + $0xb8] sm:$0xff]
    %v113 = vld [vmem:[#allocation2 + $0xc0] sm:$0xff]
    %v114 = vld [vmem:[#allocation2 + $0xc8] sm:$0xff]
    %v115 = vld [vmem:[#allocation2 + $0xd0] sm:$0xff]
    %v116 = vld [vmem:[#allocation2 + $0xd8] sm:$0xff]
    %v117 = vld [vmem:[#allocation2 + $0xe0] sm:$0xff]
    %v118 = vld [vmem:[#allocation2 + $0xe8] sm:$0xff]
    %v119 = vld [vmem:[#allocation2 + $0xf0] sm:$0xff]
    %v120 = vld [vmem:[#allocation2 + $0xf8] sm:$0xff]
    %v121 = vld [vmem:[#allocation2 + $0x100] sm:$0xff]
    %v122 = vld [vmem:[#allocation2 + $0x108] sm:$0xff]
    %v123 = vld [vmem:[#allocation2 + $0x110] sm:$0xff]
    %v124 = vld [vmem:[#allocation2 + $0x118] sm:$0xff]
    %v125 = vld [vmem:[#allocation2 + $0x120] sm:$0xff]
    %v126 = vld [vmem:[#allocation2 + $0x128] sm:$0xff]
    %v127 = vld [vmem:[#allocation2 + $0x130] sm:$0xff]
    %v128 = vld [vmem:[#allocation2 + $0x138] sm:$0xff]
    %v129 = vld [vmem:[#allocation2 + $0x140] sm:$0xff]
    %v130 = vld [vmem:[#allocation2 + $0x148] sm:$0xff]
    %v131 = vld [vmem:[#allocation2 + $0x150] sm:$0xff]
    %v132 = vld [vmem:[#allocation2 + $0x158] sm:$0xff]
    %v133 = vld [vmem:[#allocation2 + $0x160] sm:$0xff]
    %v134 = vld [vmem:[#allocation2 + $0x168] sm:$0xff]
    %v135 = vld [vmem:[#allocation2 + $0x170] sm:$0xff]
    %v136 = vld [vmem:[#allocation2 + $0x178] sm:$0xff]
    %v137 = vld [vmem:[#allocation2 + $0x180] sm:$0xff]
    %v138 = vld [vmem:[#allocation2 + $0x188] sm:$0xff]
    %v139 = vld [vmem:[#allocation2 + $0x190] sm:$0xff]
    %v140 = vld [vmem:[#allocation2 + $0x198] sm:$0xff]
    %v141 = vld [vmem:[#allocation2 + $0x1a0] sm:$0xff]
    %v142 = vld [vmem:[#allocation2 + $0x1a8] sm:$0xff]
    %v143 = vld [vmem:[#allocation2 + $0x1b0] sm:$0xff]
    %v144 = vld [vmem:[#allocation2 + $0x1b8] sm:$0xff]
    %v145 = vld [vmem:[#allocation2 + $0x1c0] sm:$0xff]
    %v146 = vld [vmem:[#allocation2 + $0x1c8] sm:$0xff]
    %v147 = vld [vmem:[#allocation2 + $0x1d0] sm:$0xff]
    %v148 = vld [vmem:[#allocation2 + $0x1d8] sm:$0xff]
    %v149 = vld [vmem:[#allocation2 + $0x1e0] sm:$0xff]
    %v150 = vld [vmem:[#allocation2 + $0x1e8] sm:$0xff]
    %v151 = vld [vmem:[#allocation2 + $0x1f0] sm:$0xff]
    %v152 = vld [vmem:[#allocation2 + $0x1f8] sm:$0xff]
    %v153 = vld [vmem:[#allocation2 + $0x200] sm:$0xff]
    %v154 = vld [vmem:[#allocation2 + $0x208] sm:$0xff]
    %v155 = vld [vmem:[#allocation2 + $0x210] sm:$0xff]
    %v156 = vld [vmem:[#allocation2 + $0x218] sm:$0xff]
    %v157 = vld [vmem:[#allocation2 + $0x220] sm:$0xff]
    %v158 = vld [vmem:[#allocation2 + $0x228] sm:$0xff]
    %v159 = vld [vmem:[#allocation2 + $0x230] sm:$0xff]
    %v160 = vld [vmem:[#allocation2 + $0x238] sm:$0xff]
    %v161 = vld [vmem:[#allocation2 + $0x240] sm:$0xff]
    %v162 = vld [vmem:[#allocation2 + $0x248] sm:$0xff]
    %v163 = vld [vmem:[#allocation2 + $0x250] sm:$0xff]
    %v164 = vld [vmem:[#allocation2 + $0x258] sm:$0xff]
    %v165 = vld [vmem:[#allocation2 + $0x260] sm:$0xff]
    %v166 = vld [vmem:[#allocation2 + $0x268] sm:$0xff]
    %v167 = vld [vmem:[#allocation2 + $0x270] sm:$0xff]
    %v168 = vld [vmem:[#allocation2 + $0x278] sm:$0xff]
    %v169 = vld [vmem:[#allocation2 + $0x280] sm:$0xff]
    %v170 = vld [vmem:[#allocation2 + $0x288] sm:$0xff]
    %v171 = vld [vmem:[#allocation2 + $0x290] sm:$0xff]
    %v172 = vld [vmem:[#allocation2 + $0x298] sm:$0xff]
    %v173 = vld [vmem:[#allocation2 + $0x2a0] sm:$0xff]
    %v174 = vld [vmem:[#allocation2 + $0x2a8] sm:$0xff]
    %v175 = vld [vmem:[#allocation2 + $0x2b0] sm:$0xff]
    %v176 = vld [vmem:[#allocation2 + $0x2b8] sm:$0xff]
    %v177 = vld [vmem:[#allocation2 + $0x2c0] sm:$0xff]
    %v178 = vld [vmem:[#allocation2 + $0x2c8] sm:$0xff]
    %v179 = vld [vmem:[#allocation2 + $0x2d0] sm:$0xff]
    %v180 = vld [vmem:[#allocation2 + $0x2d8] sm:$0xff]
    %v181 = vld [vmem:[#allocation2 + $0x2e0] sm:$0xff]
    %v182 = vld [vmem:[#allocation2 + $0x2e8] sm:$0xff]
    %v183 = vld [vmem:[#allocation2 + $0x2f0] sm:$0xff]
    %v184 = vld [vmem:[#allocation2 + $0x2f8] sm:$0xff]
    %v185 = vld [vmem:[#allocation2 + $0x300] sm:$0xff]
    %v186 = vld [vmem:[#allocation2 + $0x308] sm:$0xff]
    %v187 = vld [vmem:[#allocation2 + $0x310] sm:$0xff]
    %v188 = vld [vmem:[#allocation2 + $0x318] sm:$0xff]
    %v189 = vld [vmem:[#allocation2 + $0x320] sm:$0xff]
    %v190 = vld [vmem:[#allocation2 + $0x328] sm:$0xff]
    %v191 = vld [vmem:[#allocation2 + $0x330] sm:$0xff]
    %v192 = vld [vmem:[#allocation2 + $0x338] sm:$0xff]
    %v193 = vld [vmem:[#allocation2 + $0x340] sm:$0xff]
    %v194 = vld [vmem:[#allocation2 + $0x348] sm:$0xff]
    %v195 = vld [vmem:[#allocation2 + $0x350] sm:$0xff]
    %v196 = vld [vmem:[#allocation2 + $0x358] sm:$0xff]
    %v197 = vld [vmem:[#allocation2 + $0x360] sm:$0xff]
    %v198 = vld [vmem:[#allocation2 + $0x368] sm:$0xff]
    %v199 = vld [vmem:[#allocation2 + $0x370] sm:$0xff]
    %v200 = vld [vmem:[#allocation2 + $0x378] sm:$0xff]
    %v201 = vld [vmem:[#allocation2 + $0x380] sm:$0xff]
    %v202 = vld [vmem:[#allocation2 + $0x388] sm:$0xff]
    %v203 = vld [vmem:[#allocation2 + $0x390] sm:$0xff]
    %v204 = vld [vmem:[#allocation2 + $0x398] sm:$0xff]
    %v205 = vld [vmem:[#allocation2 + $0x3a0] sm:$0xff]
    %v206 = vld [vmem:[#allocation2 + $0x3a8] sm:$0xff]
    %v207 = vld [vmem:[#allocation2 + $0x3b0] sm:$0xff]
    %v208 = vld [vmem:[#allocation2 + $0x3b8] sm:$0xff]
    %v209 = vld [vmem:[#allocation2 + $0x3c0] sm:$0xff]
    %v210 = vld [vmem:[#allocation2 + $0x3c8] sm:$0xff]
    %v211 = vld [vmem:[#allocation2 + $0x3d0] sm:$0xff]
    %v212 = vld [vmem:[#allocation2 + $0x3d8] sm:$0xff]
    %v213 = vld [vmem:[#allocation2 + $0x3e0] sm:$0xff]
    %v214 = vld [vmem:[#allocation2 + $0x3e8] sm:$0xff]
    %v215 = vld [vmem:[#allocation2 + $0x3f0] sm:$0xff]
    %v216 = vld [vmem:[#allocation2 + $0x3f8] sm:$0xff]
    %v217 = vld [vmem:[#allocation2 + $0x400] sm:$0xff]
    %v218 = vld [vmem:[#allocation2 + $0x408] sm:$0xff]
    %v219 = vld [vmem:[#allocation2 + $0x410] sm:$0xff]
    %v220 = vld [vmem:[#allocation2 + $0x418] sm:$0xff]
    %v221 = vld [vmem:[#allocation2 + $0x420] sm:$0xff]
    %v222 = vld [vmem:[#allocation2 + $0x428] sm:$0xff]
    %v223 = vld [vmem:[#allocation2 + $0x430] sm:$0xff]
    %v224 = vld [vmem:[#allocation2 + $0x438] sm:$0xff]
    %v225 = vld [vmem:[#allocation2 + $0x440] sm:$0xff]
    %v226 = vld [vmem:[#allocation2 + $0x448] sm:$0xff]
    %v227 = vld [vmem:[#allocation2 + $0x450] sm:$0xff]
    %v228 = vld [vmem:[#allocation2 + $0x458] sm:$0xff]
    %v229 = vld [vmem:[#allocation2 + $0x460] sm:$0xff]
    %v230 = vld [vmem:[#allocation2 + $0x468] sm:$0xff]
    %v231 = vld [vmem:[#allocation2 + $0x470] sm:$0xff]
    %v232 = vld [vmem:[#allocation2 + $0x478] sm:$0xff]
    %v233 = vld [vmem:[#allocation2 + $0x480] sm:$0xff]
    %v234 = vld [vmem:[#allocation2 + $0x488] sm:$0xff]
    %v235 = vld [vmem:[#allocation2 + $0x490] sm:$0xff]
    %v236 = vld [vmem:[#allocation2 + $0x498] sm:$0xff]
    %v237 = vld [vmem:[#allocation2 + $0x4a0] sm:$0xff]
    %v238 = vld [vmem:[#allocation2 + $0x4a8] sm:$0xff]
    %v239 = vld [vmem:[#allocation2 + $0x4b0] sm:$0xff]
    %v240 = vld [vmem:[#allocation2 + $0x4b8] sm:$0xff]
    %v241 = vld [vmem:[#allocation2 + $0x4c0] sm:$0xff]
    %v242 = vld [vmem:[#allocation2 + $0x4c8] sm:$0xff]
    %v243 = vld [vmem:[#allocation2 + $0x4d0] sm:$0xff]
    %v244 = vld [vmem:[#allocation2 + $0x4d8] sm:$0xff]
    %v245 = vld [vmem:[#allocation2 + $0x4e0] sm:$0xff]
    %v246 = vld [vmem:[#allocation2 + $0x4e8] sm:$0xff]
    %v247 = vld [vmem:[#allocation2 + $0x4f0] sm:$0xff]
    %v248 = vld [vmem:[#allocation2 + $0x4f8] sm:$0xff]
    %v249 = vld [vmem:[#allocation2 + $0x500] sm:$0xff]
    %v250 = vld [vmem:[#allocation2 + $0x508] sm:$0xff]
    %v251 = vld [vmem:[#allocation2 + $0x510] sm:$0xff]
    %v252 = vld [vmem:[#allocation2 + $0x518] sm:$0xff]
    %v253 = vld [vmem:[#allocation2 + $0x520] sm:$0xff]
    %v254 = vld [vmem:[#allocation2 + $0x528] sm:$0xff]
    %v255 = vld [vmem:[#allocation2 + $0x530] sm:$0xff]
    %v256 = vld [vmem:[#allocation2 + $0x538] sm:$0xff]
    %v257 = vld [vmem:[#allocation2 + $0x540] sm:$0xff]
    %v258 = vld [vmem:[#allocation2 + $0x548] sm:$0xff]
    %v259 = vld [vmem:[#allocation2 + $0x550] sm:$0xff]
    %v260 = vld [vmem:[#allocation2 + $0x558] sm:$0xff]
    %v261 = vld [vmem:[#allocation2 + $0x560] sm:$0xff]
    %v262 = vld [vmem:[#allocation2 + $0x568] sm:$0xff]
    %v263 = vld [vmem:[#allocation2 + $0x570] sm:$0xff]
    %v264 = vld [vmem:[#allocation2 + $0x578] sm:$0xff]
    %v265 = vld [vmem:[#allocation2 + $0x580] sm:$0xff]
    %v266 = vld [vmem:[#allocation2 + $0x588] sm:$0xff]
    %v267 = vld [vmem:[#allocation2 + $0x590] sm:$0xff]
    %v268 = vld [vmem:[#allocation2 + $0x598] sm:$0xff]
    %v269 = vld [vmem:[#allocation2 + $0x5a0] sm:$0xff]
    %v270 = vld [vmem:[#allocation2 + $0x5a8] sm:$0xff]
    %v271 = vld [vmem:[#allocation2 + $0x5b0] sm:$0xff]
    %v272 = vld [vmem:[#allocation2 + $0x5b8] sm:$0xff]
    %v273 = vld [vmem:[#allocation2 + $0x5c0] sm:$0xff]
    %v274 = vld [vmem:[#allocation2 + $0x5c8] sm:$0xff]
    %v275 = vld [vmem:[#allocation2 + $0x5d0] sm:$0xff]
    %v276 = vld [vmem:[#allocation2 + $0x5d8] sm:$0xff]
    %v277 = vld [vmem:[#allocation2 + $0x5e0] sm:$0xff]
    %v278 = vld [vmem:[#allocation2 + $0x5e8] sm:$0xff]
    %v279 = vld [vmem:[#allocation2 + $0x5f0] sm:$0xff]
    %v280 = vld [vmem:[#allocation2 + $0x5f8] sm:$0xff]
    %v281 = vld [vmem:[#allocation2 + $0x600] sm:$0xff]
    %v282 = vld [vmem:[#allocation2 + $0x608] sm:$0xff]
    %v283 = vld [vmem:[#allocation2 + $0x610] sm:$0xff]
    %v284 = vld [vmem:[#allocation2 + $0x618] sm:$0xff]
    %v285 = vld [vmem:[#allocation2 + $0x620] sm:$0xff]
    %v286 = vld [vmem:[#allocation2 + $0x628] sm:$0xff]
    %v287 = vld [vmem:[#allocation2 + $0x630] sm:$0xff]
    %v288 = vld [vmem:[#allocation2 + $0x638] sm:$0xff]
    %v289 = vld [vmem:[#allocation2 + $0x640] sm:$0xff]
    %v290 = vld [vmem:[#allocation2 + $0x648] sm:$0xff]
    %v291 = vld [vmem:[#allocation2 + $0x650] sm:$0xff]
    %v292 = vld [vmem:[#allocation2 + $0x658] sm:$0xff]
    %v293 = vld [vmem:[#allocation2 + $0x660] sm:$0xff]
    %v294 = vld [vmem:[#allocation2 + $0x668] sm:$0xff]
    %v295 = vld [vmem:[#allocation2 + $0x670] sm:$0xff]
    %v296 = vld [vmem:[#allocation2 + $0x678] sm:$0xff]
    %v297 = vld [vmem:[#allocation2 + $0x680] sm:$0xff]
    %v298 = vld [vmem:[#allocation2 + $0x688] sm:$0xff]
    %v299 = vld [vmem:[#allocation2 + $0x690] sm:$0xff]
    %v300 = vld [vmem:[#allocation2 + $0x698] sm:$0xff]
    %v301 = vld [vmem:[#allocation2 + $0x6a0] sm:$0xff]
    %v302 = vld [vmem:[#allocation2 + $0x6a8] sm:$0xff]
    %v303 = vld [vmem:[#allocation2 + $0x6b0] sm:$0xff]
    %v304 = vld [vmem:[#allocation2 + $0x6b8] sm:$0xff]
    %v305 = vld [vmem:[#allocation2 + $0x6c0] sm:$0xff]
    %v306 = vld [vmem:[#allocation2 + $0x6c8] sm:$0xff]
    %v307 = vld [vmem:[#allocation2 + $0x6d0] sm:$0xff]
    %v308 = vld [vmem:[#allocation2 + $0x6d8] sm:$0xff]
    %v309 = vld [vmem:[#allocation2 + $0x6e0] sm:$0xff]
    %v310 = vld [vmem:[#allocation2 + $0x6e8] sm:$0xff]
    %v311 = vld [vmem:[#allocation2 + $0x6f0] sm:$0xff]
    %v312 = vld [vmem:[#allocation2 + $0x6f8] sm:$0xff]
    %v313 = vld [vmem:[#allocation2 + $0x700] sm:$0xff]
    %v314 = vld [vmem:[#allocation2 + $0x708] sm:$0xff]
    %v315 = vld [vmem:[#allocation2 + $0x710] sm:$0xff]
    %v316 = vld [vmem:[#allocation2 + $0x718] sm:$0xff]
    %v317 = vld [vmem:[#allocation2 + $0x720] sm:$0xff]
    %v318 = vld [vmem:[#allocation2 + $0x728] sm:$0xff]
    %v319 = vld [vmem:[#allocation2 + $0x730] sm:$0xff]
    %v320 = vld [vmem:[#allocation2 + $0x738] sm:$0xff]
    %v321 = vld [vmem:[#allocation2 + $0x740] sm:$0xff]
    %v322 = vld [vmem:[#allocation2 + $0x748] sm:$0xff]
    %v323 = vld [vmem:[#allocation2 + $0x750] sm:$0xff]
    %v324 = vld [vmem:[#allocation2 + $0x758] sm:$0xff]
    %v325 = vld [vmem:[#allocation2 + $0x760] sm:$0xff]
    %v326 = vld [vmem:[#allocation2 + $0x768] sm:$0xff]
    %v327 = vld [vmem:[#allocation2 + $0x770] sm:$0xff]
    %v328 = vld [vmem:[#allocation2 + $0x778] sm:$0xff]
    %v329 = vld [vmem:[#allocation2 + $0x780] sm:$0xff]
    %v330 = vld [vmem:[#allocation2 + $0x788] sm:$0xff]
    %v331 = vld [vmem:[#allocation2 + $0x790] sm:$0xff]
    %v332 = vld [vmem:[#allocation2 + $0x798] sm:$0xff]
    %v333 = vld [vmem:[#allocation2 + $0x7a0] sm:$0xff]
    %v334 = vld [vmem:[#allocation2 + $0x7a8] sm:$0xff]
    %v335 = vld [vmem:[#allocation2 + $0x7b0] sm:$0xff]
    %v336 = vld [vmem:[#allocation2 + $0x7b8] sm:$0xff]
    %v337 = vld [vmem:[#allocation2 + $0x7c0] sm:$0xff]
    %v338 = vld [vmem:[#allocation2 + $0x7c8] sm:$0xff]
    %v339 = vld [vmem:[#allocation2 + $0x7d0] sm:$0xff]
    %v340 = vld [vmem:[#allocation2 + $0x7d8] sm:$0xff]
    %v341 = vld [vmem:[#allocation2 + $0x7e0] sm:$0xff]
    %v342 = vld [vmem:[#allocation2 + $0x7e8] sm:$0xff]
    %v343 = vld [vmem:[#allocation2 + $0x7f0] sm:$0xff]
    %v344 = vld [vmem:[#allocation2 + $0x7f8] sm:$0xff]
    %v345 = vld [vmem:[#allocation2 + $0x800] sm:$0xff]
    %v346 = vld [vmem:[#allocation2 + $0x808] sm:$0xff]
    %v347 = vld [vmem:[#allocation2 + $0x810] sm:$0xff]
    %v348 = vld [vmem:[#allocation2 + $0x818] sm:$0xff]
    %v349 = vld [vmem:[#allocation2 + $0x820] sm:$0xff]
    %v350 = vld [vmem:[#allocation2 + $0x828] sm:$0xff]
    %v351 = vld [vmem:[#allocation2 + $0x830] sm:$0xff]
    %v352 = vld [vmem:[#allocation2 + $0x838] sm:$0xff]
    %v353 = vld [vmem:[#allocation2 + $0x840] sm:$0xff]
    %v354 = vld [vmem:[#allocation2 + $0x848] sm:$0xff]
    %v355 = vld [vmem:[#allocation2 + $0x850] sm:$0xff]
    %v356 = vld [vmem:[#allocation2 + $0x858] sm:$0xff]
    %v357 = vld [vmem:[#allocation2 + $0x860] sm:$0xff]
    %v358 = vld [vmem:[#allocation2 + $0x868] sm:$0xff]
    %v359 = vld [vmem:[#allocation2 + $0x870] sm:$0xff]
    %v360 = vld [vmem:[#allocation2 + $0x878] sm:$0xff]
    %v361 = vld [vmem:[#allocation2 + $0x880] sm:$0xff]
    %v362 = vld [vmem:[#allocation2 + $0x888] sm:$0xff]
    %v363 = vld [vmem:[#allocation2 + $0x890] sm:$0xff]
    %v364 = vld [vmem:[#allocation2 + $0x898] sm:$0xff]
    %v365 = vld [vmem:[#allocation2 + $0x8a0] sm:$0xff]
    %v366 = vld [vmem:[#allocation2 + $0x8a8] sm:$0xff]
    %v367 = vld [vmem:[#allocation2 + $0x8b0] sm:$0xff]
    %v368 = vld [vmem:[#allocation2 + $0x8b8] sm:$0xff]
    %v369 = vld [vmem:[#allocation2 + $0x8c0] sm:$0xff]
    %v370 = vld [vmem:[#allocation2 + $0x8c8] sm:$0xff]
    %v371 = vld [vmem:[#allocation2 + $0x8d0] sm:$0xff]
    %v372 = vld [vmem:[#allocation2 + $0x8d8] sm:$0xff]
    %v373 = vld [vmem:[#allocation2 + $0x8e0] sm:$0xff]
    %v374 = vld [vmem:[#allocation2 + $0x8e8] sm:$0xff]
    %v375 = vld [vmem:[#allocation2 + $0x8f0] sm:$0xff]
    %v376 = vld [vmem:[#allocation2 + $0x8f8] sm:$0xff]
    %v377 = vld [vmem:[#allocation2 + $0x900] sm:$0xff]
    %v378 = vld [vmem:[#allocation2 + $0x908] sm:$0xff]
    %v379 = vld [vmem:[#allocation2 + $0x910] sm:$0xff]
    %v380 = vld [vmem:[#allocation2 + $0x918] sm:$0xff]
    %v381 = vld [vmem:[#allocation2 + $0x920] sm:$0xff]
    %v382 = vld [vmem:[#allocation2 + $0x928] sm:$0xff]
    %v383 = vld [vmem:[#allocation2 + $0x930] sm:$0xff]
    %v384 = vld [vmem:[#allocation2 + $0x938] sm:$0xff]
    %v385 = vld [vmem:[#allocation2 + $0x940] sm:$0xff]
    %v386 = vld [vmem:[#allocation2 + $0x948] sm:$0xff]
    %v387 = vld [vmem:[#allocation2 + $0x950] sm:$0xff]
    %v388 = vld [vmem:[#allocation2 + $0x958] sm:$0xff]
    %v389 = vld [vmem:[#allocation2 + $0x960] sm:$0xff]
    %v390 = vld [vmem:[#allocation2 + $0x968] sm:$0xff]
    %v391 = vld [vmem:[#allocation2 + $0x970] sm:$0xff]
    %v392 = vld [vmem:[#allocation2 + $0x978] sm:$0xff]
    %v393 = vld [vmem:[#allocation2 + $0x980] sm:$0xff]
    %v394 = vld [vmem:[#allocation2 + $0x988] sm:$0xff]
    %v395 = vld [vmem:[#allocation2 + $0x990] sm:$0xff]
    %v396 = vld [vmem:[#allocation2 + $0x998] sm:$0xff]
    %v397 = vld [vmem:[#allocation2 + $0x9a0] sm:$0xff]
    %v398 = vld [vmem:[#allocation2 + $0x9a8] sm:$0xff]
    %v399 = vld [vmem:[#allocation2 + $0x9b0] sm:$0xff]
    %v400 = vld [vmem:[#allocation2 + $0x9b8] sm:$0xff]
    %v401 = vld [vmem:[#allocation2 + $0x9c0] sm:$0xff]
    %v402 = vld [vmem:[#allocation2 + $0x9c8] sm:$0xff]
    %v403 = vld [vmem:[#allocation2 + $0x9d0] sm:$0xff]
    %v404 = vld [vmem:[#allocation2 + $0x9d8] sm:$0xff]
    %v405 = vld [vmem:[#allocation2 + $0x9e0] sm:$0xff]
    %v406 = vld [vmem:[#allocation2 + $0x9e8] sm:$0xff]
    %v407 = vld [vmem:[#allocation2 + $0x9f0] sm:$0xff]
    %v408 = vld [vmem:[#allocation2 + $0x9f8] sm:$0xff]
    %v409 = vld [vmem:[#allocation2 + $0xa00] sm:$0xff]
    %v410 = vld [vmem:[#allocation2 + $0xa08] sm:$0xff]
    %v411 = vld [vmem:[#allocation2 + $0xa10] sm:$0xff]
    %v412 = vld [vmem:[#allocation2 + $0xa18] sm:$0xff]
    %v413 = vld [vmem:[#allocation2 + $0xa20] sm:$0xff]
    %v414 = vld [vmem:[#allocation2 + $0xa28] sm:$0xff]
    %v415 = vld [vmem:[#allocation2 + $0xa30] sm:$0xff]
    %v416 = vld [vmem:[#allocation2 + $0xa38] sm:$0xff]
    %v417 = vld [vmem:[#allocation2 + $0xa40] sm:$0xff]
    %v418 = vld [vmem:[#allocation2 + $0xa48] sm:$0xff]
    %v419 = vld [vmem:[#allocation2 + $0xa50] sm:$0xff]
    %v420 = vld [vmem:[#allocation2 + $0xa58] sm:$0xff]
    %v421 = vld [vmem:[#allocation2 + $0xa60] sm:$0xff]
    %v422 = vld [vmem:[#allocation2 + $0xa68] sm:$0xff]
    %v423 = vld [vmem:[#allocation2 + $0xa70] sm:$0xff]
    %v424 = vld [vmem:[#allocation2 + $0xa78] sm:$0xff]
    %v425 = vld [vmem:[#allocation2 + $0xa80] sm:$0xff]
    %v426 = vld [vmem:[#allocation2 + $0xa88] sm:$0xff]
    %v427 = vld [vmem:[#allocation2 + $0xa90] sm:$0xff]
    %v428 = vld [vmem:[#allocation2 + $0xa98] sm:$0xff]
    %v429 = vld [vmem:[#allocation2 + $0xaa0] sm:$0xff]
    %v430 = vld [vmem:[#allocation2 + $0xaa8] sm:$0xff]
    %v431 = vld [vmem:[#allocation2 + $0xab0] sm:$0xff]
    %v432 = vld [vmem:[#allocation2 + $0xab8] sm:$0xff]
    %v433 = vld [vmem:[#allocation2 + $0xac0] sm:$0xff]
    %v434 = vld [vmem:[#allocation2 + $0xac8] sm:$0xff]
    %v435 = vld [vmem:[#allocation2 + $0xad0] sm:$0xff]
    %v436 = vld [vmem:[#allocation2 + $0xad8] sm:$0xff]
    %v437 = vld [vmem:[#allocation2 + $0xae0] sm:$0xff]
    %v438 = vld [vmem:[#allocation2 + $0xae8] sm:$0xff]
    %v439 = vld [vmem:[#allocation2 + $0xaf0] sm:$0xff]
    %v440 = vld [vmem:[#allocation2 + $0xaf8] sm:$0xff]
    %v441 = vld [vmem:[#allocation2 + $0xb00] sm:$0xff]
    %v442 = vld [vmem:[#allocation2 + $0xb08] sm:$0xff]
    %v443 = vld [vmem:[#allocation2 + $0xb10] sm:$0xff]
    %v444 = vld [vmem:[#allocation2 + $0xb18] sm:$0xff]
    %v445 = vld [vmem:[#allocation2 + $0xb20] sm:$0xff]
    %v446 = vld [vmem:[#allocation2 + $0xb28] sm:$0xff]
    %v447 = vld [vmem:[#allocation2 + $0xb30] sm:$0xff]
    %v448 = vld [vmem:[#allocation2 + $0xb38] sm:$0xff]
    %v449 = vld [vmem:[#allocation2 + $0xb40] sm:$0xff]
    %v450 = vld [vmem:[#allocation2 + $0xb48] sm:$0xff]
    %v451 = vld [vmem:[#allocation2 + $0xb50] sm:$0xff]
    %v452 = vld [vmem:[#allocation2 + $0xb58] sm:$0xff]
    %v453 = vld [vmem:[#allocation2 + $0xb60] sm:$0xff]
    %v454 = vld [vmem:[#allocation2 + $0xb68] sm:$0xff]
    %v455 = vld [vmem:[#allocation2 + $0xb70] sm:$0xff]
    %v456 = vld [vmem:[#allocation2 + $0xb78] sm:$0xff]
    %v457 = vld [vmem:[#allocation2 + $0xb80] sm:$0xff]
    %v458 = vld [vmem:[#allocation2 + $0xb88] sm:$0xff]
    %v459 = vld [vmem:[#allocation2 + $0xb90] sm:$0xff]
    %v460 = vld [vmem:[#allocation2 + $0xb98] sm:$0xff]
    %v461 = vld [vmem:[#allocation2 + $0xba0] sm:$0xff]
    %v462 = vld [vmem:[#allocation2 + $0xba8] sm:$0xff]
    %v463 = vld [vmem:[#allocation2 + $0xbb0] sm:$0xff]
    %v464 = vld [vmem:[#allocation2 + $0xbb8] sm:$0xff]
    %v465 = vld [vmem:[#allocation2 + $0xbc0] sm:$0xff]
    %v466 = vld [vmem:[#allocation2 + $0xbc8] sm:$0xff]
    %v467 = vld [vmem:[#allocation2 + $0xbd0] sm:$0xff]
    %v468 = vld [vmem:[#allocation2 + $0xbd8] sm:$0xff]
    %v469 = vld [vmem:[#allocation2 + $0xbe0] sm:$0xff]
    %v470 = vld [vmem:[#allocation2 + $0xbe8] sm:$0xff]
    %v471 = vld [vmem:[#allocation2 + $0xbf0] sm:$0xff]
    %v472 = vld [vmem:[#allocation2 + $0xbf8] sm:$0xff]
    %v473 = vld [vmem:[#allocation2 + $0xc00] sm:$0xff]
    %v474 = vld [vmem:[#allocation2 + $0xc08] sm:$0xff]
    %v475 = vld [vmem:[#allocation2 + $0xc10] sm:$0xff]
    %v476 = vld [vmem:[#allocation2 + $0xc18] sm:$0xff]
    %v477 = vld [vmem:[#allocation2 + $0xc20] sm:$0xff]
    %v478 = vld [vmem:[#allocation2 + $0xc28] sm:$0xff]
    %v479 = vld [vmem:[#allocation2 + $0xc30] sm:$0xff]
    %v480 = vld [vmem:[#allocation2 + $0xc38] sm:$0xff]
    %v481 = vld [vmem:[#allocation2 + $0xc40] sm:$0xff]
    %v482 = vld [vmem:[#allocation2 + $0xc48] sm:$0xff]
    %v483 = vld [vmem:[#allocation2 + $0xc50] sm:$0xff]
    %v484 = vld [vmem:[#allocation2 + $0xc58] sm:$0xff]
    %v485 = vld [vmem:[#allocation2 + $0xc60] sm:$0xff]
    %v486 = vld [vmem:[#allocation2 + $0xc68] sm:$0xff]
    %v487 = vld [vmem:[#allocation2 + $0xc70] sm:$0xff]
    %v488 = vld [vmem:[#allocation2 + $0xc78] sm:$0xff]
    %v489 = vld [vmem:[#allocation2 + $0xc80] sm:$0xff]
    %v490 = vld [vmem:[#allocation2 + $0xc88] sm:$0xff]
    %v491 = vld [vmem:[#allocation2 + $0xc90] sm:$0xff]
    %v492 = vld [vmem:[#allocation2 + $0xc98] sm:$0xff]
    %v493 = vld [vmem:[#allocation2 + $0xca0] sm:$0xff]
    %v494 = vld [vmem:[#allocation2 + $0xca8] sm:$0xff]
    %v495 = vld [vmem:[#allocation2 + $0xcb0] sm:$0xff]
    %v496 = vld [vmem:[#allocation2 + $0xcb8] sm:$0xff]
    %v497 = vld [vmem:[#allocation2 + $0xcc0] sm:$0xff]
    %v498 = vld [vmem:[#allocation2 + $0xcc8] sm:$0xff]
    %v499 = vld [vmem:[#allocation2 + $0xcd0] sm:$0xff]
    %v500 = vld [vmem:[#allocation2 + $0xcd8] sm:$0xff]
    %v501 = vld [vmem:[#allocation2 + $0xce0] sm:$0xff]
    %v502 = vld [vmem:[#allocation2 + $0xce8] sm:$0xff]
    %v503 = vld [vmem:[#allocation2 + $0xcf0] sm:$0xff]
    %v504 = vld [vmem:[#allocation2 + $0xcf8] sm:$0xff]
    %v505 = vld [vmem:[#allocation2 + $0xd00] sm:$0xff]
    %v506 = vld [vmem:[#allocation2 + $0xd08] sm:$0xff]
    %v507 = vld [vmem:[#allocation2 + $0xd10] sm:$0xff]
    %v508 = vld [vmem:[#allocation2 + $0xd18] sm:$0xff]
    %v509 = vld [vmem:[#allocation2 + $0xd20] sm:$0xff]
    %v510 = vld [vmem:[#allocation2 + $0xd28] sm:$0xff]
    %v511 = vld [vmem:[#allocation2 + $0xd30] sm:$0xff]
    %v512 = vld [vmem:[#allocation2 + $0xd38] sm:$0xff]
    %v513 = vld [vmem:[#allocation2 + $0xd40] sm:$0xff]
    %v514 = vld [vmem:[#allocation2 + $0xd48] sm:$0xff]
    %v515 = vld [vmem:[#allocation2 + $0xd50] sm:$0xff]
    %v516 = vld [vmem:[#allocation2 + $0xd58] sm:$0xff]
    %v517 = vld [vmem:[#allocation2 + $0xd60] sm:$0xff]
    %v518 = vld [vmem:[#allocation2 + $0xd68] sm:$0xff]
    %v519 = vld [vmem:[#allocation2 + $0xd70] sm:$0xff]
    %v520 = vld [vmem:[#allocation2 + $0xd78] sm:$0xff]
    %v521 = vld [vmem:[#allocation2 + $0xd80] sm:$0xff]
    %v522 = vld [vmem:[#allocation2 + $0xd88] sm:$0xff]
    %v523 = vld [vmem:[#allocation2 + $0xd90] sm:$0xff]
    %v524 = vld [vmem:[#allocation2 + $0xd98] sm:$0xff]
    %v525 = vld [vmem:[#allocation2 + $0xda0] sm:$0xff]
    %v526 = vld [vmem:[#allocation2 + $0xda8] sm:$0xff]
    %v527 = vld [vmem:[#allocation2 + $0xdb0] sm:$0xff]
    %v528 = vld [vmem:[#allocation2 + $0xdb8] sm:$0xff]
    %v529 = vld [vmem:[#allocation2 + $0xdc0] sm:$0xff]
    %v530 = vld [vmem:[#allocation2 + $0xdc8] sm:$0xff]
    %v531 = vld [vmem:[#allocation2 + $0xdd0] sm:$0xff]
    %v532 = vld [vmem:[#allocation2 + $0xdd8] sm:$0xff]
    %v533 = vld [vmem:[#allocation2 + $0xde0] sm:$0xff]
    %v534 = vld [vmem:[#allocation2 + $0xde8] sm:$0xff]
    %v535 = vld [vmem:[#allocation2 + $0xdf0] sm:$0xff]
    %v536 = vld [vmem:[#allocation2 + $0xdf8] sm:$0xff]
    %v537 = vld [vmem:[#allocation2 + $0xe00] sm:$0xff]
    %v538 = vld [vmem:[#allocation2 + $0xe08] sm:$0xff]
    %v539 = vld [vmem:[#allocation2 + $0xe10] sm:$0xff]
    %v540 = vld [vmem:[#allocation2 + $0xe18] sm:$0xff]
    %v541 = vld [vmem:[#allocation2 + $0xe20] sm:$0xff]
    %v542 = vld [vmem:[#allocation2 + $0xe28] sm:$0xff]
    %v543 = vld [vmem:[#allocation2 + $0xe30] sm:$0xff]
    %v544 = vld [vmem:[#allocation2 + $0xe38] sm:$0xff]
    %v545 = vld [vmem:[#allocation2 + $0xe40] sm:$0xff]
    %v546 = vld [vmem:[#allocation2 + $0xe48] sm:$0xff]
    %v547 = vld [vmem:[#allocation2 + $0xe50] sm:$0xff]
    %v548 = vld [vmem:[#allocation2 + $0xe58] sm:$0xff]
    %v549 = vld [vmem:[#allocation2 + $0xe60] sm:$0xff]
    %v550 = vld [vmem:[#allocation2 + $0xe68] sm:$0xff]
    %v551 = vld [vmem:[#allocation2 + $0xe70] sm:$0xff]
    %v552 = vld [vmem:[#allocation2 + $0xe78] sm:$0xff]
    %v553 = vld [vmem:[#allocation2 + $0xe80] sm:$0xff]
    %v554 = vld [vmem:[#allocation2 + $0xe88] sm:$0xff]
    %v555 = vld [vmem:[#allocation2 + $0xe90] sm:$0xff]
    %v556 = vld [vmem:[#allocation2 + $0xe98] sm:$0xff]
    %v557 = vld [vmem:[#allocation2 + $0xea0] sm:$0xff]
    %v558 = vld [vmem:[#allocation2 + $0xea8] sm:$0xff]
    %v559 = vld [vmem:[#allocation2 + $0xeb0] sm:$0xff]
    %v560 = vld [vmem:[#allocation2 + $0xeb8] sm:$0xff]
    %v561 = vld [vmem:[#allocation2 + $0xec0] sm:$0xff]
    %v562 = vld [vmem:[#allocation2 + $0xec8] sm:$0xff]
    %v563 = vld [vmem:[#allocation2 + $0xed0] sm:$0xff]
    %v564 = vld [vmem:[#allocation2 + $0xed8] sm:$0xff]
    %v565 = vld [vmem:[#allocation2 + $0xee0] sm:$0xff]
    %v566 = vld [vmem:[#allocation2 + $0xee8] sm:$0xff]
    %v567 = vld [vmem:[#allocation2 + $0xef0] sm:$0xff]
    %v568 = vld [vmem:[#allocation2 + $0xef8] sm:$0xff]
    %v569 = vld [vmem:[#allocation2 + $0xf00] sm:$0xff]
    %v570 = vld [vmem:[#allocation2 + $0xf08] sm:$0xff]
    %v571 = vld [vmem:[#allocation2 + $0xf10] sm:$0xff]
    %v572 = vld [vmem:[#allocation2 + $0xf18] sm:$0xff]
    %v573 = vld [vmem:[#allocation2 + $0xf20] sm:$0xff]
    %v574 = vld [vmem:[#allocation2 + $0xf28] sm:$0xff]
    %v575 = vld [vmem:[#allocation2 + $0xf30] sm:$0xff]
    %v576 = vld [vmem:[#allocation2 + $0xf38] sm:$0xff]
    %v577 = vld [vmem:[#allocation2 + $0xf40] sm:$0xff]
    %v578 = vld [vmem:[#allocation2 + $0xf48] sm:$0xff]
    %v579 = vld [vmem:[#allocation2 + $0xf50] sm:$0xff]
    %v580 = vld [vmem:[#allocation2 + $0xf58] sm:$0xff]
    %v581 = vld [vmem:[#allocation2 + $0xf60] sm:$0xff]
    %v582 = vld [vmem:[#allocation2 + $0xf68] sm:$0xff]
    %v583 = vld [vmem:[#allocation2 + $0xf70] sm:$0xff]
    %v584 = vld [vmem:[#allocation2 + $0xf78] sm:$0xff]
    %v585 = vld [vmem:[#allocation2 + $0xf80] sm:$0xff]
    %v586 = vld [vmem:[#allocation2 + $0xf88] sm:$0xff]
    %v587 = vld [vmem:[#allocation2 + $0xf90] sm:$0xff]
    %v588 = vld [vmem:[#allocation2 + $0xf98] sm:$0xff]
    %v589 = vld [vmem:[#allocation2 + $0xfa0] sm:$0xff]
    %v590 = vld [vmem:[#allocation2 + $0xfa8] sm:$0xff]
    %v591 = vld [vmem:[#allocation2 + $0xfb0] sm:$0xff]
    %v592 = vld [vmem:[#allocation2 + $0xfb8] sm:$0xff]
    %v593 = vld [vmem:[#allocation2 + $0xfc0] sm:$0xff]
    %v594 = vld [vmem:[#allocation2 + $0xfc8] sm:$0xff]
    %v595 = vld [vmem:[#allocation2 + $0xfd0] sm:$0xff]
    %v596 = vld [vmem:[#allocation2 + $0xfd8] sm:$0xff]
    %v597 = vld [vmem:[#allocation2 + $0xfe0] sm:$0xff]
    %v598 = vld [vmem:[#allocation2 + $0xfe8] sm:$0xff]
    %v599 = vld [vmem:[#allocation2 + $0xff0] sm:$0xff]
    %v600 = vld [vmem:[#allocation2 + $0xff8] sm:$0xff]
    %v601 = vld [vmem:[#allocation4] sm:$0xff]
    %v603 = vperm.slane %v601, 0
    %v604 = vperm.slane %v601, 1
    %v605 = vperm.slane %v601, 2
    %v606 = vperm.slane %v601, 3
    %v607 = vperm.slane %v601, 4
    %v608 = vperm.slane %v601, 5
    %v609 = vperm.slane %v601, 6
    %v610 = vperm.slane %v601, 7
    %v627 = vunpack.c.l.b16 %v81
    %v628 = vunpack.c.h.b16 %v81
    %v629 = vunpack.c.l.b16 %v82
    %v630 = vunpack.c.h.b16 %v82
    %v631 = vunpack.c.l.b16 %v83
    %v632 = vunpack.c.h.b16 %v83
    %v633 = vunpack.c.l.b16 %v84
    %v634 = vunpack.c.h.b16 %v84
    %v635 = vunpack.c.l.b16 %v85
    %v636 = vunpack.c.h.b16 %v85
    %v637 = vunpack.c.l.b16 %v86
    %v638 = vunpack.c.h.b16 %v86
    %v639 = vunpack.c.l.b16 %v87
    %v640 = vunpack.c.h.b16 %v87
    %v641 = vunpack.c.l.b16 %v88
    %v642 = vunpack.c.h.b16 %v88
    %v643 = vpack.c.b16 %v635, %v627
    %v644 = vpack.c.b16 %v636, %v628
    %v645 = vpack.c.b16 %v637, %v629
    %v646 = vpack.c.b16 %v638, %v630
    %v647 = vpack.c.b16 %v639, %v631
    %v648 = vpack.c.b16 %v640, %v632
    %v649 = vpack.c.b16 %v641, %v633
    %v650 = vpack.c.b16 %v642, %v634
    %v1171 = vunpack.c.l.b16 %v89
    %v1172 = vunpack.c.h.b16 %v89
    %v1173 = vunpack.c.l.b16 %v90
    %v1174 = vunpack.c.h.b16 %v90
    %v1175 = vunpack.c.l.b16 %v91
    %v1176 = vunpack.c.h.b16 %v91
    %v1177 = vunpack.c.l.b16 %v92
    %v1178 = vunpack.c.h.b16 %v92
    %v1179 = vunpack.c.l.b16 %v93
    %v1180 = vunpack.c.h.b16 %v93
    %v1181 = vunpack.c.l.b16 %v94
    %v1182 = vunpack.c.h.b16 %v94
    %v1183 = vunpack.c.l.b16 %v95
    %v1184 = vunpack.c.h.b16 %v95
    %v1185 = vunpack.c.l.b16 %v96
    %v1186 = vunpack.c.h.b16 %v96
    %v1187 = vunpack.c.l.b16 %v97
    %v1188 = vunpack.c.h.b16 %v97
    %v1189 = vunpack.c.l.b16 %v98
    %v1190 = vunpack.c.h.b16 %v98
    %v1191 = vunpack.c.l.b16 %v99
    %v1192 = vunpack.c.h.b16 %v99
    %v1193 = vunpack.c.l.b16 %v100
    %v1194 = vunpack.c.h.b16 %v100
    %v1195 = vunpack.c.l.b16 %v101
    %v1196 = vunpack.c.h.b16 %v101
    %v1197 = vunpack.c.l.b16 %v102
    %v1198 = vunpack.c.h.b16 %v102
    %v1199 = vunpack.c.l.b16 %v103
    %v1200 = vunpack.c.h.b16 %v103
    %v1201 = vunpack.c.l.b16 %v104
    %v1202 = vunpack.c.h.b16 %v104
    %v1203 = vunpack.c.l.b16 %v105
    %v1204 = vunpack.c.h.b16 %v105
    %v1205 = vunpack.c.l.b16 %v106
    %v1206 = vunpack.c.h.b16 %v106
    %v1207 = vunpack.c.l.b16 %v107
    %v1208 = vunpack.c.h.b16 %v107
    %v1209 = vunpack.c.l.b16 %v108
    %v1210 = vunpack.c.h.b16 %v108
    %v1211 = vunpack.c.l.b16 %v109
    %v1212 = vunpack.c.h.b16 %v109
    %v1213 = vunpack.c.l.b16 %v110
    %v1214 = vunpack.c.h.b16 %v110
    %v1215 = vunpack.c.l.b16 %v111
    %v1216 = vunpack.c.h.b16 %v111
    %v1217 = vunpack.c.l.b16 %v112
    %v1218 = vunpack.c.h.b16 %v112
    %v1219 = vunpack.c.l.b16 %v113
    %v1220 = vunpack.c.h.b16 %v113
    %v1221 = vunpack.c.l.b16 %v114
    %v1222 = vunpack.c.h.b16 %v114
    %v1223 = vunpack.c.l.b16 %v115
    %v1224 = vunpack.c.h.b16 %v115
    %v1225 = vunpack.c.l.b16 %v116
    %v1226 = vunpack.c.h.b16 %v116
    %v1227 = vunpack.c.l.b16 %v117
    %v1228 = vunpack.c.h.b16 %v117
    %v1229 = vunpack.c.l.b16 %v118
    %v1230 = vunpack.c.h.b16 %v118
    %v1231 = vunpack.c.l.b16 %v119
    %v1232 = vunpack.c.h.b16 %v119
    %v1233 = vunpack.c.l.b16 %v120
    %v1234 = vunpack.c.h.b16 %v120
    %v1235 = vunpack.c.l.b16 %v121
    %v1236 = vunpack.c.h.b16 %v121
    %v1237 = vunpack.c.l.b16 %v122
    %v1238 = vunpack.c.h.b16 %v122
    %v1239 = vunpack.c.l.b16 %v123
    %v1240 = vunpack.c.h.b16 %v123
    %v1241 = vunpack.c.l.b16 %v124
    %v1242 = vunpack.c.h.b16 %v124
    %v1243 = vunpack.c.l.b16 %v125
    %v1244 = vunpack.c.h.b16 %v125
    %v1245 = vunpack.c.l.b16 %v126
    %v1246 = vunpack.c.h.b16 %v126
    %v1247 = vunpack.c.l.b16 %v127
    %v1248 = vunpack.c.h.b16 %v127
    %v1249 = vunpack.c.l.b16 %v128
    %v1250 = vunpack.c.h.b16 %v128
    %v1251 = vunpack.c.l.b16 %v129
    %v1252 = vunpack.c.h.b16 %v129
    %v1253 = vunpack.c.l.b16 %v130
    %v1254 = vunpack.c.h.b16 %v130
    %v1255 = vunpack.c.l.b16 %v131
    %v1256 = vunpack.c.h.b16 %v131
    %v1257 = vunpack.c.l.b16 %v132
    %v1258 = vunpack.c.h.b16 %v132
    %v1259 = vunpack.c.l.b16 %v133
    %v1260 = vunpack.c.h.b16 %v133
    %v1261 = vunpack.c.l.b16 %v134
    %v1262 = vunpack.c.h.b16 %v134
    %v1263 = vunpack.c.l.b16 %v135
    %v1264 = vunpack.c.h.b16 %v135
    %v1265 = vunpack.c.l.b16 %v136
    %v1266 = vunpack.c.h.b16 %v136
    %v1267 = vunpack.c.l.b16 %v137
    %v1268 = vunpack.c.h.b16 %v137
    %v1269 = vunpack.c.l.b16 %v138
    %v1270 = vunpack.c.h.b16 %v138
    %v1271 = vunpack.c.l.b16 %v139
    %v1272 = vunpack.c.h.b16 %v139
    %v1273 = vunpack.c.l.b16 %v140
    %v1274 = vunpack.c.h.b16 %v140
    %v1275 = vunpack.c.l.b16 %v141
    %v1276 = vunpack.c.h.b16 %v141
    %v1277 = vunpack.c.l.b16 %v142
    %v1278 = vunpack.c.h.b16 %v142
    %v1279 = vunpack.c.l.b16 %v143
    %v1280 = vunpack.c.h.b16 %v143
    %v1281 = vunpack.c.l.b16 %v144
    %v1282 = vunpack.c.h.b16 %v144
    %v1283 = vunpack.c.l.b16 %v145
    %v1284 = vunpack.c.h.b16 %v145
    %v1285 = vunpack.c.l.b16 %v146
    %v1286 = vunpack.c.h.b16 %v146
    %v1287 = vunpack.c.l.b16 %v147
    %v1288 = vunpack.c.h.b16 %v147
    %v1289 = vunpack.c.l.b16 %v148
    %v1290 = vunpack.c.h.b16 %v148
    %v1291 = vunpack.c.l.b16 %v149
    %v1292 = vunpack.c.h.b16 %v149
    %v1293 = vunpack.c.l.b16 %v150
    %v1294 = vunpack.c.h.b16 %v150
    %v1295 = vunpack.c.l.b16 %v151
    %v1296 = vunpack.c.h.b16 %v151
    %v1297 = vunpack.c.l.b16 %v152
    %v1298 = vunpack.c.h.b16 %v152
    %v1299 = vunpack.c.l.b16 %v153
    %v1300 = vunpack.c.h.b16 %v153
    %v1301 = vunpack.c.l.b16 %v154
    %v1302 = vunpack.c.h.b16 %v154
    %v1303 = vunpack.c.l.b16 %v155
    %v1304 = vunpack.c.h.b16 %v155
    %v1305 = vunpack.c.l.b16 %v156
    %v1306 = vunpack.c.h.b16 %v156
    %v1307 = vunpack.c.l.b16 %v157
    %v1308 = vunpack.c.h.b16 %v157
    %v1309 = vunpack.c.l.b16 %v158
    %v1310 = vunpack.c.h.b16 %v158
    %v1311 = vunpack.c.l.b16 %v159
    %v1312 = vunpack.c.h.b16 %v159
    %v1313 = vunpack.c.l.b16 %v160
    %v1314 = vunpack.c.h.b16 %v160
    %v1315 = vunpack.c.l.b16 %v161
    %v1316 = vunpack.c.h.b16 %v161
    %v1317 = vunpack.c.l.b16 %v162
    %v1318 = vunpack.c.h.b16 %v162
    %v1319 = vunpack.c.l.b16 %v163
    %v1320 = vunpack.c.h.b16 %v163
    %v1321 = vunpack.c.l.b16 %v164
    %v1322 = vunpack.c.h.b16 %v164
    %v1323 = vunpack.c.l.b16 %v165
    %v1324 = vunpack.c.h.b16 %v165
    %v1325 = vunpack.c.l.b16 %v166
    %v1326 = vunpack.c.h.b16 %v166
    %v1327 = vunpack.c.l.b16 %v167
    %v1328 = vunpack.c.h.b16 %v167
    %v1329 = vunpack.c.l.b16 %v168
    %v1330 = vunpack.c.h.b16 %v168
    %v1331 = vunpack.c.l.b16 %v169
    %v1332 = vunpack.c.h.b16 %v169
    %v1333 = vunpack.c.l.b16 %v170
    %v1334 = vunpack.c.h.b16 %v170
    %v1335 = vunpack.c.l.b16 %v171
    %v1336 = vunpack.c.h.b16 %v171
    %v1337 = vunpack.c.l.b16 %v172
    %v1338 = vunpack.c.h.b16 %v172
    %v1339 = vunpack.c.l.b16 %v173
    %v1340 = vunpack.c.h.b16 %v173
    %v1341 = vunpack.c.l.b16 %v174
    %v1342 = vunpack.c.h.b16 %v174
    %v1343 = vunpack.c.l.b16 %v175
    %v1344 = vunpack.c.h.b16 %v175
    %v1345 = vunpack.c.l.b16 %v176
    %v1346 = vunpack.c.h.b16 %v176
    %v1347 = vunpack.c.l.b16 %v177
    %v1348 = vunpack.c.h.b16 %v177
    %v1349 = vunpack.c.l.b16 %v178
    %v1350 = vunpack.c.h.b16 %v178
    %v1351 = vunpack.c.l.b16 %v179
    %v1352 = vunpack.c.h.b16 %v179
    %v1353 = vunpack.c.l.b16 %v180
    %v1354 = vunpack.c.h.b16 %v180
    %v1355 = vunpack.c.l.b16 %v181
    %v1356 = vunpack.c.h.b16 %v181
    %v1357 = vunpack.c.l.b16 %v182
    %v1358 = vunpack.c.h.b16 %v182
    %v1359 = vunpack.c.l.b16 %v183
    %v1360 = vunpack.c.h.b16 %v183
    %v1361 = vunpack.c.l.b16 %v184
    %v1362 = vunpack.c.h.b16 %v184
    %v1363 = vunpack.c.l.b16 %v185
    %v1364 = vunpack.c.h.b16 %v185
    %v1365 = vunpack.c.l.b16 %v186
    %v1366 = vunpack.c.h.b16 %v186
    %v1367 = vunpack.c.l.b16 %v187
    %v1368 = vunpack.c.h.b16 %v187
    %v1369 = vunpack.c.l.b16 %v188
    %v1370 = vunpack.c.h.b16 %v188
    %v1371 = vunpack.c.l.b16 %v189
    %v1372 = vunpack.c.h.b16 %v189
    %v1373 = vunpack.c.l.b16 %v190
    %v1374 = vunpack.c.h.b16 %v190
    %v1375 = vunpack.c.l.b16 %v191
    %v1376 = vunpack.c.h.b16 %v191
    %v1377 = vunpack.c.l.b16 %v192
    %v1378 = vunpack.c.h.b16 %v192
    %v1379 = vunpack.c.l.b16 %v193
    %v1380 = vunpack.c.h.b16 %v193
    %v1381 = vunpack.c.l.b16 %v194
    %v1382 = vunpack.c.h.b16 %v194
    %v1383 = vunpack.c.l.b16 %v195
    %v1384 = vunpack.c.h.b16 %v195
    %v1385 = vunpack.c.l.b16 %v196
    %v1386 = vunpack.c.h.b16 %v196
    %v1387 = vunpack.c.l.b16 %v197
    %v1388 = vunpack.c.h.b16 %v197
    %v1389 = vunpack.c.l.b16 %v198
    %v1390 = vunpack.c.h.b16 %v198
    %v1391 = vunpack.c.l.b16 %v199
    %v1392 = vunpack.c.h.b16 %v199
    %v1393 = vunpack.c.l.b16 %v200
    %v1394 = vunpack.c.h.b16 %v200
    %v1395 = vunpack.c.l.b16 %v201
    %v1396 = vunpack.c.h.b16 %v201
    %v1397 = vunpack.c.l.b16 %v202
    %v1398 = vunpack.c.h.b16 %v202
    %v1399 = vunpack.c.l.b16 %v203
    %v1400 = vunpack.c.h.b16 %v203
    %v1401 = vunpack.c.l.b16 %v204
    %v1402 = vunpack.c.h.b16 %v204
    %v1403 = vunpack.c.l.b16 %v205
    %v1404 = vunpack.c.h.b16 %v205
    %v1405 = vunpack.c.l.b16 %v206
    %v1406 = vunpack.c.h.b16 %v206
    %v1407 = vunpack.c.l.b16 %v207
    %v1408 = vunpack.c.h.b16 %v207
    %v1409 = vunpack.c.l.b16 %v208
    %v1410 = vunpack.c.h.b16 %v208
    %v1411 = vunpack.c.l.b16 %v209
    %v1412 = vunpack.c.h.b16 %v209
    %v1413 = vunpack.c.l.b16 %v210
    %v1414 = vunpack.c.h.b16 %v210
    %v1415 = vunpack.c.l.b16 %v211
    %v1416 = vunpack.c.h.b16 %v211
    %v1417 = vunpack.c.l.b16 %v212
    %v1418 = vunpack.c.h.b16 %v212
    %v1419 = vunpack.c.l.b16 %v213
    %v1420 = vunpack.c.h.b16 %v213
    %v1421 = vunpack.c.l.b16 %v214
    %v1422 = vunpack.c.h.b16 %v214
    %v1423 = vunpack.c.l.b16 %v215
    %v1424 = vunpack.c.h.b16 %v215
    %v1425 = vunpack.c.l.b16 %v216
    %v1426 = vunpack.c.h.b16 %v216
    %v1427 = vunpack.c.l.b16 %v217
    %v1428 = vunpack.c.h.b16 %v217
    %v1429 = vunpack.c.l.b16 %v218
    %v1430 = vunpack.c.h.b16 %v218
    %v1431 = vunpack.c.l.b16 %v219
    %v1432 = vunpack.c.h.b16 %v219
    %v1433 = vunpack.c.l.b16 %v220
    %v1434 = vunpack.c.h.b16 %v220
    %v1435 = vunpack.c.l.b16 %v221
    %v1436 = vunpack.c.h.b16 %v221
    %v1437 = vunpack.c.l.b16 %v222
    %v1438 = vunpack.c.h.b16 %v222
    %v1439 = vunpack.c.l.b16 %v223
    %v1440 = vunpack.c.h.b16 %v223
    %v1441 = vunpack.c.l.b16 %v224
    %v1442 = vunpack.c.h.b16 %v224
    %v1443 = vunpack.c.l.b16 %v225
    %v1444 = vunpack.c.h.b16 %v225
    %v1445 = vunpack.c.l.b16 %v226
    %v1446 = vunpack.c.h.b16 %v226
    %v1447 = vunpack.c.l.b16 %v227
    %v1448 = vunpack.c.h.b16 %v227
    %v1449 = vunpack.c.l.b16 %v228
    %v1450 = vunpack.c.h.b16 %v228
    %v1451 = vunpack.c.l.b16 %v229
    %v1452 = vunpack.c.h.b16 %v229
    %v1453 = vunpack.c.l.b16 %v230
    %v1454 = vunpack.c.h.b16 %v230
    %v1455 = vunpack.c.l.b16 %v231
    %v1456 = vunpack.c.h.b16 %v231
    %v1457 = vunpack.c.l.b16 %v232
    %v1458 = vunpack.c.h.b16 %v232
    %v1459 = vunpack.c.l.b16 %v233
    %v1460 = vunpack.c.h.b16 %v233
    %v1461 = vunpack.c.l.b16 %v234
    %v1462 = vunpack.c.h.b16 %v234
    %v1463 = vunpack.c.l.b16 %v235
    %v1464 = vunpack.c.h.b16 %v235
    %v1465 = vunpack.c.l.b16 %v236
    %v1466 = vunpack.c.h.b16 %v236
    %v1467 = vunpack.c.l.b16 %v237
    %v1468 = vunpack.c.h.b16 %v237
    %v1469 = vunpack.c.l.b16 %v238
    %v1470 = vunpack.c.h.b16 %v238
    %v1471 = vunpack.c.l.b16 %v239
    %v1472 = vunpack.c.h.b16 %v239
    %v1473 = vunpack.c.l.b16 %v240
    %v1474 = vunpack.c.h.b16 %v240
    %v1475 = vunpack.c.l.b16 %v241
    %v1476 = vunpack.c.h.b16 %v241
    %v1477 = vunpack.c.l.b16 %v242
    %v1478 = vunpack.c.h.b16 %v242
    %v1479 = vunpack.c.l.b16 %v243
    %v1480 = vunpack.c.h.b16 %v243
    %v1481 = vunpack.c.l.b16 %v244
    %v1482 = vunpack.c.h.b16 %v244
    %v1483 = vunpack.c.l.b16 %v245
    %v1484 = vunpack.c.h.b16 %v245
    %v1485 = vunpack.c.l.b16 %v246
    %v1486 = vunpack.c.h.b16 %v246
    %v1487 = vunpack.c.l.b16 %v247
    %v1488 = vunpack.c.h.b16 %v247
    %v1489 = vunpack.c.l.b16 %v248
    %v1490 = vunpack.c.h.b16 %v248
    %v1491 = vunpack.c.l.b16 %v249
    %v1492 = vunpack.c.h.b16 %v249
    %v1493 = vunpack.c.l.b16 %v250
    %v1494 = vunpack.c.h.b16 %v250
    %v1495 = vunpack.c.l.b16 %v251
    %v1496 = vunpack.c.h.b16 %v251
    %v1497 = vunpack.c.l.b16 %v252
    %v1498 = vunpack.c.h.b16 %v252
    %v1499 = vunpack.c.l.b16 %v253
    %v1500 = vunpack.c.h.b16 %v253
    %v1501 = vunpack.c.l.b16 %v254
    %v1502 = vunpack.c.h.b16 %v254
    %v1503 = vunpack.c.l.b16 %v255
    %v1504 = vunpack.c.h.b16 %v255
    %v1505 = vunpack.c.l.b16 %v256
    %v1506 = vunpack.c.h.b16 %v256
    %v1507 = vunpack.c.l.b16 %v257
    %v1508 = vunpack.c.h.b16 %v257
    %v1509 = vunpack.c.l.b16 %v258
    %v1510 = vunpack.c.h.b16 %v258
    %v1511 = vunpack.c.l.b16 %v259
    %v1512 = vunpack.c.h.b16 %v259
    %v1513 = vunpack.c.l.b16 %v260
    %v1514 = vunpack.c.h.b16 %v260
    %v1515 = vunpack.c.l.b16 %v261
    %v1516 = vunpack.c.h.b16 %v261
    %v1517 = vunpack.c.l.b16 %v262
    %v1518 = vunpack.c.h.b16 %v262
    %v1519 = vunpack.c.l.b16 %v263
    %v1520 = vunpack.c.h.b16 %v263
    %v1521 = vunpack.c.l.b16 %v264
    %v1522 = vunpack.c.h.b16 %v264
    %v1523 = vunpack.c.l.b16 %v265
    %v1524 = vunpack.c.h.b16 %v265
    %v1525 = vunpack.c.l.b16 %v266
    %v1526 = vunpack.c.h.b16 %v266
    %v1527 = vunpack.c.l.b16 %v267
    %v1528 = vunpack.c.h.b16 %v267
    %v1529 = vunpack.c.l.b16 %v268
    %v1530 = vunpack.c.h.b16 %v268
    %v1531 = vunpack.c.l.b16 %v269
    %v1532 = vunpack.c.h.b16 %v269
    %v1533 = vunpack.c.l.b16 %v270
    %v1534 = vunpack.c.h.b16 %v270
    %v1535 = vunpack.c.l.b16 %v271
    %v1536 = vunpack.c.h.b16 %v271
    %v1537 = vunpack.c.l.b16 %v272
    %v1538 = vunpack.c.h.b16 %v272
    %v1539 = vunpack.c.l.b16 %v273
    %v1540 = vunpack.c.h.b16 %v273
    %v1541 = vunpack.c.l.b16 %v274
    %v1542 = vunpack.c.h.b16 %v274
    %v1543 = vunpack.c.l.b16 %v275
    %v1544 = vunpack.c.h.b16 %v275
    %v1545 = vunpack.c.l.b16 %v276
    %v1546 = vunpack.c.h.b16 %v276
    %v1547 = vunpack.c.l.b16 %v277
    %v1548 = vunpack.c.h.b16 %v277
    %v1549 = vunpack.c.l.b16 %v278
    %v1550 = vunpack.c.h.b16 %v278
    %v1551 = vunpack.c.l.b16 %v279
    %v1552 = vunpack.c.h.b16 %v279
    %v1553 = vunpack.c.l.b16 %v280
    %v1554 = vunpack.c.h.b16 %v280
    %v1555 = vunpack.c.l.b16 %v281
    %v1556 = vunpack.c.h.b16 %v281
    %v1557 = vunpack.c.l.b16 %v282
    %v1558 = vunpack.c.h.b16 %v282
    %v1559 = vunpack.c.l.b16 %v283
    %v1560 = vunpack.c.h.b16 %v283
    %v1561 = vunpack.c.l.b16 %v284
    %v1562 = vunpack.c.h.b16 %v284
    %v1563 = vunpack.c.l.b16 %v285
    %v1564 = vunpack.c.h.b16 %v285
    %v1565 = vunpack.c.l.b16 %v286
    %v1566 = vunpack.c.h.b16 %v286
    %v1567 = vunpack.c.l.b16 %v287
    %v1568 = vunpack.c.h.b16 %v287
    %v1569 = vunpack.c.l.b16 %v288
    %v1570 = vunpack.c.h.b16 %v288
    %v1571 = vunpack.c.l.b16 %v289
    %v1572 = vunpack.c.h.b16 %v289
    %v1573 = vunpack.c.l.b16 %v290
    %v1574 = vunpack.c.h.b16 %v290
    %v1575 = vunpack.c.l.b16 %v291
    %v1576 = vunpack.c.h.b16 %v291
    %v1577 = vunpack.c.l.b16 %v292
    %v1578 = vunpack.c.h.b16 %v292
    %v1579 = vunpack.c.l.b16 %v293
    %v1580 = vunpack.c.h.b16 %v293
    %v1581 = vunpack.c.l.b16 %v294
    %v1582 = vunpack.c.h.b16 %v294
    %v1583 = vunpack.c.l.b16 %v295
    %v1584 = vunpack.c.h.b16 %v295
    %v1585 = vunpack.c.l.b16 %v296
    %v1586 = vunpack.c.h.b16 %v296
    %v1587 = vunpack.c.l.b16 %v297
    %v1588 = vunpack.c.h.b16 %v297
    %v1589 = vunpack.c.l.b16 %v298
    %v1590 = vunpack.c.h.b16 %v298
    %v1591 = vunpack.c.l.b16 %v299
    %v1592 = vunpack.c.h.b16 %v299
    %v1593 = vunpack.c.l.b16 %v300
    %v1594 = vunpack.c.h.b16 %v300
    %v1595 = vunpack.c.l.b16 %v301
    %v1596 = vunpack.c.h.b16 %v301
    %v1597 = vunpack.c.l.b16 %v302
    %v1598 = vunpack.c.h.b16 %v302
    %v1599 = vunpack.c.l.b16 %v303
    %v1600 = vunpack.c.h.b16 %v303
    %v1601 = vunpack.c.l.b16 %v304
    %v1602 = vunpack.c.h.b16 %v304
    %v1603 = vunpack.c.l.b16 %v305
    %v1604 = vunpack.c.h.b16 %v305
    %v1605 = vunpack.c.l.b16 %v306
    %v1606 = vunpack.c.h.b16 %v306
    %v1607 = vunpack.c.l.b16 %v307
    %v1608 = vunpack.c.h.b16 %v307
    %v1609 = vunpack.c.l.b16 %v308
    %v1610 = vunpack.c.h.b16 %v308
    %v1611 = vunpack.c.l.b16 %v309
    %v1612 = vunpack.c.h.b16 %v309
    %v1613 = vunpack.c.l.b16 %v310
    %v1614 = vunpack.c.h.b16 %v310
    %v1615 = vunpack.c.l.b16 %v311
    %v1616 = vunpack.c.h.b16 %v311
    %v1617 = vunpack.c.l.b16 %v312
    %v1618 = vunpack.c.h.b16 %v312
    %v1619 = vunpack.c.l.b16 %v313
    %v1620 = vunpack.c.h.b16 %v313
    %v1621 = vunpack.c.l.b16 %v314
    %v1622 = vunpack.c.h.b16 %v314
    %v1623 = vunpack.c.l.b16 %v315
    %v1624 = vunpack.c.h.b16 %v315
    %v1625 = vunpack.c.l.b16 %v316
    %v1626 = vunpack.c.h.b16 %v316
    %v1627 = vunpack.c.l.b16 %v317
    %v1628 = vunpack.c.h.b16 %v317
    %v1629 = vunpack.c.l.b16 %v318
    %v1630 = vunpack.c.h.b16 %v318
    %v1631 = vunpack.c.l.b16 %v319
    %v1632 = vunpack.c.h.b16 %v319
    %v1633 = vunpack.c.l.b16 %v320
    %v1634 = vunpack.c.h.b16 %v320
    %v1635 = vunpack.c.l.b16 %v321
    %v1636 = vunpack.c.h.b16 %v321
    %v1637 = vunpack.c.l.b16 %v322
    %v1638 = vunpack.c.h.b16 %v322
    %v1639 = vunpack.c.l.b16 %v323
    %v1640 = vunpack.c.h.b16 %v323
    %v1641 = vunpack.c.l.b16 %v324
    %v1642 = vunpack.c.h.b16 %v324
    %v1643 = vunpack.c.l.b16 %v325
    %v1644 = vunpack.c.h.b16 %v325
    %v1645 = vunpack.c.l.b16 %v326
    %v1646 = vunpack.c.h.b16 %v326
    %v1647 = vunpack.c.l.b16 %v327
    %v1648 = vunpack.c.h.b16 %v327
    %v1649 = vunpack.c.l.b16 %v328
    %v1650 = vunpack.c.h.b16 %v328
    %v1651 = vunpack.c.l.b16 %v329
    %v1652 = vunpack.c.h.b16 %v329
    %v1653 = vunpack.c.l.b16 %v330
    %v1654 = vunpack.c.h.b16 %v330
    %v1655 = vunpack.c.l.b16 %v331
    %v1656 = vunpack.c.h.b16 %v331
    %v1657 = vunpack.c.l.b16 %v332
    %v1658 = vunpack.c.h.b16 %v332
    %v1659 = vunpack.c.l.b16 %v333
    %v1660 = vunpack.c.h.b16 %v333
    %v1661 = vunpack.c.l.b16 %v334
    %v1662 = vunpack.c.h.b16 %v334
    %v1663 = vunpack.c.l.b16 %v335
    %v1664 = vunpack.c.h.b16 %v335
    %v1665 = vunpack.c.l.b16 %v336
    %v1666 = vunpack.c.h.b16 %v336
    %v1667 = vunpack.c.l.b16 %v337
    %v1668 = vunpack.c.h.b16 %v337
    %v1669 = vunpack.c.l.b16 %v338
    %v1670 = vunpack.c.h.b16 %v338
    %v1671 = vunpack.c.l.b16 %v339
    %v1672 = vunpack.c.h.b16 %v339
    %v1673 = vunpack.c.l.b16 %v340
    %v1674 = vunpack.c.h.b16 %v340
    %v1675 = vunpack.c.l.b16 %v341
    %v1676 = vunpack.c.h.b16 %v341
    %v1677 = vunpack.c.l.b16 %v342
    %v1678 = vunpack.c.h.b16 %v342
    %v1679 = vunpack.c.l.b16 %v343
    %v1680 = vunpack.c.h.b16 %v343
    %v1681 = vunpack.c.l.b16 %v344
    %v1682 = vunpack.c.h.b16 %v344
    %v1683 = vunpack.c.l.b16 %v345
    %v1684 = vunpack.c.h.b16 %v345
    %v1685 = vunpack.c.l.b16 %v346
    %v1686 = vunpack.c.h.b16 %v346
    %v1687 = vunpack.c.l.b16 %v347
    %v1688 = vunpack.c.h.b16 %v347
    %v1689 = vunpack.c.l.b16 %v348
    %v1690 = vunpack.c.h.b16 %v348
    %v1691 = vunpack.c.l.b16 %v349
    %v1692 = vunpack.c.h.b16 %v349
    %v1693 = vunpack.c.l.b16 %v350
    %v1694 = vunpack.c.h.b16 %v350
    %v1695 = vunpack.c.l.b16 %v351
    %v1696 = vunpack.c.h.b16 %v351
    %v1697 = vunpack.c.l.b16 %v352
    %v1698 = vunpack.c.h.b16 %v352
    %v1699 = vunpack.c.l.b16 %v353
    %v1700 = vunpack.c.h.b16 %v353
    %v1701 = vunpack.c.l.b16 %v354
    %v1702 = vunpack.c.h.b16 %v354
    %v1703 = vunpack.c.l.b16 %v355
    %v1704 = vunpack.c.h.b16 %v355
    %v1705 = vunpack.c.l.b16 %v356
    %v1706 = vunpack.c.h.b16 %v356
    %v1707 = vunpack.c.l.b16 %v357
    %v1708 = vunpack.c.h.b16 %v357
    %v1709 = vunpack.c.l.b16 %v358
    %v1710 = vunpack.c.h.b16 %v358
    %v1711 = vunpack.c.l.b16 %v359
    %v1712 = vunpack.c.h.b16 %v359
    %v1713 = vunpack.c.l.b16 %v360
    %v1714 = vunpack.c.h.b16 %v360
    %v1715 = vunpack.c.l.b16 %v361
    %v1716 = vunpack.c.h.b16 %v361
    %v1717 = vunpack.c.l.b16 %v362
    %v1718 = vunpack.c.h.b16 %v362
    %v1719 = vunpack.c.l.b16 %v363
    %v1720 = vunpack.c.h.b16 %v363
    %v1721 = vunpack.c.l.b16 %v364
    %v1722 = vunpack.c.h.b16 %v364
    %v1723 = vunpack.c.l.b16 %v365
    %v1724 = vunpack.c.h.b16 %v365
    %v1725 = vunpack.c.l.b16 %v366
    %v1726 = vunpack.c.h.b16 %v366
    %v1727 = vunpack.c.l.b16 %v367
    %v1728 = vunpack.c.h.b16 %v367
    %v1729 = vunpack.c.l.b16 %v368
    %v1730 = vunpack.c.h.b16 %v368
    %v1731 = vunpack.c.l.b16 %v369
    %v1732 = vunpack.c.h.b16 %v369
    %v1733 = vunpack.c.l.b16 %v370
    %v1734 = vunpack.c.h.b16 %v370
    %v1735 = vunpack.c.l.b16 %v371
    %v1736 = vunpack.c.h.b16 %v371
    %v1737 = vunpack.c.l.b16 %v372
    %v1738 = vunpack.c.h.b16 %v372
    %v1739 = vunpack.c.l.b16 %v373
    %v1740 = vunpack.c.h.b16 %v373
    %v1741 = vunpack.c.l.b16 %v374
    %v1742 = vunpack.c.h.b16 %v374
    %v1743 = vunpack.c.l.b16 %v375
    %v1744 = vunpack.c.h.b16 %v375
    %v1745 = vunpack.c.l.b16 %v376
    %v1746 = vunpack.c.h.b16 %v376
    %v1747 = vunpack.c.l.b16 %v377
    %v1748 = vunpack.c.h.b16 %v377
    %v1749 = vunpack.c.l.b16 %v378
    %v1750 = vunpack.c.h.b16 %v378
    %v1751 = vunpack.c.l.b16 %v379
    %v1752 = vunpack.c.h.b16 %v379
    %v1753 = vunpack.c.l.b16 %v380
    %v1754 = vunpack.c.h.b16 %v380
    %v1755 = vunpack.c.l.b16 %v381
    %v1756 = vunpack.c.h.b16 %v381
    %v1757 = vunpack.c.l.b16 %v382
    %v1758 = vunpack.c.h.b16 %v382
    %v1759 = vunpack.c.l.b16 %v383
    %v1760 = vunpack.c.h.b16 %v383
    %v1761 = vunpack.c.l.b16 %v384
    %v1762 = vunpack.c.h.b16 %v384
    %v1763 = vunpack.c.l.b16 %v385
    %v1764 = vunpack.c.h.b16 %v385
    %v1765 = vunpack.c.l.b16 %v386
    %v1766 = vunpack.c.h.b16 %v386
    %v1767 = vunpack.c.l.b16 %v387
    %v1768 = vunpack.c.h.b16 %v387
    %v1769 = vunpack.c.l.b16 %v388
    %v1770 = vunpack.c.h.b16 %v388
    %v1771 = vunpack.c.l.b16 %v389
    %v1772 = vunpack.c.h.b16 %v389
    %v1773 = vunpack.c.l.b16 %v390
    %v1774 = vunpack.c.h.b16 %v390
    %v1775 = vunpack.c.l.b16 %v391
    %v1776 = vunpack.c.h.b16 %v391
    %v1777 = vunpack.c.l.b16 %v392
    %v1778 = vunpack.c.h.b16 %v392
    %v1779 = vunpack.c.l.b16 %v393
    %v1780 = vunpack.c.h.b16 %v393
    %v1781 = vunpack.c.l.b16 %v394
    %v1782 = vunpack.c.h.b16 %v394
    %v1783 = vunpack.c.l.b16 %v395
    %v1784 = vunpack.c.h.b16 %v395
    %v1785 = vunpack.c.l.b16 %v396
    %v1786 = vunpack.c.h.b16 %v396
    %v1787 = vunpack.c.l.b16 %v397
    %v1788 = vunpack.c.h.b16 %v397
    %v1789 = vunpack.c.l.b16 %v398
    %v1790 = vunpack.c.h.b16 %v398
    %v1791 = vunpack.c.l.b16 %v399
    %v1792 = vunpack.c.h.b16 %v399
    %v1793 = vunpack.c.l.b16 %v400
    %v1794 = vunpack.c.h.b16 %v400
    %v1795 = vunpack.c.l.b16 %v401
    %v1796 = vunpack.c.h.b16 %v401
    %v1797 = vunpack.c.l.b16 %v402
    %v1798 = vunpack.c.h.b16 %v402
    %v1799 = vunpack.c.l.b16 %v403
    %v1800 = vunpack.c.h.b16 %v403
    %v1801 = vunpack.c.l.b16 %v404
    %v1802 = vunpack.c.h.b16 %v404
    %v1803 = vunpack.c.l.b16 %v405
    %v1804 = vunpack.c.h.b16 %v405
    %v1805 = vunpack.c.l.b16 %v406
    %v1806 = vunpack.c.h.b16 %v406
    %v1807 = vunpack.c.l.b16 %v407
    %v1808 = vunpack.c.h.b16 %v407
    %v1809 = vunpack.c.l.b16 %v408
    %v1810 = vunpack.c.h.b16 %v408
    %v1811 = vunpack.c.l.b16 %v409
    %v1812 = vunpack.c.h.b16 %v409
    %v1813 = vunpack.c.l.b16 %v410
    %v1814 = vunpack.c.h.b16 %v410
    %v1815 = vunpack.c.l.b16 %v411
    %v1816 = vunpack.c.h.b16 %v411
    %v1817 = vunpack.c.l.b16 %v412
    %v1818 = vunpack.c.h.b16 %v412
    %v1819 = vunpack.c.l.b16 %v413
    %v1820 = vunpack.c.h.b16 %v413
    %v1821 = vunpack.c.l.b16 %v414
    %v1822 = vunpack.c.h.b16 %v414
    %v1823 = vunpack.c.l.b16 %v415
    %v1824 = vunpack.c.h.b16 %v415
    %v1825 = vunpack.c.l.b16 %v416
    %v1826 = vunpack.c.h.b16 %v416
    %v1827 = vunpack.c.l.b16 %v417
    %v1828 = vunpack.c.h.b16 %v417
    %v1829 = vunpack.c.l.b16 %v418
    %v1830 = vunpack.c.h.b16 %v418
    %v1831 = vunpack.c.l.b16 %v419
    %v1832 = vunpack.c.h.b16 %v419
    %v1833 = vunpack.c.l.b16 %v420
    %v1834 = vunpack.c.h.b16 %v420
    %v1835 = vunpack.c.l.b16 %v421
    %v1836 = vunpack.c.h.b16 %v421
    %v1837 = vunpack.c.l.b16 %v422
    %v1838 = vunpack.c.h.b16 %v422
    %v1839 = vunpack.c.l.b16 %v423
    %v1840 = vunpack.c.h.b16 %v423
    %v1841 = vunpack.c.l.b16 %v424
    %v1842 = vunpack.c.h.b16 %v424
    %v1843 = vunpack.c.l.b16 %v425
    %v1844 = vunpack.c.h.b16 %v425
    %v1845 = vunpack.c.l.b16 %v426
    %v1846 = vunpack.c.h.b16 %v426
    %v1847 = vunpack.c.l.b16 %v427
    %v1848 = vunpack.c.h.b16 %v427
    %v1849 = vunpack.c.l.b16 %v428
    %v1850 = vunpack.c.h.b16 %v428
    %v1851 = vunpack.c.l.b16 %v429
    %v1852 = vunpack.c.h.b16 %v429
    %v1853 = vunpack.c.l.b16 %v430
    %v1854 = vunpack.c.h.b16 %v430
    %v1855 = vunpack.c.l.b16 %v431
    %v1856 = vunpack.c.h.b16 %v431
    %v1857 = vunpack.c.l.b16 %v432
    %v1858 = vunpack.c.h.b16 %v432
    %v1859 = vunpack.c.l.b16 %v433
    %v1860 = vunpack.c.h.b16 %v433
    %v1861 = vunpack.c.l.b16 %v434
    %v1862 = vunpack.c.h.b16 %v434
    %v1863 = vunpack.c.l.b16 %v435
    %v1864 = vunpack.c.h.b16 %v435
    %v1865 = vunpack.c.l.b16 %v436
    %v1866 = vunpack.c.h.b16 %v436
    %v1867 = vunpack.c.l.b16 %v437
    %v1868 = vunpack.c.h.b16 %v437
    %v1869 = vunpack.c.l.b16 %v438
    %v1870 = vunpack.c.h.b16 %v438
    %v1871 = vunpack.c.l.b16 %v439
    %v1872 = vunpack.c.h.b16 %v439
    %v1873 = vunpack.c.l.b16 %v440
    %v1874 = vunpack.c.h.b16 %v440
    %v1875 = vunpack.c.l.b16 %v441
    %v1876 = vunpack.c.h.b16 %v441
    %v1877 = vunpack.c.l.b16 %v442
    %v1878 = vunpack.c.h.b16 %v442
    %v1879 = vunpack.c.l.b16 %v443
    %v1880 = vunpack.c.h.b16 %v443
    %v1881 = vunpack.c.l.b16 %v444
    %v1882 = vunpack.c.h.b16 %v444
    %v1883 = vunpack.c.l.b16 %v445
    %v1884 = vunpack.c.h.b16 %v445
    %v1885 = vunpack.c.l.b16 %v446
    %v1886 = vunpack.c.h.b16 %v446
    %v1887 = vunpack.c.l.b16 %v447
    %v1888 = vunpack.c.h.b16 %v447
    %v1889 = vunpack.c.l.b16 %v448
    %v1890 = vunpack.c.h.b16 %v448
    %v1891 = vunpack.c.l.b16 %v449
    %v1892 = vunpack.c.h.b16 %v449
    %v1893 = vunpack.c.l.b16 %v450
    %v1894 = vunpack.c.h.b16 %v450
    %v1895 = vunpack.c.l.b16 %v451
    %v1896 = vunpack.c.h.b16 %v451
    %v1897 = vunpack.c.l.b16 %v452
    %v1898 = vunpack.c.h.b16 %v452
    %v1899 = vunpack.c.l.b16 %v453
    %v1900 = vunpack.c.h.b16 %v453
    %v1901 = vunpack.c.l.b16 %v454
    %v1902 = vunpack.c.h.b16 %v454
    %v1903 = vunpack.c.l.b16 %v455
    %v1904 = vunpack.c.h.b16 %v455
    %v1905 = vunpack.c.l.b16 %v456
    %v1906 = vunpack.c.h.b16 %v456
    %v1907 = vunpack.c.l.b16 %v457
    %v1908 = vunpack.c.h.b16 %v457
    %v1909 = vunpack.c.l.b16 %v458
    %v1910 = vunpack.c.h.b16 %v458
    %v1911 = vunpack.c.l.b16 %v459
    %v1912 = vunpack.c.h.b16 %v459
    %v1913 = vunpack.c.l.b16 %v460
    %v1914 = vunpack.c.h.b16 %v460
    %v1915 = vunpack.c.l.b16 %v461
    %v1916 = vunpack.c.h.b16 %v461
    %v1917 = vunpack.c.l.b16 %v462
    %v1918 = vunpack.c.h.b16 %v462
    %v1919 = vunpack.c.l.b16 %v463
    %v1920 = vunpack.c.h.b16 %v463
    %v1921 = vunpack.c.l.b16 %v464
    %v1922 = vunpack.c.h.b16 %v464
    %v1923 = vunpack.c.l.b16 %v465
    %v1924 = vunpack.c.h.b16 %v465
    %v1925 = vunpack.c.l.b16 %v466
    %v1926 = vunpack.c.h.b16 %v466
    %v1927 = vunpack.c.l.b16 %v467
    %v1928 = vunpack.c.h.b16 %v467
    %v1929 = vunpack.c.l.b16 %v468
    %v1930 = vunpack.c.h.b16 %v468
    %v1931 = vunpack.c.l.b16 %v469
    %v1932 = vunpack.c.h.b16 %v469
    %v1933 = vunpack.c.l.b16 %v470
    %v1934 = vunpack.c.h.b16 %v470
    %v1935 = vunpack.c.l.b16 %v471
    %v1936 = vunpack.c.h.b16 %v471
    %v1937 = vunpack.c.l.b16 %v472
    %v1938 = vunpack.c.h.b16 %v472
    %v1939 = vunpack.c.l.b16 %v473
    %v1940 = vunpack.c.h.b16 %v473
    %v1941 = vunpack.c.l.b16 %v474
    %v1942 = vunpack.c.h.b16 %v474
    %v1943 = vunpack.c.l.b16 %v475
    %v1944 = vunpack.c.h.b16 %v475
    %v1945 = vunpack.c.l.b16 %v476
    %v1946 = vunpack.c.h.b16 %v476
    %v1947 = vunpack.c.l.b16 %v477
    %v1948 = vunpack.c.h.b16 %v477
    %v1949 = vunpack.c.l.b16 %v478
    %v1950 = vunpack.c.h.b16 %v478
    %v1951 = vunpack.c.l.b16 %v479
    %v1952 = vunpack.c.h.b16 %v479
    %v1953 = vunpack.c.l.b16 %v480
    %v1954 = vunpack.c.h.b16 %v480
    %v1955 = vunpack.c.l.b16 %v481
    %v1956 = vunpack.c.h.b16 %v481
    %v1957 = vunpack.c.l.b16 %v482
    %v1958 = vunpack.c.h.b16 %v482
    %v1959 = vunpack.c.l.b16 %v483
    %v1960 = vunpack.c.h.b16 %v483
    %v1961 = vunpack.c.l.b16 %v484
    %v1962 = vunpack.c.h.b16 %v484
    %v1963 = vunpack.c.l.b16 %v485
    %v1964 = vunpack.c.h.b16 %v485
    %v1965 = vunpack.c.l.b16 %v486
    %v1966 = vunpack.c.h.b16 %v486
    %v1967 = vunpack.c.l.b16 %v487
    %v1968 = vunpack.c.h.b16 %v487
    %v1969 = vunpack.c.l.b16 %v488
    %v1970 = vunpack.c.h.b16 %v488
    %v1971 = vunpack.c.l.b16 %v489
    %v1972 = vunpack.c.h.b16 %v489
    %v1973 = vunpack.c.l.b16 %v490
    %v1974 = vunpack.c.h.b16 %v490
    %v1975 = vunpack.c.l.b16 %v491
    %v1976 = vunpack.c.h.b16 %v491
    %v1977 = vunpack.c.l.b16 %v492
    %v1978 = vunpack.c.h.b16 %v492
    %v1979 = vunpack.c.l.b16 %v493
    %v1980 = vunpack.c.h.b16 %v493
    %v1981 = vunpack.c.l.b16 %v494
    %v1982 = vunpack.c.h.b16 %v494
    %v1983 = vunpack.c.l.b16 %v495
    %v1984 = vunpack.c.h.b16 %v495
    %v1985 = vunpack.c.l.b16 %v496
    %v1986 = vunpack.c.h.b16 %v496
    %v1987 = vunpack.c.l.b16 %v497
    %v1988 = vunpack.c.h.b16 %v497
    %v1989 = vunpack.c.l.b16 %v498
    %v1990 = vunpack.c.h.b16 %v498
    %v1991 = vunpack.c.l.b16 %v499
    %v1992 = vunpack.c.h.b16 %v499
    %v1993 = vunpack.c.l.b16 %v500
    %v1994 = vunpack.c.h.b16 %v500
    %v1995 = vunpack.c.l.b16 %v501
    %v1996 = vunpack.c.h.b16 %v501
    %v1997 = vunpack.c.l.b16 %v502
    %v1998 = vunpack.c.h.b16 %v502
    %v1999 = vunpack.c.l.b16 %v503
    %v2000 = vunpack.c.h.b16 %v503
    %v2001 = vunpack.c.l.b16 %v504
    %v2002 = vunpack.c.h.b16 %v504
    %v2003 = vunpack.c.l.b16 %v505
    %v2004 = vunpack.c.h.b16 %v505
    %v2005 = vunpack.c.l.b16 %v506
    %v2006 = vunpack.c.h.b16 %v506
    %v2007 = vunpack.c.l.b16 %v507
    %v2008 = vunpack.c.h.b16 %v507
    %v2009 = vunpack.c.l.b16 %v508
    %v2010 = vunpack.c.h.b16 %v508
    %v2011 = vunpack.c.l.b16 %v509
    %v2012 = vunpack.c.h.b16 %v509
    %v2013 = vunpack.c.l.b16 %v510
    %v2014 = vunpack.c.h.b16 %v510
    %v2015 = vunpack.c.l.b16 %v511
    %v2016 = vunpack.c.h.b16 %v511
    %v2017 = vunpack.c.l.b16 %v512
    %v2018 = vunpack.c.h.b16 %v512
    %v2019 = vunpack.c.l.b16 %v513
    %v2020 = vunpack.c.h.b16 %v513
    %v2021 = vunpack.c.l.b16 %v514
    %v2022 = vunpack.c.h.b16 %v514
    %v2023 = vunpack.c.l.b16 %v515
    %v2024 = vunpack.c.h.b16 %v515
    %v2025 = vunpack.c.l.b16 %v516
    %v2026 = vunpack.c.h.b16 %v516
    %v2027 = vunpack.c.l.b16 %v517
    %v2028 = vunpack.c.h.b16 %v517
    %v2029 = vunpack.c.l.b16 %v518
    %v2030 = vunpack.c.h.b16 %v518
    %v2031 = vunpack.c.l.b16 %v519
    %v2032 = vunpack.c.h.b16 %v519
    %v2033 = vunpack.c.l.b16 %v520
    %v2034 = vunpack.c.h.b16 %v520
    %v2035 = vunpack.c.l.b16 %v521
    %v2036 = vunpack.c.h.b16 %v521
    %v2037 = vunpack.c.l.b16 %v522
    %v2038 = vunpack.c.h.b16 %v522
    %v2039 = vunpack.c.l.b16 %v523
    %v2040 = vunpack.c.h.b16 %v523
    %v2041 = vunpack.c.l.b16 %v524
    %v2042 = vunpack.c.h.b16 %v524
    %v2043 = vunpack.c.l.b16 %v525
    %v2044 = vunpack.c.h.b16 %v525
    %v2045 = vunpack.c.l.b16 %v526
    %v2046 = vunpack.c.h.b16 %v526
    %v2047 = vunpack.c.l.b16 %v527
    %v2048 = vunpack.c.h.b16 %v527
    %v2049 = vunpack.c.l.b16 %v528
    %v2050 = vunpack.c.h.b16 %v528
    %v2051 = vunpack.c.l.b16 %v529
    %v2052 = vunpack.c.h.b16 %v529
    %v2053 = vunpack.c.l.b16 %v530
    %v2054 = vunpack.c.h.b16 %v530
    %v2055 = vunpack.c.l.b16 %v531
    %v2056 = vunpack.c.h.b16 %v531
    %v2057 = vunpack.c.l.b16 %v532
    %v2058 = vunpack.c.h.b16 %v532
    %v2059 = vunpack.c.l.b16 %v533
    %v2060 = vunpack.c.h.b16 %v533
    %v2061 = vunpack.c.l.b16 %v534
    %v2062 = vunpack.c.h.b16 %v534
    %v2063 = vunpack.c.l.b16 %v535
    %v2064 = vunpack.c.h.b16 %v535
    %v2065 = vunpack.c.l.b16 %v536
    %v2066 = vunpack.c.h.b16 %v536
    %v2067 = vunpack.c.l.b16 %v537
    %v2068 = vunpack.c.h.b16 %v537
    %v2069 = vunpack.c.l.b16 %v538
    %v2070 = vunpack.c.h.b16 %v538
    %v2071 = vunpack.c.l.b16 %v539
    %v2072 = vunpack.c.h.b16 %v539
    %v2073 = vunpack.c.l.b16 %v540
    %v2074 = vunpack.c.h.b16 %v540
    %v2075 = vunpack.c.l.b16 %v541
    %v2076 = vunpack.c.h.b16 %v541
    %v2077 = vunpack.c.l.b16 %v542
    %v2078 = vunpack.c.h.b16 %v542
    %v2079 = vunpack.c.l.b16 %v543
    %v2080 = vunpack.c.h.b16 %v543
    %v2081 = vunpack.c.l.b16 %v544
    %v2082 = vunpack.c.h.b16 %v544
    %v2083 = vunpack.c.l.b16 %v545
    %v2084 = vunpack.c.h.b16 %v545
    %v2085 = vunpack.c.l.b16 %v546
    %v2086 = vunpack.c.h.b16 %v546
    %v2087 = vunpack.c.l.b16 %v547
    %v2088 = vunpack.c.h.b16 %v547
    %v2089 = vunpack.c.l.b16 %v548
    %v2090 = vunpack.c.h.b16 %v548
    %v2091 = vunpack.c.l.b16 %v549
    %v2092 = vunpack.c.h.b16 %v549
    %v2093 = vunpack.c.l.b16 %v550
    %v2094 = vunpack.c.h.b16 %v550
    %v2095 = vunpack.c.l.b16 %v551
    %v2096 = vunpack.c.h.b16 %v551
    %v2097 = vunpack.c.l.b16 %v552
    %v2098 = vunpack.c.h.b16 %v552
    %v2099 = vunpack.c.l.b16 %v553
    %v2100 = vunpack.c.h.b16 %v553
    %v2101 = vunpack.c.l.b16 %v554
    %v2102 = vunpack.c.h.b16 %v554
    %v2103 = vunpack.c.l.b16 %v555
    %v2104 = vunpack.c.h.b16 %v555
    %v2105 = vunpack.c.l.b16 %v556
    %v2106 = vunpack.c.h.b16 %v556
    %v2107 = vunpack.c.l.b16 %v557
    %v2108 = vunpack.c.h.b16 %v557
    %v2109 = vunpack.c.l.b16 %v558
    %v2110 = vunpack.c.h.b16 %v558
    %v2111 = vunpack.c.l.b16 %v559
    %v2112 = vunpack.c.h.b16 %v559
    %v2113 = vunpack.c.l.b16 %v560
    %v2114 = vunpack.c.h.b16 %v560
    %v2115 = vunpack.c.l.b16 %v561
    %v2116 = vunpack.c.h.b16 %v561
    %v2117 = vunpack.c.l.b16 %v562
    %v2118 = vunpack.c.h.b16 %v562
    %v2119 = vunpack.c.l.b16 %v563
    %v2120 = vunpack.c.h.b16 %v563
    %v2121 = vunpack.c.l.b16 %v564
    %v2122 = vunpack.c.h.b16 %v564
    %v2123 = vunpack.c.l.b16 %v565
    %v2124 = vunpack.c.h.b16 %v565
    %v2125 = vunpack.c.l.b16 %v566
    %v2126 = vunpack.c.h.b16 %v566
    %v2127 = vunpack.c.l.b16 %v567
    %v2128 = vunpack.c.h.b16 %v567
    %v2129 = vunpack.c.l.b16 %v568
    %v2130 = vunpack.c.h.b16 %v568
    %v2131 = vunpack.c.l.b16 %v569
    %v2132 = vunpack.c.h.b16 %v569
    %v2133 = vunpack.c.l.b16 %v570
    %v2134 = vunpack.c.h.b16 %v570
    %v2135 = vunpack.c.l.b16 %v571
    %v2136 = vunpack.c.h.b16 %v571
    %v2137 = vunpack.c.l.b16 %v572
    %v2138 = vunpack.c.h.b16 %v572
    %v2139 = vunpack.c.l.b16 %v573
    %v2140 = vunpack.c.h.b16 %v573
    %v2141 = vunpack.c.l.b16 %v574
    %v2142 = vunpack.c.h.b16 %v574
    %v2143 = vunpack.c.l.b16 %v575
    %v2144 = vunpack.c.h.b16 %v575
    %v2145 = vunpack.c.l.b16 %v576
    %v2146 = vunpack.c.h.b16 %v576
    %v2147 = vunpack.c.l.b16 %v577
    %v2148 = vunpack.c.h.b16 %v577
    %v2149 = vunpack.c.l.b16 %v578
    %v2150 = vunpack.c.h.b16 %v578
    %v2151 = vunpack.c.l.b16 %v579
    %v2152 = vunpack.c.h.b16 %v579
    %v2153 = vunpack.c.l.b16 %v580
    %v2154 = vunpack.c.h.b16 %v580
    %v2155 = vunpack.c.l.b16 %v581
    %v2156 = vunpack.c.h.b16 %v581
    %v2157 = vunpack.c.l.b16 %v582
    %v2158 = vunpack.c.h.b16 %v582
    %v2159 = vunpack.c.l.b16 %v583
    %v2160 = vunpack.c.h.b16 %v583
    %v2161 = vunpack.c.l.b16 %v584
    %v2162 = vunpack.c.h.b16 %v584
    %v2163 = vunpack.c.l.b16 %v585
    %v2164 = vunpack.c.h.b16 %v585
    %v2165 = vunpack.c.l.b16 %v586
    %v2166 = vunpack.c.h.b16 %v586
    %v2167 = vunpack.c.l.b16 %v587
    %v2168 = vunpack.c.h.b16 %v587
    %v2169 = vunpack.c.l.b16 %v588
    %v2170 = vunpack.c.h.b16 %v588
    %v2171 = vunpack.c.l.b16 %v589
    %v2172 = vunpack.c.h.b16 %v589
    %v2173 = vunpack.c.l.b16 %v590
    %v2174 = vunpack.c.h.b16 %v590
    %v2175 = vunpack.c.l.b16 %v591
    %v2176 = vunpack.c.h.b16 %v591
    %v2177 = vunpack.c.l.b16 %v592
    %v2178 = vunpack.c.h.b16 %v592
    %v2179 = vunpack.c.l.b16 %v593
    %v2180 = vunpack.c.h.b16 %v593
    %v2181 = vunpack.c.l.b16 %v594
    %v2182 = vunpack.c.h.b16 %v594
    %v2183 = vunpack.c.l.b16 %v595
    %v2184 = vunpack.c.h.b16 %v595
    %v2185 = vunpack.c.l.b16 %v596
    %v2186 = vunpack.c.h.b16 %v596
    %v2187 = vunpack.c.l.b16 %v597
    %v2188 = vunpack.c.h.b16 %v597
    %v2189 = vunpack.c.l.b16 %v598
    %v2190 = vunpack.c.h.b16 %v598
    %v2191 = vunpack.c.l.b16 %v599
    %v2192 = vunpack.c.h.b16 %v599
    %v2193 = vunpack.c.l.b16 %v600
    %v2194 = vunpack.c.h.b16 %v600
    %v2195 = vpack.c.b16 %v1179, %v1171
    %v2196 = vpack.c.b16 %v1180, %v1172
    %v2197 = vpack.c.b16 %v1181, %v1173
    %v2198 = vpack.c.b16 %v1182, %v1174
    %v2199 = vpack.c.b16 %v1183, %v1175
    %v2200 = vpack.c.b16 %v1184, %v1176
    %v2201 = vpack.c.b16 %v1185, %v1177
    %v2202 = vpack.c.b16 %v1186, %v1178
    %v2203 = vpack.c.b16 %v1195, %v1187
    %v2204 = vpack.c.b16 %v1196, %v1188
    %v2205 = vpack.c.b16 %v1197, %v1189
    %v2206 = vpack.c.b16 %v1198, %v1190
    %v2207 = vpack.c.b16 %v1199, %v1191
    %v2208 = vpack.c.b16 %v1200, %v1192
    %v2209 = vpack.c.b16 %v1201, %v1193
    %v2210 = vpack.c.b16 %v1202, %v1194
    %v2211 = vpack.c.b16 %v1211, %v1203
    %v2212 = vpack.c.b16 %v1212, %v1204
    %v2213 = vpack.c.b16 %v1213, %v1205
    %v2214 = vpack.c.b16 %v1214, %v1206
    %v2215 = vpack.c.b16 %v1215, %v1207
    %v2216 = vpack.c.b16 %v1216, %v1208
    %v2217 = vpack.c.b16 %v1217, %v1209
    %v2218 = vpack.c.b16 %v1218, %v1210
    %v2219 = vpack.c.b16 %v1227, %v1219
    %v2220 = vpack.c.b16 %v1228, %v1220
    %v2221 = vpack.c.b16 %v1229, %v1221
    %v2222 = vpack.c.b16 %v1230, %v1222
    %v2223 = vpack.c.b16 %v1231, %v1223
    %v2224 = vpack.c.b16 %v1232, %v1224
    %v2225 = vpack.c.b16 %v1233, %v1225
    %v2226 = vpack.c.b16 %v1234, %v1226
    %v2227 = vpack.c.b16 %v1243, %v1235
    %v2228 = vpack.c.b16 %v1244, %v1236
    %v2229 = vpack.c.b16 %v1245, %v1237
    %v2230 = vpack.c.b16 %v1246, %v1238
    %v2231 = vpack.c.b16 %v1247, %v1239
    %v2232 = vpack.c.b16 %v1248, %v1240
    %v2233 = vpack.c.b16 %v1249, %v1241
    %v2234 = vpack.c.b16 %v1250, %v1242
    %v2235 = vpack.c.b16 %v1259, %v1251
    %v2236 = vpack.c.b16 %v1260, %v1252
    %v2237 = vpack.c.b16 %v1261, %v1253
    %v2238 = vpack.c.b16 %v1262, %v1254
    %v2239 = vpack.c.b16 %v1263, %v1255
    %v2240 = vpack.c.b16 %v1264, %v1256
    %v2241 = vpack.c.b16 %v1265, %v1257
    %v2242 = vpack.c.b16 %v1266, %v1258
    %v2243 = vpack.c.b16 %v1275, %v1267
    %v2244 = vpack.c.b16 %v1276, %v1268
    %v2245 = vpack.c.b16 %v1277, %v1269
    %v2246 = vpack.c.b16 %v1278, %v1270
    %v2247 = vpack.c.b16 %v1279, %v1271
    %v2248 = vpack.c.b16 %v1280, %v1272
    %v2249 = vpack.c.b16 %v1281, %v1273
    %v2250 = vpack.c.b16 %v1282, %v1274
    %v2251 = vpack.c.b16 %v1291, %v1283
    %v2252 = vpack.c.b16 %v1292, %v1284
    %v2253 = vpack.c.b16 %v1293, %v1285
    %v2254 = vpack.c.b16 %v1294, %v1286
    %v2255 = vpack.c.b16 %v1295, %v1287
    %v2256 = vpack.c.b16 %v1296, %v1288
    %v2257 = vpack.c.b16 %v1297, %v1289
    %v2258 = vpack.c.b16 %v1298, %v1290
    %v2259 = vpack.c.b16 %v1307, %v1299
    %v2260 = vpack.c.b16 %v1308, %v1300
    %v2261 = vpack.c.b16 %v1309, %v1301
    %v2262 = vpack.c.b16 %v1310, %v1302
    %v2263 = vpack.c.b16 %v1311, %v1303
    %v2264 = vpack.c.b16 %v1312, %v1304
    %v2265 = vpack.c.b16 %v1313, %v1305
    %v2266 = vpack.c.b16 %v1314, %v1306
    %v2267 = vpack.c.b16 %v1323, %v1315
    %v2268 = vpack.c.b16 %v1324, %v1316
    %v2269 = vpack.c.b16 %v1325, %v1317
    %v2270 = vpack.c.b16 %v1326, %v1318
    %v2271 = vpack.c.b16 %v1327, %v1319
    %v2272 = vpack.c.b16 %v1328, %v1320
    %v2273 = vpack.c.b16 %v1329, %v1321
    %v2274 = vpack.c.b16 %v1330, %v1322
    %v2275 = vpack.c.b16 %v1339, %v1331
    %v2276 = vpack.c.b16 %v1340, %v1332
    %v2277 = vpack.c.b16 %v1341, %v1333
    %v2278 = vpack.c.b16 %v1342, %v1334
    %v2279 = vpack.c.b16 %v1343, %v1335
    %v2280 = vpack.c.b16 %v1344, %v1336
    %v2281 = vpack.c.b16 %v1345, %v1337
    %v2282 = vpack.c.b16 %v1346, %v1338
    %v2283 = vpack.c.b16 %v1355, %v1347
    %v2284 = vpack.c.b16 %v1356, %v1348
    %v2285 = vpack.c.b16 %v1357, %v1349
    %v2286 = vpack.c.b16 %v1358, %v1350
    %v2287 = vpack.c.b16 %v1359, %v1351
    %v2288 = vpack.c.b16 %v1360, %v1352
    %v2289 = vpack.c.b16 %v1361, %v1353
    %v2290 = vpack.c.b16 %v1362, %v1354
    %v2291 = vpack.c.b16 %v1371, %v1363
    %v2292 = vpack.c.b16 %v1372, %v1364
    %v2293 = vpack.c.b16 %v1373, %v1365
    %v2294 = vpack.c.b16 %v1374, %v1366
    %v2295 = vpack.c.b16 %v1375, %v1367
    %v2296 = vpack.c.b16 %v1376, %v1368
    %v2297 = vpack.c.b16 %v1377, %v1369
    %v2298 = vpack.c.b16 %v1378, %v1370
    %v2299 = vpack.c.b16 %v1387, %v1379
    %v2300 = vpack.c.b16 %v1388, %v1380
    %v2301 = vpack.c.b16 %v1389, %v1381
    %v2302 = vpack.c.b16 %v1390, %v1382
    %v2303 = vpack.c.b16 %v1391, %v1383
    %v2304 = vpack.c.b16 %v1392, %v1384
    %v2305 = vpack.c.b16 %v1393, %v1385
    %v2306 = vpack.c.b16 %v1394, %v1386
    %v2307 = vpack.c.b16 %v1403, %v1395
    %v2308 = vpack.c.b16 %v1404, %v1396
    %v2309 = vpack.c.b16 %v1405, %v1397
    %v2310 = vpack.c.b16 %v1406, %v1398
    %v2311 = vpack.c.b16 %v1407, %v1399
    %v2312 = vpack.c.b16 %v1408, %v1400
    %v2313 = vpack.c.b16 %v1409, %v1401
    %v2314 = vpack.c.b16 %v1410, %v1402
    %v2315 = vpack.c.b16 %v1419, %v1411
    %v2316 = vpack.c.b16 %v1420, %v1412
    %v2317 = vpack.c.b16 %v1421, %v1413
    %v2318 = vpack.c.b16 %v1422, %v1414
    %v2319 = vpack.c.b16 %v1423, %v1415
    %v2320 = vpack.c.b16 %v1424, %v1416
    %v2321 = vpack.c.b16 %v1425, %v1417
    %v2322 = vpack.c.b16 %v1426, %v1418
    %v2323 = vpack.c.b16 %v1435, %v1427
    %v2324 = vpack.c.b16 %v1436, %v1428
    %v2325 = vpack.c.b16 %v1437, %v1429
    %v2326 = vpack.c.b16 %v1438, %v1430
    %v2327 = vpack.c.b16 %v1439, %v1431
    %v2328 = vpack.c.b16 %v1440, %v1432
    %v2329 = vpack.c.b16 %v1441, %v1433
    %v2330 = vpack.c.b16 %v1442, %v1434
    %v2331 = vpack.c.b16 %v1451, %v1443
    %v2332 = vpack.c.b16 %v1452, %v1444
    %v2333 = vpack.c.b16 %v1453, %v1445
    %v2334 = vpack.c.b16 %v1454, %v1446
    %v2335 = vpack.c.b16 %v1455, %v1447
    %v2336 = vpack.c.b16 %v1456, %v1448
    %v2337 = vpack.c.b16 %v1457, %v1449
    %v2338 = vpack.c.b16 %v1458, %v1450
    %v2339 = vpack.c.b16 %v1467, %v1459
    %v2340 = vpack.c.b16 %v1468, %v1460
    %v2341 = vpack.c.b16 %v1469, %v1461
    %v2342 = vpack.c.b16 %v1470, %v1462
    %v2343 = vpack.c.b16 %v1471, %v1463
    %v2344 = vpack.c.b16 %v1472, %v1464
    %v2345 = vpack.c.b16 %v1473, %v1465
    %v2346 = vpack.c.b16 %v1474, %v1466
    %v2347 = vpack.c.b16 %v1483, %v1475
    %v2348 = vpack.c.b16 %v1484, %v1476
    %v2349 = vpack.c.b16 %v1485, %v1477
    %v2350 = vpack.c.b16 %v1486, %v1478
    %v2351 = vpack.c.b16 %v1487, %v1479
    %v2352 = vpack.c.b16 %v1488, %v1480
    %v2353 = vpack.c.b16 %v1489, %v1481
    %v2354 = vpack.c.b16 %v1490, %v1482
    %v2355 = vpack.c.b16 %v1499, %v1491
    %v2356 = vpack.c.b16 %v1500, %v1492
    %v2357 = vpack.c.b16 %v1501, %v1493
    %v2358 = vpack.c.b16 %v1502, %v1494
    %v2359 = vpack.c.b16 %v1503, %v1495
    %v2360 = vpack.c.b16 %v1504, %v1496
    %v2361 = vpack.c.b16 %v1505, %v1497
    %v2362 = vpack.c.b16 %v1506, %v1498
    %v2363 = vpack.c.b16 %v1515, %v1507
    %v2364 = vpack.c.b16 %v1516, %v1508
    %v2365 = vpack.c.b16 %v1517, %v1509
    %v2366 = vpack.c.b16 %v1518, %v1510
    %v2367 = vpack.c.b16 %v1519, %v1511
    %v2368 = vpack.c.b16 %v1520, %v1512
    %v2369 = vpack.c.b16 %v1521, %v1513
    %v2370 = vpack.c.b16 %v1522, %v1514
    %v2371 = vpack.c.b16 %v1531, %v1523
    %v2372 = vpack.c.b16 %v1532, %v1524
    %v2373 = vpack.c.b16 %v1533, %v1525
    %v2374 = vpack.c.b16 %v1534, %v1526
    %v2375 = vpack.c.b16 %v1535, %v1527
    %v2376 = vpack.c.b16 %v1536, %v1528
    %v2377 = vpack.c.b16 %v1537, %v1529
    %v2378 = vpack.c.b16 %v1538, %v1530
    %v2379 = vpack.c.b16 %v1547, %v1539
    %v2380 = vpack.c.b16 %v1548, %v1540
    %v2381 = vpack.c.b16 %v1549, %v1541
    %v2382 = vpack.c.b16 %v1550, %v1542
    %v2383 = vpack.c.b16 %v1551, %v1543
    %v2384 = vpack.c.b16 %v1552, %v1544
    %v2385 = vpack.c.b16 %v1553, %v1545
    %v2386 = vpack.c.b16 %v1554, %v1546
    %v2387 = vpack.c.b16 %v1563, %v1555
    %v2388 = vpack.c.b16 %v1564, %v1556
    %v2389 = vpack.c.b16 %v1565, %v1557
    %v2390 = vpack.c.b16 %v1566, %v1558
    %v2391 = vpack.c.b16 %v1567, %v1559
    %v2392 = vpack.c.b16 %v1568, %v1560
    %v2393 = vpack.c.b16 %v1569, %v1561
    %v2394 = vpack.c.b16 %v1570, %v1562
    %v2395 = vpack.c.b16 %v1579, %v1571
    %v2396 = vpack.c.b16 %v1580, %v1572
    %v2397 = vpack.c.b16 %v1581, %v1573
    %v2398 = vpack.c.b16 %v1582, %v1574
    %v2399 = vpack.c.b16 %v1583, %v1575
    %v2400 = vpack.c.b16 %v1584, %v1576
    %v2401 = vpack.c.b16 %v1585, %v1577
    %v2402 = vpack.c.b16 %v1586, %v1578
    %v2403 = vpack.c.b16 %v1595, %v1587
    %v2404 = vpack.c.b16 %v1596, %v1588
    %v2405 = vpack.c.b16 %v1597, %v1589
    %v2406 = vpack.c.b16 %v1598, %v1590
    %v2407 = vpack.c.b16 %v1599, %v1591
    %v2408 = vpack.c.b16 %v1600, %v1592
    %v2409 = vpack.c.b16 %v1601, %v1593
    %v2410 = vpack.c.b16 %v1602, %v1594
    %v2411 = vpack.c.b16 %v1611, %v1603
    %v2412 = vpack.c.b16 %v1612, %v1604
    %v2413 = vpack.c.b16 %v1613, %v1605
    %v2414 = vpack.c.b16 %v1614, %v1606
    %v2415 = vpack.c.b16 %v1615, %v1607
    %v2416 = vpack.c.b16 %v1616, %v1608
    %v2417 = vpack.c.b16 %v1617, %v1609
    %v2418 = vpack.c.b16 %v1618, %v1610
    %v2419 = vpack.c.b16 %v1627, %v1619
    %v2420 = vpack.c.b16 %v1628, %v1620
    %v2421 = vpack.c.b16 %v1629, %v1621
    %v2422 = vpack.c.b16 %v1630, %v1622
    %v2423 = vpack.c.b16 %v1631, %v1623
    %v2424 = vpack.c.b16 %v1632, %v1624
    %v2425 = vpack.c.b16 %v1633, %v1625
    %v2426 = vpack.c.b16 %v1634, %v1626
    %v2427 = vpack.c.b16 %v1643, %v1635
    %v2428 = vpack.c.b16 %v1644, %v1636
    %v2429 = vpack.c.b16 %v1645, %v1637
    %v2430 = vpack.c.b16 %v1646, %v1638
    %v2431 = vpack.c.b16 %v1647, %v1639
    %v2432 = vpack.c.b16 %v1648, %v1640
    %v2433 = vpack.c.b16 %v1649, %v1641
    %v2434 = vpack.c.b16 %v1650, %v1642
    %v2435 = vpack.c.b16 %v1659, %v1651
    %v2436 = vpack.c.b16 %v1660, %v1652
    %v2437 = vpack.c.b16 %v1661, %v1653
    %v2438 = vpack.c.b16 %v1662, %v1654
    %v2439 = vpack.c.b16 %v1663, %v1655
    %v2440 = vpack.c.b16 %v1664, %v1656
    %v2441 = vpack.c.b16 %v1665, %v1657
    %v2442 = vpack.c.b16 %v1666, %v1658
    %v2443 = vpack.c.b16 %v1675, %v1667
    %v2444 = vpack.c.b16 %v1676, %v1668
    %v2445 = vpack.c.b16 %v1677, %v1669
    %v2446 = vpack.c.b16 %v1678, %v1670
    %v2447 = vpack.c.b16 %v1679, %v1671
    %v2448 = vpack.c.b16 %v1680, %v1672
    %v2449 = vpack.c.b16 %v1681, %v1673
    %v2450 = vpack.c.b16 %v1682, %v1674
    %v2451 = vpack.c.b16 %v1691, %v1683
    %v2452 = vpack.c.b16 %v1692, %v1684
    %v2453 = vpack.c.b16 %v1693, %v1685
    %v2454 = vpack.c.b16 %v1694, %v1686
    %v2455 = vpack.c.b16 %v1695, %v1687
    %v2456 = vpack.c.b16 %v1696, %v1688
    %v2457 = vpack.c.b16 %v1697, %v1689
    %v2458 = vpack.c.b16 %v1698, %v1690
    %v2459 = vpack.c.b16 %v1707, %v1699
    %v2460 = vpack.c.b16 %v1708, %v1700
    %v2461 = vpack.c.b16 %v1709, %v1701
    %v2462 = vpack.c.b16 %v1710, %v1702
    %v2463 = vpack.c.b16 %v1711, %v1703
    %v2464 = vpack.c.b16 %v1712, %v1704
    %v2465 = vpack.c.b16 %v1713, %v1705
    %v2466 = vpack.c.b16 %v1714, %v1706
    %v2467 = vpack.c.b16 %v1723, %v1715
    %v2468 = vpack.c.b16 %v1724, %v1716
    %v2469 = vpack.c.b16 %v1725, %v1717
    %v2470 = vpack.c.b16 %v1726, %v1718
    %v2471 = vpack.c.b16 %v1727, %v1719
    %v2472 = vpack.c.b16 %v1728, %v1720
    %v2473 = vpack.c.b16 %v1729, %v1721
    %v2474 = vpack.c.b16 %v1730, %v1722
    %v2475 = vpack.c.b16 %v1739, %v1731
    %v2476 = vpack.c.b16 %v1740, %v1732
    %v2477 = vpack.c.b16 %v1741, %v1733
    %v2478 = vpack.c.b16 %v1742, %v1734
    %v2479 = vpack.c.b16 %v1743, %v1735
    %v2480 = vpack.c.b16 %v1744, %v1736
    %v2481 = vpack.c.b16 %v1745, %v1737
    %v2482 = vpack.c.b16 %v1746, %v1738
    %v2483 = vpack.c.b16 %v1755, %v1747
    %v2484 = vpack.c.b16 %v1756, %v1748
    %v2485 = vpack.c.b16 %v1757, %v1749
    %v2486 = vpack.c.b16 %v1758, %v1750
    %v2487 = vpack.c.b16 %v1759, %v1751
    %v2488 = vpack.c.b16 %v1760, %v1752
    %v2489 = vpack.c.b16 %v1761, %v1753
    %v2490 = vpack.c.b16 %v1762, %v1754
    %v2491 = vpack.c.b16 %v1771, %v1763
    %v2492 = vpack.c.b16 %v1772, %v1764
    %v2493 = vpack.c.b16 %v1773, %v1765
    %v2494 = vpack.c.b16 %v1774, %v1766
    %v2495 = vpack.c.b16 %v1775, %v1767
    %v2496 = vpack.c.b16 %v1776, %v1768
    %v2497 = vpack.c.b16 %v1777, %v1769
    %v2498 = vpack.c.b16 %v1778, %v1770
    %v2499 = vpack.c.b16 %v1787, %v1779
    %v2500 = vpack.c.b16 %v1788, %v1780
    %v2501 = vpack.c.b16 %v1789, %v1781
    %v2502 = vpack.c.b16 %v1790, %v1782
    %v2503 = vpack.c.b16 %v1791, %v1783
    %v2504 = vpack.c.b16 %v1792, %v1784
    %v2505 = vpack.c.b16 %v1793, %v1785
    %v2506 = vpack.c.b16 %v1794, %v1786
    %v2507 = vpack.c.b16 %v1803, %v1795
    %v2508 = vpack.c.b16 %v1804, %v1796
    %v2509 = vpack.c.b16 %v1805, %v1797
    %v2510 = vpack.c.b16 %v1806, %v1798
    %v2511 = vpack.c.b16 %v1807, %v1799
    %v2512 = vpack.c.b16 %v1808, %v1800
    %v2513 = vpack.c.b16 %v1809, %v1801
    %v2514 = vpack.c.b16 %v1810, %v1802
    %v2515 = vpack.c.b16 %v1819, %v1811
    %v2516 = vpack.c.b16 %v1820, %v1812
    %v2517 = vpack.c.b16 %v1821, %v1813
    %v2518 = vpack.c.b16 %v1822, %v1814
    %v2519 = vpack.c.b16 %v1823, %v1815
    %v2520 = vpack.c.b16 %v1824, %v1816
    %v2521 = vpack.c.b16 %v1825, %v1817
    %v2522 = vpack.c.b16 %v1826, %v1818
    %v2523 = vpack.c.b16 %v1835, %v1827
    %v2524 = vpack.c.b16 %v1836, %v1828
    %v2525 = vpack.c.b16 %v1837, %v1829
    %v2526 = vpack.c.b16 %v1838, %v1830
    %v2527 = vpack.c.b16 %v1839, %v1831
    %v2528 = vpack.c.b16 %v1840, %v1832
    %v2529 = vpack.c.b16 %v1841, %v1833
    %v2530 = vpack.c.b16 %v1842, %v1834
    %v2531 = vpack.c.b16 %v1851, %v1843
    %v2532 = vpack.c.b16 %v1852, %v1844
    %v2533 = vpack.c.b16 %v1853, %v1845
    %v2534 = vpack.c.b16 %v1854, %v1846
    %v2535 = vpack.c.b16 %v1855, %v1847
    %v2536 = vpack.c.b16 %v1856, %v1848
    %v2537 = vpack.c.b16 %v1857, %v1849
    %v2538 = vpack.c.b16 %v1858, %v1850
    %v2539 = vpack.c.b16 %v1867, %v1859
    %v2540 = vpack.c.b16 %v1868, %v1860
    %v2541 = vpack.c.b16 %v1869, %v1861
    %v2542 = vpack.c.b16 %v1870, %v1862
    %v2543 = vpack.c.b16 %v1871, %v1863
    %v2544 = vpack.c.b16 %v1872, %v1864
    %v2545 = vpack.c.b16 %v1873, %v1865
    %v2546 = vpack.c.b16 %v1874, %v1866
    %v2547 = vpack.c.b16 %v1883, %v1875
    %v2548 = vpack.c.b16 %v1884, %v1876
    %v2549 = vpack.c.b16 %v1885, %v1877
    %v2550 = vpack.c.b16 %v1886, %v1878
    %v2551 = vpack.c.b16 %v1887, %v1879
    %v2552 = vpack.c.b16 %v1888, %v1880
    %v2553 = vpack.c.b16 %v1889, %v1881
    %v2554 = vpack.c.b16 %v1890, %v1882
    %v2555 = vpack.c.b16 %v1899, %v1891
    %v2556 = vpack.c.b16 %v1900, %v1892
    %v2557 = vpack.c.b16 %v1901, %v1893
    %v2558 = vpack.c.b16 %v1902, %v1894
    %v2559 = vpack.c.b16 %v1903, %v1895
    %v2560 = vpack.c.b16 %v1904, %v1896
    %v2561 = vpack.c.b16 %v1905, %v1897
    %v2562 = vpack.c.b16 %v1906, %v1898
    %v2563 = vpack.c.b16 %v1915, %v1907
    %v2564 = vpack.c.b16 %v1916, %v1908
    %v2565 = vpack.c.b16 %v1917, %v1909
    %v2566 = vpack.c.b16 %v1918, %v1910
    %v2567 = vpack.c.b16 %v1919, %v1911
    %v2568 = vpack.c.b16 %v1920, %v1912
    %v2569 = vpack.c.b16 %v1921, %v1913
    %v2570 = vpack.c.b16 %v1922, %v1914
    %v2571 = vpack.c.b16 %v1931, %v1923
    %v2572 = vpack.c.b16 %v1932, %v1924
    %v2573 = vpack.c.b16 %v1933, %v1925
    %v2574 = vpack.c.b16 %v1934, %v1926
    %v2575 = vpack.c.b16 %v1935, %v1927
    %v2576 = vpack.c.b16 %v1936, %v1928
    %v2577 = vpack.c.b16 %v1937, %v1929
    %v2578 = vpack.c.b16 %v1938, %v1930
    %v2579 = vpack.c.b16 %v1947, %v1939
    %v2580 = vpack.c.b16 %v1948, %v1940
    %v2581 = vpack.c.b16 %v1949, %v1941
    %v2582 = vpack.c.b16 %v1950, %v1942
    %v2583 = vpack.c.b16 %v1951, %v1943
    %v2584 = vpack.c.b16 %v1952, %v1944
    %v2585 = vpack.c.b16 %v1953, %v1945
    %v2586 = vpack.c.b16 %v1954, %v1946
    %v2587 = vpack.c.b16 %v1963, %v1955
    %v2588 = vpack.c.b16 %v1964, %v1956
    %v2589 = vpack.c.b16 %v1965, %v1957
    %v2590 = vpack.c.b16 %v1966, %v1958
    %v2591 = vpack.c.b16 %v1967, %v1959
    %v2592 = vpack.c.b16 %v1968, %v1960
    %v2593 = vpack.c.b16 %v1969, %v1961
    %v2594 = vpack.c.b16 %v1970, %v1962
    %v2595 = vpack.c.b16 %v1979, %v1971
    %v2596 = vpack.c.b16 %v1980, %v1972
    %v2597 = vpack.c.b16 %v1981, %v1973
    %v2598 = vpack.c.b16 %v1982, %v1974
    %v2599 = vpack.c.b16 %v1983, %v1975
    %v2600 = vpack.c.b16 %v1984, %v1976
    %v2601 = vpack.c.b16 %v1985, %v1977
    %v2602 = vpack.c.b16 %v1986, %v1978
    %v2603 = vpack.c.b16 %v1995, %v1987
    %v2604 = vpack.c.b16 %v1996, %v1988
    %v2605 = vpack.c.b16 %v1997, %v1989
    %v2606 = vpack.c.b16 %v1998, %v1990
    %v2607 = vpack.c.b16 %v1999, %v1991
    %v2608 = vpack.c.b16 %v2000, %v1992
    %v2609 = vpack.c.b16 %v2001, %v1993
    %v2610 = vpack.c.b16 %v2002, %v1994
    %v2611 = vpack.c.b16 %v2011, %v2003
    %v2612 = vpack.c.b16 %v2012, %v2004
    %v2613 = vpack.c.b16 %v2013, %v2005
    %v2614 = vpack.c.b16 %v2014, %v2006
    %v2615 = vpack.c.b16 %v2015, %v2007
    %v2616 = vpack.c.b16 %v2016, %v2008
    %v2617 = vpack.c.b16 %v2017, %v2009
    %v2618 = vpack.c.b16 %v2018, %v2010
    %v2619 = vpack.c.b16 %v2027, %v2019
    %v2620 = vpack.c.b16 %v2028, %v2020
    %v2621 = vpack.c.b16 %v2029, %v2021
    %v2622 = vpack.c.b16 %v2030, %v2022
    %v2623 = vpack.c.b16 %v2031, %v2023
    %v2624 = vpack.c.b16 %v2032, %v2024
    %v2625 = vpack.c.b16 %v2033, %v2025
    %v2626 = vpack.c.b16 %v2034, %v2026
    %v2627 = vpack.c.b16 %v2043, %v2035
    %v2628 = vpack.c.b16 %v2044, %v2036
    %v2629 = vpack.c.b16 %v2045, %v2037
    %v2630 = vpack.c.b16 %v2046, %v2038
    %v2631 = vpack.c.b16 %v2047, %v2039
    %v2632 = vpack.c.b16 %v2048, %v2040
    %v2633 = vpack.c.b16 %v2049, %v2041
    %v2634 = vpack.c.b16 %v2050, %v2042
    %v2635 = vpack.c.b16 %v2059, %v2051
    %v2636 = vpack.c.b16 %v2060, %v2052
    %v2637 = vpack.c.b16 %v2061, %v2053
    %v2638 = vpack.c.b16 %v2062, %v2054
    %v2639 = vpack.c.b16 %v2063, %v2055
    %v2640 = vpack.c.b16 %v2064, %v2056
    %v2641 = vpack.c.b16 %v2065, %v2057
    %v2642 = vpack.c.b16 %v2066, %v2058
    %v2643 = vpack.c.b16 %v2075, %v2067
    %v2644 = vpack.c.b16 %v2076, %v2068
    %v2645 = vpack.c.b16 %v2077, %v2069
    %v2646 = vpack.c.b16 %v2078, %v2070
    %v2647 = vpack.c.b16 %v2079, %v2071
    %v2648 = vpack.c.b16 %v2080, %v2072
    %v2649 = vpack.c.b16 %v2081, %v2073
    %v2650 = vpack.c.b16 %v2082, %v2074
    %v2651 = vpack.c.b16 %v2091, %v2083
    %v2652 = vpack.c.b16 %v2092, %v2084
    %v2653 = vpack.c.b16 %v2093, %v2085
    %v2654 = vpack.c.b16 %v2094, %v2086
    %v2655 = vpack.c.b16 %v2095, %v2087
    %v2656 = vpack.c.b16 %v2096, %v2088
    %v2657 = vpack.c.b16 %v2097, %v2089
    %v2658 = vpack.c.b16 %v2098, %v2090
    %v2659 = vpack.c.b16 %v2107, %v2099
    %v2660 = vpack.c.b16 %v2108, %v2100
    %v2661 = vpack.c.b16 %v2109, %v2101
    %v2662 = vpack.c.b16 %v2110, %v2102
    %v2663 = vpack.c.b16 %v2111, %v2103
    %v2664 = vpack.c.b16 %v2112, %v2104
    %v2665 = vpack.c.b16 %v2113, %v2105
    %v2666 = vpack.c.b16 %v2114, %v2106
    %v2667 = vpack.c.b16 %v2123, %v2115
    %v2668 = vpack.c.b16 %v2124, %v2116
    %v2669 = vpack.c.b16 %v2125, %v2117
    %v2670 = vpack.c.b16 %v2126, %v2118
    %v2671 = vpack.c.b16 %v2127, %v2119
    %v2672 = vpack.c.b16 %v2128, %v2120
    %v2673 = vpack.c.b16 %v2129, %v2121
    %v2674 = vpack.c.b16 %v2130, %v2122
    %v2675 = vpack.c.b16 %v2139, %v2131
    %v2676 = vpack.c.b16 %v2140, %v2132
    %v2677 = vpack.c.b16 %v2141, %v2133
    %v2678 = vpack.c.b16 %v2142, %v2134
    %v2679 = vpack.c.b16 %v2143, %v2135
    %v2680 = vpack.c.b16 %v2144, %v2136
    %v2681 = vpack.c.b16 %v2145, %v2137
    %v2682 = vpack.c.b16 %v2146, %v2138
    %v2683 = vpack.c.b16 %v2155, %v2147
    %v2684 = vpack.c.b16 %v2156, %v2148
    %v2685 = vpack.c.b16 %v2157, %v2149
    %v2686 = vpack.c.b16 %v2158, %v2150
    %v2687 = vpack.c.b16 %v2159, %v2151
    %v2688 = vpack.c.b16 %v2160, %v2152
    %v2689 = vpack.c.b16 %v2161, %v2153
    %v2690 = vpack.c.b16 %v2162, %v2154
    %v2691 = vpack.c.b16 %v2171, %v2163
    %v2692 = vpack.c.b16 %v2172, %v2164
    %v2693 = vpack.c.b16 %v2173, %v2165
    %v2694 = vpack.c.b16 %v2174, %v2166
    %v2695 = vpack.c.b16 %v2175, %v2167
    %v2696 = vpack.c.b16 %v2176, %v2168
    %v2697 = vpack.c.b16 %v2177, %v2169
    %v2698 = vpack.c.b16 %v2178, %v2170
    %v2699 = vpack.c.b16 %v2187, %v2179
    %v2700 = vpack.c.b16 %v2188, %v2180
    %v2701 = vpack.c.b16 %v2189, %v2181
    %v2702 = vpack.c.b16 %v2190, %v2182
    %v2703 = vpack.c.b16 %v2191, %v2183
    %v2704 = vpack.c.b16 %v2192, %v2184
    %v2705 = vpack.c.b16 %v2193, %v2185
    %v2706 = vpack.c.b16 %v2194, %v2186
    %3219 = vmatpush.bf16.msra.mxu0 %v2251
    %3220 = vmatpush.bf16.msra.mxu0 %v2243
    %3221 = vmatpush.bf16.msra.mxu0 %v2235
    %3222 = vmatpush.bf16.msra.mxu0 %v2227
    %3223 = vmatpush.bf16.msra.mxu0 %v2219
    %3224 = vmatpush.bf16.msra.mxu0 %v2211
    %3225 = vmatpush.bf16.msra.mxu0 %v2203
    %3226 = vmatpush.bf16.msra.mxu0 %v2195
    %3227 = vmatmul.bf16.gmra.mxu0 %v643
    %v3228 = vpop.f32.mrf.mxu0
    %v3229 = vadd.f32 %v603, %v3228
    %v3230 = vpop.f32.mrf.mxu0
    %v3231 = vadd.f32 %v603, %v3230
    %3232 = vdwg.mxu0
    %3233 = vmatpush.bf16.msra.mxu0 %v2315
    %3234 = vmatpush.bf16.msra.mxu0 %v2307
    %3235 = vmatpush.bf16.msra.mxu0 %v2299
    %3236 = vmatpush.bf16.msra.mxu0 %v2291
    %3237 = vmatpush.bf16.msra.mxu0 %v2283
    %3238 = vmatpush.bf16.msra.mxu0 %v2275
    %3239 = vmatpush.bf16.msra.mxu0 %v2267
    %3240 = vmatpush.bf16.msra.mxu0 %v2259
    %3241 = vmatmul.bf16.gmra.mxu0 %v644
    %v3242 = vpop.f32.mrf.mxu0
    %v3243 = vadd.f32 %v3229, %v3242
    %v3244 = vpop.f32.mrf.mxu0
    %v3245 = vadd.f32 %v3231, %v3244
    %3246 = vdwg.mxu0
    %3247 = vmatpush.bf16.msra.mxu0 %v2379
    %3248 = vmatpush.bf16.msra.mxu0 %v2371
    %3249 = vmatpush.bf16.msra.mxu0 %v2363
    %3250 = vmatpush.bf16.msra.mxu0 %v2355
    %3251 = vmatpush.bf16.msra.mxu0 %v2347
    %3252 = vmatpush.bf16.msra.mxu0 %v2339
    %3253 = vmatpush.bf16.msra.mxu0 %v2331
    %3254 = vmatpush.bf16.msra.mxu0 %v2323
    %3255 = vmatmul.bf16.gmra.mxu0 %v645
    %v3256 = vpop.f32.mrf.mxu0
    %v3257 = vadd.f32 %v3243, %v3256
    %v3258 = vpop.f32.mrf.mxu0
    %v3259 = vadd.f32 %v3245, %v3258
    %3260 = vdwg.mxu0
    %3261 = vmatpush.bf16.msra.mxu0 %v2443
    %3262 = vmatpush.bf16.msra.mxu0 %v2435
    %3263 = vmatpush.bf16.msra.mxu0 %v2427
    %3264 = vmatpush.bf16.msra.mxu0 %v2419
    %3265 = vmatpush.bf16.msra.mxu0 %v2411
    %3266 = vmatpush.bf16.msra.mxu0 %v2403
    %3267 = vmatpush.bf16.msra.mxu0 %v2395
    %3268 = vmatpush.bf16.msra.mxu0 %v2387
    %3269 = vmatmul.bf16.gmra.mxu0 %v646
    %v3270 = vpop.f32.mrf.mxu0
    %v3271 = vadd.f32 %v3257, %v3270
    %v3272 = vpop.f32.mrf.mxu0
    %v3273 = vadd.f32 %v3259, %v3272
    %3274 = vdwg.mxu0
    %3275 = vmatpush.bf16.msra.mxu0 %v2507
    %3276 = vmatpush.bf16.msra.mxu0 %v2499
    %3277 = vmatpush.bf16.msra.mxu0 %v2491
    %3278 = vmatpush.bf16.msra.mxu0 %v2483
    %3279 = vmatpush.bf16.msra.mxu0 %v2475
    %3280 = vmatpush.bf16.msra.mxu0 %v2467
    %3281 = vmatpush.bf16.msra.mxu0 %v2459
    %3282 = vmatpush.bf16.msra.mxu0 %v2451
    %3283 = vmatmul.bf16.gmra.mxu0 %v647
    %v3284 = vpop.f32.mrf.mxu0
    %v3285 = vadd.f32 %v3271, %v3284
    %v3286 = vpop.f32.mrf.mxu0
    %v3287 = vadd.f32 %v3273, %v3286
    %3288 = vdwg.mxu0
    %3289 = vmatpush.bf16.msra.mxu0 %v2571
    %3290 = vmatpush.bf16.msra.mxu0 %v2563
    %3291 = vmatpush.bf16.msra.mxu0 %v2555
    %3292 = vmatpush.bf16.msra.mxu0 %v2547
    %3293 = vmatpush.bf16.msra.mxu0 %v2539
    %3294 = vmatpush.bf16.msra.mxu0 %v2531
    %3295 = vmatpush.bf16.msra.mxu0 %v2523
    %3296 = vmatpush.bf16.msra.mxu0 %v2515
    %3297 = vmatmul.bf16.gmra.mxu0 %v648
    %v3298 = vpop.f32.mrf.mxu0
    %v3299 = vadd.f32 %v3285, %v3298
    %v3300 = vpop.f32.mrf.mxu0
    %v3301 = vadd.f32 %v3287, %v3300
    %3302 = vdwg.mxu0
    %3303 = vmatpush.bf16.msra.mxu0 %v2635
    %3304 = vmatpush.bf16.msra.mxu0 %v2627
    %3305 = vmatpush.bf16.msra.mxu0 %v2619
    %3306 = vmatpush.bf16.msra.mxu0 %v2611
    %3307 = vmatpush.bf16.msra.mxu0 %v2603
    %3308 = vmatpush.bf16.msra.mxu0 %v2595
    %3309 = vmatpush.bf16.msra.mxu0 %v2587
    %3310 = vmatpush.bf16.msra.mxu0 %v2579
    %3311 = vmatmul.bf16.gmra.mxu0 %v649
    %v3312 = vpop.f32.mrf.mxu0
    %v3313 = vadd.f32 %v3299, %v3312
    %v3314 = vpop.f32.mrf.mxu0
    %v3315 = vadd.f32 %v3301, %v3314
    %3316 = vdwg.mxu0
    %3317 = vmatpush.bf16.msra.mxu0 %v2699
    %3318 = vmatpush.bf16.msra.mxu0 %v2691
    %3319 = vmatpush.bf16.msra.mxu0 %v2683
    %3320 = vmatpush.bf16.msra.mxu0 %v2675
    %3321 = vmatpush.bf16.msra.mxu0 %v2667
    %3322 = vmatpush.bf16.msra.mxu0 %v2659
    %3323 = vmatpush.bf16.msra.mxu0 %v2651
    %3324 = vmatpush.bf16.msra.mxu0 %v2643
    %3325 = vmatmul.bf16.gmra.mxu0 %v650
    %v3326 = vpop.f32.mrf.mxu0
    %v3327 = vadd.f32 %v3313, %v3326
    %v3328 = vpop.f32.mrf.mxu0
    %v3329 = vadd.f32 %v3315, %v3328
    %3330 = vdwg.mxu0
    %3331 = vmatpush.bf16.msra.mxu0 %v2252
    %3332 = vmatpush.bf16.msra.mxu0 %v2244
    %3333 = vmatpush.bf16.msra.mxu0 %v2236
    %3334 = vmatpush.bf16.msra.mxu0 %v2228
    %3335 = vmatpush.bf16.msra.mxu0 %v2220
    %3336 = vmatpush.bf16.msra.mxu0 %v2212
    %3337 = vmatpush.bf16.msra.mxu0 %v2204
    %3338 = vmatpush.bf16.msra.mxu0 %v2196
    %3339 = vmatmul.bf16.gmra.mxu0 %v643
    %v3340 = vpop.f32.mrf.mxu0
    %v3341 = vadd.f32 %v604, %v3340
    %v3342 = vpop.f32.mrf.mxu0
    %v3343 = vadd.f32 %v604, %v3342
    %3344 = vdwg.mxu0
    %3345 = vmatpush.bf16.msra.mxu0 %v2316
    %3346 = vmatpush.bf16.msra.mxu0 %v2308
    %3347 = vmatpush.bf16.msra.mxu0 %v2300
    %3348 = vmatpush.bf16.msra.mxu0 %v2292
    %3349 = vmatpush.bf16.msra.mxu0 %v2284
    %3350 = vmatpush.bf16.msra.mxu0 %v2276
    %3351 = vmatpush.bf16.msra.mxu0 %v2268
    %3352 = vmatpush.bf16.msra.mxu0 %v2260
    %3353 = vmatmul.bf16.gmra.mxu0 %v644
    %v3354 = vpop.f32.mrf.mxu0
    %v3355 = vadd.f32 %v3341, %v3354
    %v3356 = vpop.f32.mrf.mxu0
    %v3357 = vadd.f32 %v3343, %v3356
    %3358 = vdwg.mxu0
    %3359 = vmatpush.bf16.msra.mxu0 %v2380
    %3360 = vmatpush.bf16.msra.mxu0 %v2372
    %3361 = vmatpush.bf16.msra.mxu0 %v2364
    %3362 = vmatpush.bf16.msra.mxu0 %v2356
    %3363 = vmatpush.bf16.msra.mxu0 %v2348
    %3364 = vmatpush.bf16.msra.mxu0 %v2340
    %3365 = vmatpush.bf16.msra.mxu0 %v2332
    %3366 = vmatpush.bf16.msra.mxu0 %v2324
    %3367 = vmatmul.bf16.gmra.mxu0 %v645
    %v3368 = vpop.f32.mrf.mxu0
    %v3369 = vadd.f32 %v3355, %v3368
    %v3370 = vpop.f32.mrf.mxu0
    %v3371 = vadd.f32 %v3357, %v3370
    %3372 = vdwg.mxu0
    %3373 = vmatpush.bf16.msra.mxu0 %v2444
    %3374 = vmatpush.bf16.msra.mxu0 %v2436
    %3375 = vmatpush.bf16.msra.mxu0 %v2428
    %3376 = vmatpush.bf16.msra.mxu0 %v2420
    %3377 = vmatpush.bf16.msra.mxu0 %v2412
    %3378 = vmatpush.bf16.msra.mxu0 %v2404
    %3379 = vmatpush.bf16.msra.mxu0 %v2396
    %3380 = vmatpush.bf16.msra.mxu0 %v2388
    %3381 = vmatmul.bf16.gmra.mxu0 %v646
    %v3382 = vpop.f32.mrf.mxu0
    %v3383 = vadd.f32 %v3369, %v3382
    %v3384 = vpop.f32.mrf.mxu0
    %v3385 = vadd.f32 %v3371, %v3384
    %3386 = vdwg.mxu0
    %3387 = vmatpush.bf16.msra.mxu0 %v2508
    %3388 = vmatpush.bf16.msra.mxu0 %v2500
    %3389 = vmatpush.bf16.msra.mxu0 %v2492
    %3390 = vmatpush.bf16.msra.mxu0 %v2484
    %3391 = vmatpush.bf16.msra.mxu0 %v2476
    %3392 = vmatpush.bf16.msra.mxu0 %v2468
    %3393 = vmatpush.bf16.msra.mxu0 %v2460
    %3394 = vmatpush.bf16.msra.mxu0 %v2452
    %3395 = vmatmul.bf16.gmra.mxu0 %v647
    %v3396 = vpop.f32.mrf.mxu0
    %v3397 = vadd.f32 %v3383, %v3396
    %v3398 = vpop.f32.mrf.mxu0
    %v3399 = vadd.f32 %v3385, %v3398
    %3400 = vdwg.mxu0
    %3401 = vmatpush.bf16.msra.mxu0 %v2572
    %3402 = vmatpush.bf16.msra.mxu0 %v2564
    %3403 = vmatpush.bf16.msra.mxu0 %v2556
    %3404 = vmatpush.bf16.msra.mxu0 %v2548
    %3405 = vmatpush.bf16.msra.mxu0 %v2540
    %3406 = vmatpush.bf16.msra.mxu0 %v2532
    %3407 = vmatpush.bf16.msra.mxu0 %v2524
    %3408 = vmatpush.bf16.msra.mxu0 %v2516
    %3409 = vmatmul.bf16.gmra.mxu0 %v648
    %v3410 = vpop.f32.mrf.mxu0
    %v3411 = vadd.f32 %v3397, %v3410
    %v3412 = vpop.f32.mrf.mxu0
    %v3413 = vadd.f32 %v3399, %v3412
    %3414 = vdwg.mxu0
    %3415 = vmatpush.bf16.msra.mxu0 %v2636
    %3416 = vmatpush.bf16.msra.mxu0 %v2628
    %3417 = vmatpush.bf16.msra.mxu0 %v2620
    %3418 = vmatpush.bf16.msra.mxu0 %v2612
    %3419 = vmatpush.bf16.msra.mxu0 %v2604
    %3420 = vmatpush.bf16.msra.mxu0 %v2596
    %3421 = vmatpush.bf16.msra.mxu0 %v2588
    %3422 = vmatpush.bf16.msra.mxu0 %v2580
    %3423 = vmatmul.bf16.gmra.mxu0 %v649
    %v3424 = vpop.f32.mrf.mxu0
    %v3425 = vadd.f32 %v3411, %v3424
    %v3426 = vpop.f32.mrf.mxu0
    %v3427 = vadd.f32 %v3413, %v3426
    %3428 = vdwg.mxu0
    %3429 = vmatpush.bf16.msra.mxu0 %v2700
    %3430 = vmatpush.bf16.msra.mxu0 %v2692
    %3431 = vmatpush.bf16.msra.mxu0 %v2684
    %3432 = vmatpush.bf16.msra.mxu0 %v2676
    %3433 = vmatpush.bf16.msra.mxu0 %v2668
    %3434 = vmatpush.bf16.msra.mxu0 %v2660
    %3435 = vmatpush.bf16.msra.mxu0 %v2652
    %3436 = vmatpush.bf16.msra.mxu0 %v2644
    %3437 = vmatmul.bf16.gmra.mxu0 %v650
    %v3438 = vpop.f32.mrf.mxu0
    %v3439 = vadd.f32 %v3425, %v3438
    %v3440 = vpop.f32.mrf.mxu0
    %v3441 = vadd.f32 %v3427, %v3440
    %3442 = vdwg.mxu0
    %3443 = vmatpush.bf16.msra.mxu0 %v2253
    %3444 = vmatpush.bf16.msra.mxu0 %v2245
    %3445 = vmatpush.bf16.msra.mxu0 %v2237
    %3446 = vmatpush.bf16.msra.mxu0 %v2229
    %3447 = vmatpush.bf16.msra.mxu0 %v2221
    %3448 = vmatpush.bf16.msra.mxu0 %v2213
    %3449 = vmatpush.bf16.msra.mxu0 %v2205
    %3450 = vmatpush.bf16.msra.mxu0 %v2197
    %3451 = vmatmul.bf16.gmra.mxu0 %v643
    %v3452 = vpop.f32.mrf.mxu0
    %v3453 = vadd.f32 %v605, %v3452
    %v3454 = vpop.f32.mrf.mxu0
    %v3455 = vadd.f32 %v605, %v3454
    %3456 = vdwg.mxu0
    %3457 = vmatpush.bf16.msra.mxu0 %v2317
    %3458 = vmatpush.bf16.msra.mxu0 %v2309
    %3459 = vmatpush.bf16.msra.mxu0 %v2301
    %3460 = vmatpush.bf16.msra.mxu0 %v2293
    %3461 = vmatpush.bf16.msra.mxu0 %v2285
    %3462 = vmatpush.bf16.msra.mxu0 %v2277
    %3463 = vmatpush.bf16.msra.mxu0 %v2269
    %3464 = vmatpush.bf16.msra.mxu0 %v2261
    %3465 = vmatmul.bf16.gmra.mxu0 %v644
    %v3466 = vpop.f32.mrf.mxu0
    %v3467 = vadd.f32 %v3453, %v3466
    %v3468 = vpop.f32.mrf.mxu0
    %v3469 = vadd.f32 %v3455, %v3468
    %3470 = vdwg.mxu0
    %3471 = vmatpush.bf16.msra.mxu0 %v2381
    %3472 = vmatpush.bf16.msra.mxu0 %v2373
    %3473 = vmatpush.bf16.msra.mxu0 %v2365
    %3474 = vmatpush.bf16.msra.mxu0 %v2357
    %3475 = vmatpush.bf16.msra.mxu0 %v2349
    %3476 = vmatpush.bf16.msra.mxu0 %v2341
    %3477 = vmatpush.bf16.msra.mxu0 %v2333
    %3478 = vmatpush.bf16.msra.mxu0 %v2325
    %3479 = vmatmul.bf16.gmra.mxu0 %v645
    %v3480 = vpop.f32.mrf.mxu0
    %v3481 = vadd.f32 %v3467, %v3480
    %v3482 = vpop.f32.mrf.mxu0
    %v3483 = vadd.f32 %v3469, %v3482
    %3484 = vdwg.mxu0
    %3485 = vmatpush.bf16.msra.mxu0 %v2445
    %3486 = vmatpush.bf16.msra.mxu0 %v2437
    %3487 = vmatpush.bf16.msra.mxu0 %v2429
    %3488 = vmatpush.bf16.msra.mxu0 %v2421
    %3489 = vmatpush.bf16.msra.mxu0 %v2413
    %3490 = vmatpush.bf16.msra.mxu0 %v2405
    %3491 = vmatpush.bf16.msra.mxu0 %v2397
    %3492 = vmatpush.bf16.msra.mxu0 %v2389
    %3493 = vmatmul.bf16.gmra.mxu0 %v646
    %v3494 = vpop.f32.mrf.mxu0
    %v3495 = vadd.f32 %v3481, %v3494
    %v3496 = vpop.f32.mrf.mxu0
    %v3497 = vadd.f32 %v3483, %v3496
    %3498 = vdwg.mxu0
    %3499 = vmatpush.bf16.msra.mxu0 %v2509
    %3500 = vmatpush.bf16.msra.mxu0 %v2501
    %3501 = vmatpush.bf16.msra.mxu0 %v2493
    %3502 = vmatpush.bf16.msra.mxu0 %v2485
    %3503 = vmatpush.bf16.msra.mxu0 %v2477
    %3504 = vmatpush.bf16.msra.mxu0 %v2469
    %3505 = vmatpush.bf16.msra.mxu0 %v2461
    %3506 = vmatpush.bf16.msra.mxu0 %v2453
    %3507 = vmatmul.bf16.gmra.mxu0 %v647
    %v3508 = vpop.f32.mrf.mxu0
    %v3509 = vadd.f32 %v3495, %v3508
    %v3510 = vpop.f32.mrf.mxu0
    %v3511 = vadd.f32 %v3497, %v3510
    %3512 = vdwg.mxu0
    %3513 = vmatpush.bf16.msra.mxu0 %v2573
    %3514 = vmatpush.bf16.msra.mxu0 %v2565
    %3515 = vmatpush.bf16.msra.mxu0 %v2557
    %3516 = vmatpush.bf16.msra.mxu0 %v2549
    %3517 = vmatpush.bf16.msra.mxu0 %v2541
    %3518 = vmatpush.bf16.msra.mxu0 %v2533
    %3519 = vmatpush.bf16.msra.mxu0 %v2525
    %3520 = vmatpush.bf16.msra.mxu0 %v2517
    %3521 = vmatmul.bf16.gmra.mxu0 %v648
    %v3522 = vpop.f32.mrf.mxu0
    %v3523 = vadd.f32 %v3509, %v3522
    %v3524 = vpop.f32.mrf.mxu0
    %v3525 = vadd.f32 %v3511, %v3524
    %3526 = vdwg.mxu0
    %3527 = vmatpush.bf16.msra.mxu0 %v2637
    %3528 = vmatpush.bf16.msra.mxu0 %v2629
    %3529 = vmatpush.bf16.msra.mxu0 %v2621
    %3530 = vmatpush.bf16.msra.mxu0 %v2613
    %3531 = vmatpush.bf16.msra.mxu0 %v2605
    %3532 = vmatpush.bf16.msra.mxu0 %v2597
    %3533 = vmatpush.bf16.msra.mxu0 %v2589
    %3534 = vmatpush.bf16.msra.mxu0 %v2581
    %3535 = vmatmul.bf16.gmra.mxu0 %v649
    %v3536 = vpop.f32.mrf.mxu0
    %v3537 = vadd.f32 %v3523, %v3536
    %v3538 = vpop.f32.mrf.mxu0
    %v3539 = vadd.f32 %v3525, %v3538
    %3540 = vdwg.mxu0
    %3541 = vmatpush.bf16.msra.mxu0 %v2701
    %3542 = vmatpush.bf16.msra.mxu0 %v2693
    %3543 = vmatpush.bf16.msra.mxu0 %v2685
    %3544 = vmatpush.bf16.msra.mxu0 %v2677
    %3545 = vmatpush.bf16.msra.mxu0 %v2669
    %3546 = vmatpush.bf16.msra.mxu0 %v2661
    %3547 = vmatpush.bf16.msra.mxu0 %v2653
    %3548 = vmatpush.bf16.msra.mxu0 %v2645
    %3549 = vmatmul.bf16.gmra.mxu0 %v650
    %v3550 = vpop.f32.mrf.mxu0
    %v3551 = vadd.f32 %v3537, %v3550
    %v3552 = vpop.f32.mrf.mxu0
    %v3553 = vadd.f32 %v3539, %v3552
    %3554 = vdwg.mxu0
    %3555 = vmatpush.bf16.msra.mxu0 %v2254
    %3556 = vmatpush.bf16.msra.mxu0 %v2246
    %3557 = vmatpush.bf16.msra.mxu0 %v2238
    %3558 = vmatpush.bf16.msra.mxu0 %v2230
    %3559 = vmatpush.bf16.msra.mxu0 %v2222
    %3560 = vmatpush.bf16.msra.mxu0 %v2214
    %3561 = vmatpush.bf16.msra.mxu0 %v2206
    %3562 = vmatpush.bf16.msra.mxu0 %v2198
    %3563 = vmatmul.bf16.gmra.mxu0 %v643
    %v3564 = vpop.f32.mrf.mxu0
    %v3565 = vadd.f32 %v606, %v3564
    %v3566 = vpop.f32.mrf.mxu0
    %v3567 = vadd.f32 %v606, %v3566
    %3568 = vdwg.mxu0
    %3569 = vmatpush.bf16.msra.mxu0 %v2318
    %3570 = vmatpush.bf16.msra.mxu0 %v2310
    %3571 = vmatpush.bf16.msra.mxu0 %v2302
    %3572 = vmatpush.bf16.msra.mxu0 %v2294
    %3573 = vmatpush.bf16.msra.mxu0 %v2286
    %3574 = vmatpush.bf16.msra.mxu0 %v2278
    %3575 = vmatpush.bf16.msra.mxu0 %v2270
    %3576 = vmatpush.bf16.msra.mxu0 %v2262
    %3577 = vmatmul.bf16.gmra.mxu0 %v644
    %v3578 = vpop.f32.mrf.mxu0
    %v3579 = vadd.f32 %v3565, %v3578
    %v3580 = vpop.f32.mrf.mxu0
    %v3581 = vadd.f32 %v3567, %v3580
    %3582 = vdwg.mxu0
    %3583 = vmatpush.bf16.msra.mxu0 %v2382
    %3584 = vmatpush.bf16.msra.mxu0 %v2374
    %3585 = vmatpush.bf16.msra.mxu0 %v2366
    %3586 = vmatpush.bf16.msra.mxu0 %v2358
    %3587 = vmatpush.bf16.msra.mxu0 %v2350
    %3588 = vmatpush.bf16.msra.mxu0 %v2342
    %3589 = vmatpush.bf16.msra.mxu0 %v2334
    %3590 = vmatpush.bf16.msra.mxu0 %v2326
    %3591 = vmatmul.bf16.gmra.mxu0 %v645
    %v3592 = vpop.f32.mrf.mxu0
    %v3593 = vadd.f32 %v3579, %v3592
    %v3594 = vpop.f32.mrf.mxu0
    %v3595 = vadd.f32 %v3581, %v3594
    %3596 = vdwg.mxu0
    %3597 = vmatpush.bf16.msra.mxu0 %v2446
    %3598 = vmatpush.bf16.msra.mxu0 %v2438
    %3599 = vmatpush.bf16.msra.mxu0 %v2430
    %3600 = vmatpush.bf16.msra.mxu0 %v2422
    %3601 = vmatpush.bf16.msra.mxu0 %v2414
    %3602 = vmatpush.bf16.msra.mxu0 %v2406
    %3603 = vmatpush.bf16.msra.mxu0 %v2398
    %3604 = vmatpush.bf16.msra.mxu0 %v2390
    %3605 = vmatmul.bf16.gmra.mxu0 %v646
    %v3606 = vpop.f32.mrf.mxu0
    %v3607 = vadd.f32 %v3593, %v3606
    %v3608 = vpop.f32.mrf.mxu0
    %v3609 = vadd.f32 %v3595, %v3608
    %3610 = vdwg.mxu0
    %3611 = vmatpush.bf16.msra.mxu0 %v2510
    %3612 = vmatpush.bf16.msra.mxu0 %v2502
    %3613 = vmatpush.bf16.msra.mxu0 %v2494
    %3614 = vmatpush.bf16.msra.mxu0 %v2486
    %3615 = vmatpush.bf16.msra.mxu0 %v2478
    %3616 = vmatpush.bf16.msra.mxu0 %v2470
    %3617 = vmatpush.bf16.msra.mxu0 %v2462
    %3618 = vmatpush.bf16.msra.mxu0 %v2454
    %3619 = vmatmul.bf16.gmra.mxu0 %v647
    %v3620 = vpop.f32.mrf.mxu0
    %v3621 = vadd.f32 %v3607, %v3620
    %v3622 = vpop.f32.mrf.mxu0
    %v3623 = vadd.f32 %v3609, %v3622
    %3624 = vdwg.mxu0
    %3625 = vmatpush.bf16.msra.mxu0 %v2574
    %3626 = vmatpush.bf16.msra.mxu0 %v2566
    %3627 = vmatpush.bf16.msra.mxu0 %v2558
    %3628 = vmatpush.bf16.msra.mxu0 %v2550
    %3629 = vmatpush.bf16.msra.mxu0 %v2542
    %3630 = vmatpush.bf16.msra.mxu0 %v2534
    %3631 = vmatpush.bf16.msra.mxu0 %v2526
    %3632 = vmatpush.bf16.msra.mxu0 %v2518
    %3633 = vmatmul.bf16.gmra.mxu0 %v648
    %v3634 = vpop.f32.mrf.mxu0
    %v3635 = vadd.f32 %v3621, %v3634
    %v3636 = vpop.f32.mrf.mxu0
    %v3637 = vadd.f32 %v3623, %v3636
    %3638 = vdwg.mxu0
    %3639 = vmatpush.bf16.msra.mxu0 %v2638
    %3640 = vmatpush.bf16.msra.mxu0 %v2630
    %3641 = vmatpush.bf16.msra.mxu0 %v2622
    %3642 = vmatpush.bf16.msra.mxu0 %v2614
    %3643 = vmatpush.bf16.msra.mxu0 %v2606
    %3644 = vmatpush.bf16.msra.mxu0 %v2598
    %3645 = vmatpush.bf16.msra.mxu0 %v2590
    %3646 = vmatpush.bf16.msra.mxu0 %v2582
    %3647 = vmatmul.bf16.gmra.mxu0 %v649
    %v3648 = vpop.f32.mrf.mxu0
    %v3649 = vadd.f32 %v3635, %v3648
    %v3650 = vpop.f32.mrf.mxu0
    %v3651 = vadd.f32 %v3637, %v3650
    %3652 = vdwg.mxu0
    %3653 = vmatpush.bf16.msra.mxu0 %v2702
    %3654 = vmatpush.bf16.msra.mxu0 %v2694
    %3655 = vmatpush.bf16.msra.mxu0 %v2686
    %3656 = vmatpush.bf16.msra.mxu0 %v2678
    %3657 = vmatpush.bf16.msra.mxu0 %v2670
    %3658 = vmatpush.bf16.msra.mxu0 %v2662
    %3659 = vmatpush.bf16.msra.mxu0 %v2654
    %3660 = vmatpush.bf16.msra.mxu0 %v2646
    %3661 = vmatmul.bf16.gmra.mxu0 %v650
    %v3662 = vpop.f32.mrf.mxu0
    %v3663 = vadd.f32 %v3649, %v3662
    %v3664 = vpop.f32.mrf.mxu0
    %v3665 = vadd.f32 %v3651, %v3664
    %3666 = vdwg.mxu0
    %3667 = vmatpush.bf16.msra.mxu0 %v2255
    %3668 = vmatpush.bf16.msra.mxu0 %v2247
    %3669 = vmatpush.bf16.msra.mxu0 %v2239
    %3670 = vmatpush.bf16.msra.mxu0 %v2231
    %3671 = vmatpush.bf16.msra.mxu0 %v2223
    %3672 = vmatpush.bf16.msra.mxu0 %v2215
    %3673 = vmatpush.bf16.msra.mxu0 %v2207
    %3674 = vmatpush.bf16.msra.mxu0 %v2199
    %3675 = vmatmul.bf16.gmra.mxu0 %v643
    %v3676 = vpop.f32.mrf.mxu0
    %v3677 = vadd.f32 %v607, %v3676
    %v3678 = vpop.f32.mrf.mxu0
    %v3679 = vadd.f32 %v607, %v3678
    %3680 = vdwg.mxu0
    %3681 = vmatpush.bf16.msra.mxu0 %v2319
    %3682 = vmatpush.bf16.msra.mxu0 %v2311
    %3683 = vmatpush.bf16.msra.mxu0 %v2303
    %3684 = vmatpush.bf16.msra.mxu0 %v2295
    %3685 = vmatpush.bf16.msra.mxu0 %v2287
    %3686 = vmatpush.bf16.msra.mxu0 %v2279
    %3687 = vmatpush.bf16.msra.mxu0 %v2271
    %3688 = vmatpush.bf16.msra.mxu0 %v2263
    %3689 = vmatmul.bf16.gmra.mxu0 %v644
    %v3690 = vpop.f32.mrf.mxu0
    %v3691 = vadd.f32 %v3677, %v3690
    %v3692 = vpop.f32.mrf.mxu0
    %v3693 = vadd.f32 %v3679, %v3692
    %3694 = vdwg.mxu0
    %3695 = vmatpush.bf16.msra.mxu0 %v2383
    %3696 = vmatpush.bf16.msra.mxu0 %v2375
    %3697 = vmatpush.bf16.msra.mxu0 %v2367
    %3698 = vmatpush.bf16.msra.mxu0 %v2359
    %3699 = vmatpush.bf16.msra.mxu0 %v2351
    %3700 = vmatpush.bf16.msra.mxu0 %v2343
    %3701 = vmatpush.bf16.msra.mxu0 %v2335
    %3702 = vmatpush.bf16.msra.mxu0 %v2327
    %3703 = vmatmul.bf16.gmra.mxu0 %v645
    %v3704 = vpop.f32.mrf.mxu0
    %v3705 = vadd.f32 %v3691, %v3704
    %v3706 = vpop.f32.mrf.mxu0
    %v3707 = vadd.f32 %v3693, %v3706
    %3708 = vdwg.mxu0
    %3709 = vmatpush.bf16.msra.mxu0 %v2447
    %3710 = vmatpush.bf16.msra.mxu0 %v2439
    %3711 = vmatpush.bf16.msra.mxu0 %v2431
    %3712 = vmatpush.bf16.msra.mxu0 %v2423
    %3713 = vmatpush.bf16.msra.mxu0 %v2415
    %3714 = vmatpush.bf16.msra.mxu0 %v2407
    %3715 = vmatpush.bf16.msra.mxu0 %v2399
    %3716 = vmatpush.bf16.msra.mxu0 %v2391
    %3717 = vmatmul.bf16.gmra.mxu0 %v646
    %v3718 = vpop.f32.mrf.mxu0
    %v3719 = vadd.f32 %v3705, %v3718
    %v3720 = vpop.f32.mrf.mxu0
    %v3721 = vadd.f32 %v3707, %v3720
    %3722 = vdwg.mxu0
    %3723 = vmatpush.bf16.msra.mxu0 %v2511
    %3724 = vmatpush.bf16.msra.mxu0 %v2503
    %3725 = vmatpush.bf16.msra.mxu0 %v2495
    %3726 = vmatpush.bf16.msra.mxu0 %v2487
    %3727 = vmatpush.bf16.msra.mxu0 %v2479
    %3728 = vmatpush.bf16.msra.mxu0 %v2471
    %3729 = vmatpush.bf16.msra.mxu0 %v2463
    %3730 = vmatpush.bf16.msra.mxu0 %v2455
    %3731 = vmatmul.bf16.gmra.mxu0 %v647
    %v3732 = vpop.f32.mrf.mxu0
    %v3733 = vadd.f32 %v3719, %v3732
    %v3734 = vpop.f32.mrf.mxu0
    %v3735 = vadd.f32 %v3721, %v3734
    %3736 = vdwg.mxu0
    %3737 = vmatpush.bf16.msra.mxu0 %v2575
    %3738 = vmatpush.bf16.msra.mxu0 %v2567
    %3739 = vmatpush.bf16.msra.mxu0 %v2559
    %3740 = vmatpush.bf16.msra.mxu0 %v2551
    %3741 = vmatpush.bf16.msra.mxu0 %v2543
    %3742 = vmatpush.bf16.msra.mxu0 %v2535
    %3743 = vmatpush.bf16.msra.mxu0 %v2527
    %3744 = vmatpush.bf16.msra.mxu0 %v2519
    %3745 = vmatmul.bf16.gmra.mxu0 %v648
    %v3746 = vpop.f32.mrf.mxu0
    %v3747 = vadd.f32 %v3733, %v3746
    %v3748 = vpop.f32.mrf.mxu0
    %v3749 = vadd.f32 %v3735, %v3748
    %3750 = vdwg.mxu0
    %3751 = vmatpush.bf16.msra.mxu0 %v2639
    %3752 = vmatpush.bf16.msra.mxu0 %v2631
    %3753 = vmatpush.bf16.msra.mxu0 %v2623
    %3754 = vmatpush.bf16.msra.mxu0 %v2615
    %3755 = vmatpush.bf16.msra.mxu0 %v2607
    %3756 = vmatpush.bf16.msra.mxu0 %v2599
    %3757 = vmatpush.bf16.msra.mxu0 %v2591
    %3758 = vmatpush.bf16.msra.mxu0 %v2583
    %3759 = vmatmul.bf16.gmra.mxu0 %v649
    %v3760 = vpop.f32.mrf.mxu0
    %v3761 = vadd.f32 %v3747, %v3760
    %v3762 = vpop.f32.mrf.mxu0
    %v3763 = vadd.f32 %v3749, %v3762
    %3764 = vdwg.mxu0
    %3765 = vmatpush.bf16.msra.mxu0 %v2703
    %3766 = vmatpush.bf16.msra.mxu0 %v2695
    %3767 = vmatpush.bf16.msra.mxu0 %v2687
    %3768 = vmatpush.bf16.msra.mxu0 %v2679
    %3769 = vmatpush.bf16.msra.mxu0 %v2671
    %3770 = vmatpush.bf16.msra.mxu0 %v2663
    %3771 = vmatpush.bf16.msra.mxu0 %v2655
    %3772 = vmatpush.bf16.msra.mxu0 %v2647
    %3773 = vmatmul.bf16.gmra.mxu0 %v650
    %v3774 = vpop.f32.mrf.mxu0
    %v3775 = vadd.f32 %v3761, %v3774
    %v3776 = vpop.f32.mrf.mxu0
    %v3777 = vadd.f32 %v3763, %v3776
    %3778 = vdwg.mxu0
    %3779 = vmatpush.bf16.msra.mxu0 %v2256
    %3780 = vmatpush.bf16.msra.mxu0 %v2248
    %3781 = vmatpush.bf16.msra.mxu0 %v2240
    %3782 = vmatpush.bf16.msra.mxu0 %v2232
    %3783 = vmatpush.bf16.msra.mxu0 %v2224
    %3784 = vmatpush.bf16.msra.mxu0 %v2216
    %3785 = vmatpush.bf16.msra.mxu0 %v2208
    %3786 = vmatpush.bf16.msra.mxu0 %v2200
    %3787 = vmatmul.bf16.gmra.mxu0 %v643
    %v3788 = vpop.f32.mrf.mxu0
    %v3789 = vadd.f32 %v608, %v3788
    %v3790 = vpop.f32.mrf.mxu0
    %v3791 = vadd.f32 %v608, %v3790
    %3792 = vdwg.mxu0
    %3793 = vmatpush.bf16.msra.mxu0 %v2320
    %3794 = vmatpush.bf16.msra.mxu0 %v2312
    %3795 = vmatpush.bf16.msra.mxu0 %v2304
    %3796 = vmatpush.bf16.msra.mxu0 %v2296
    %3797 = vmatpush.bf16.msra.mxu0 %v2288
    %3798 = vmatpush.bf16.msra.mxu0 %v2280
    %3799 = vmatpush.bf16.msra.mxu0 %v2272
    %3800 = vmatpush.bf16.msra.mxu0 %v2264
    %3801 = vmatmul.bf16.gmra.mxu0 %v644
    %v3802 = vpop.f32.mrf.mxu0
    %v3803 = vadd.f32 %v3789, %v3802
    %v3804 = vpop.f32.mrf.mxu0
    %v3805 = vadd.f32 %v3791, %v3804
    %3806 = vdwg.mxu0
    %3807 = vmatpush.bf16.msra.mxu0 %v2384
    %3808 = vmatpush.bf16.msra.mxu0 %v2376
    %3809 = vmatpush.bf16.msra.mxu0 %v2368
    %3810 = vmatpush.bf16.msra.mxu0 %v2360
    %3811 = vmatpush.bf16.msra.mxu0 %v2352
    %3812 = vmatpush.bf16.msra.mxu0 %v2344
    %3813 = vmatpush.bf16.msra.mxu0 %v2336
    %3814 = vmatpush.bf16.msra.mxu0 %v2328
    %3815 = vmatmul.bf16.gmra.mxu0 %v645
    %v3816 = vpop.f32.mrf.mxu0
    %v3817 = vadd.f32 %v3803, %v3816
    %v3818 = vpop.f32.mrf.mxu0
    %v3819 = vadd.f32 %v3805, %v3818
    %3820 = vdwg.mxu0
    %3821 = vmatpush.bf16.msra.mxu0 %v2448
    %3822 = vmatpush.bf16.msra.mxu0 %v2440
    %3823 = vmatpush.bf16.msra.mxu0 %v2432
    %3824 = vmatpush.bf16.msra.mxu0 %v2424
    %3825 = vmatpush.bf16.msra.mxu0 %v2416
    %3826 = vmatpush.bf16.msra.mxu0 %v2408
    %3827 = vmatpush.bf16.msra.mxu0 %v2400
    %3828 = vmatpush.bf16.msra.mxu0 %v2392
    %3829 = vmatmul.bf16.gmra.mxu0 %v646
    %v3830 = vpop.f32.mrf.mxu0
    %v3831 = vadd.f32 %v3817, %v3830
    %v3832 = vpop.f32.mrf.mxu0
    %v3833 = vadd.f32 %v3819, %v3832
    %3834 = vdwg.mxu0
    %3835 = vmatpush.bf16.msra.mxu0 %v2512
    %3836 = vmatpush.bf16.msra.mxu0 %v2504
    %3837 = vmatpush.bf16.msra.mxu0 %v2496
    %3838 = vmatpush.bf16.msra.mxu0 %v2488
    %3839 = vmatpush.bf16.msra.mxu0 %v2480
    %3840 = vmatpush.bf16.msra.mxu0 %v2472
    %3841 = vmatpush.bf16.msra.mxu0 %v2464
    %3842 = vmatpush.bf16.msra.mxu0 %v2456
    %3843 = vmatmul.bf16.gmra.mxu0 %v647
    %v3844 = vpop.f32.mrf.mxu0
    %v3845 = vadd.f32 %v3831, %v3844
    %v3846 = vpop.f32.mrf.mxu0
    %v3847 = vadd.f32 %v3833, %v3846
    %3848 = vdwg.mxu0
    %3849 = vmatpush.bf16.msra.mxu0 %v2576
    %3850 = vmatpush.bf16.msra.mxu0 %v2568
    %3851 = vmatpush.bf16.msra.mxu0 %v2560
    %3852 = vmatpush.bf16.msra.mxu0 %v2552
    %3853 = vmatpush.bf16.msra.mxu0 %v2544
    %3854 = vmatpush.bf16.msra.mxu0 %v2536
    %3855 = vmatpush.bf16.msra.mxu0 %v2528
    %3856 = vmatpush.bf16.msra.mxu0 %v2520
    %3857 = vmatmul.bf16.gmra.mxu0 %v648
    %v3858 = vpop.f32.mrf.mxu0
    %v3859 = vadd.f32 %v3845, %v3858
    %v3860 = vpop.f32.mrf.mxu0
    %v3861 = vadd.f32 %v3847, %v3860
    %3862 = vdwg.mxu0
    %3863 = vmatpush.bf16.msra.mxu0 %v2640
    %3864 = vmatpush.bf16.msra.mxu0 %v2632
    %3865 = vmatpush.bf16.msra.mxu0 %v2624
    %3866 = vmatpush.bf16.msra.mxu0 %v2616
    %3867 = vmatpush.bf16.msra.mxu0 %v2608
    %3868 = vmatpush.bf16.msra.mxu0 %v2600
    %3869 = vmatpush.bf16.msra.mxu0 %v2592
    %3870 = vmatpush.bf16.msra.mxu0 %v2584
    %3871 = vmatmul.bf16.gmra.mxu0 %v649
    %v3872 = vpop.f32.mrf.mxu0
    %v3873 = vadd.f32 %v3859, %v3872
    %v3874 = vpop.f32.mrf.mxu0
    %v3875 = vadd.f32 %v3861, %v3874
    %3876 = vdwg.mxu0
    %3877 = vmatpush.bf16.msra.mxu0 %v2704
    %3878 = vmatpush.bf16.msra.mxu0 %v2696
    %3879 = vmatpush.bf16.msra.mxu0 %v2688
    %3880 = vmatpush.bf16.msra.mxu0 %v2680
    %3881 = vmatpush.bf16.msra.mxu0 %v2672
    %3882 = vmatpush.bf16.msra.mxu0 %v2664
    %3883 = vmatpush.bf16.msra.mxu0 %v2656
    %3884 = vmatpush.bf16.msra.mxu0 %v2648
    %3885 = vmatmul.bf16.gmra.mxu0 %v650
    %v3886 = vpop.f32.mrf.mxu0
    %v3887 = vadd.f32 %v3873, %v3886
    %v3888 = vpop.f32.mrf.mxu0
    %v3889 = vadd.f32 %v3875, %v3888
    %3890 = vdwg.mxu0
    %3891 = vmatpush.bf16.msra.mxu0 %v2257
    %3892 = vmatpush.bf16.msra.mxu0 %v2249
    %3893 = vmatpush.bf16.msra.mxu0 %v2241
    %3894 = vmatpush.bf16.msra.mxu0 %v2233
    %3895 = vmatpush.bf16.msra.mxu0 %v2225
    %3896 = vmatpush.bf16.msra.mxu0 %v2217
    %3897 = vmatpush.bf16.msra.mxu0 %v2209
    %3898 = vmatpush.bf16.msra.mxu0 %v2201
    %3899 = vmatmul.bf16.gmra.mxu0 %v643
    %v3900 = vpop.f32.mrf.mxu0
    %v3901 = vadd.f32 %v609, %v3900
    %v3902 = vpop.f32.mrf.mxu0
    %v3903 = vadd.f32 %v609, %v3902
    %3904 = vdwg.mxu0
    %3905 = vmatpush.bf16.msra.mxu0 %v2321
    %3906 = vmatpush.bf16.msra.mxu0 %v2313
    %3907 = vmatpush.bf16.msra.mxu0 %v2305
    %3908 = vmatpush.bf16.msra.mxu0 %v2297
    %3909 = vmatpush.bf16.msra.mxu0 %v2289
    %3910 = vmatpush.bf16.msra.mxu0 %v2281
    %3911 = vmatpush.bf16.msra.mxu0 %v2273
    %3912 = vmatpush.bf16.msra.mxu0 %v2265
    %3913 = vmatmul.bf16.gmra.mxu0 %v644
    %v3914 = vpop.f32.mrf.mxu0
    %v3915 = vadd.f32 %v3901, %v3914
    %v3916 = vpop.f32.mrf.mxu0
    %v3917 = vadd.f32 %v3903, %v3916
    %3918 = vdwg.mxu0
    %3919 = vmatpush.bf16.msra.mxu0 %v2385
    %3920 = vmatpush.bf16.msra.mxu0 %v2377
    %3921 = vmatpush.bf16.msra.mxu0 %v2369
    %3922 = vmatpush.bf16.msra.mxu0 %v2361
    %3923 = vmatpush.bf16.msra.mxu0 %v2353
    %3924 = vmatpush.bf16.msra.mxu0 %v2345
    %3925 = vmatpush.bf16.msra.mxu0 %v2337
    %3926 = vmatpush.bf16.msra.mxu0 %v2329
    %3927 = vmatmul.bf16.gmra.mxu0 %v645
    %v3928 = vpop.f32.mrf.mxu0
    %v3929 = vadd.f32 %v3915, %v3928
    %v3930 = vpop.f32.mrf.mxu0
    %v3931 = vadd.f32 %v3917, %v3930
    %3932 = vdwg.mxu0
    %3933 = vmatpush.bf16.msra.mxu0 %v2449
    %3934 = vmatpush.bf16.msra.mxu0 %v2441
    %3935 = vmatpush.bf16.msra.mxu0 %v2433
    %3936 = vmatpush.bf16.msra.mxu0 %v2425
    %3937 = vmatpush.bf16.msra.mxu0 %v2417
    %3938 = vmatpush.bf16.msra.mxu0 %v2409
    %3939 = vmatpush.bf16.msra.mxu0 %v2401
    %3940 = vmatpush.bf16.msra.mxu0 %v2393
    %3941 = vmatmul.bf16.gmra.mxu0 %v646
    %v3942 = vpop.f32.mrf.mxu0
    %v3943 = vadd.f32 %v3929, %v3942
    %v3944 = vpop.f32.mrf.mxu0
    %v3945 = vadd.f32 %v3931, %v3944
    %3946 = vdwg.mxu0
    %3947 = vmatpush.bf16.msra.mxu0 %v2513
    %3948 = vmatpush.bf16.msra.mxu0 %v2505
    %3949 = vmatpush.bf16.msra.mxu0 %v2497
    %3950 = vmatpush.bf16.msra.mxu0 %v2489
    %3951 = vmatpush.bf16.msra.mxu0 %v2481
    %3952 = vmatpush.bf16.msra.mxu0 %v2473
    %3953 = vmatpush.bf16.msra.mxu0 %v2465
    %3954 = vmatpush.bf16.msra.mxu0 %v2457
    %3955 = vmatmul.bf16.gmra.mxu0 %v647
    %v3956 = vpop.f32.mrf.mxu0
    %v3957 = vadd.f32 %v3943, %v3956
    %v3958 = vpop.f32.mrf.mxu0
    %v3959 = vadd.f32 %v3945, %v3958
    %3960 = vdwg.mxu0
    %3961 = vmatpush.bf16.msra.mxu0 %v2577
    %3962 = vmatpush.bf16.msra.mxu0 %v2569
    %3963 = vmatpush.bf16.msra.mxu0 %v2561
    %3964 = vmatpush.bf16.msra.mxu0 %v2553
    %3965 = vmatpush.bf16.msra.mxu0 %v2545
    %3966 = vmatpush.bf16.msra.mxu0 %v2537
    %3967 = vmatpush.bf16.msra.mxu0 %v2529
    %3968 = vmatpush.bf16.msra.mxu0 %v2521
    %3969 = vmatmul.bf16.gmra.mxu0 %v648
    %v3970 = vpop.f32.mrf.mxu0
    %v3971 = vadd.f32 %v3957, %v3970
    %v3972 = vpop.f32.mrf.mxu0
    %v3973 = vadd.f32 %v3959, %v3972
    %3974 = vdwg.mxu0
    %3975 = vmatpush.bf16.msra.mxu0 %v2641
    %3976 = vmatpush.bf16.msra.mxu0 %v2633
    %3977 = vmatpush.bf16.msra.mxu0 %v2625
    %3978 = vmatpush.bf16.msra.mxu0 %v2617
    %3979 = vmatpush.bf16.msra.mxu0 %v2609
    %3980 = vmatpush.bf16.msra.mxu0 %v2601
    %3981 = vmatpush.bf16.msra.mxu0 %v2593
    %3982 = vmatpush.bf16.msra.mxu0 %v2585
    %3983 = vmatmul.bf16.gmra.mxu0 %v649
    %v3984 = vpop.f32.mrf.mxu0
    %v3985 = vadd.f32 %v3971, %v3984
    %v3986 = vpop.f32.mrf.mxu0
    %v3987 = vadd.f32 %v3973, %v3986
    %3988 = vdwg.mxu0
    %3989 = vmatpush.bf16.msra.mxu0 %v2705
    %3990 = vmatpush.bf16.msra.mxu0 %v2697
    %3991 = vmatpush.bf16.msra.mxu0 %v2689
    %3992 = vmatpush.bf16.msra.mxu0 %v2681
    %3993 = vmatpush.bf16.msra.mxu0 %v2673
    %3994 = vmatpush.bf16.msra.mxu0 %v2665
    %3995 = vmatpush.bf16.msra.mxu0 %v2657
    %3996 = vmatpush.bf16.msra.mxu0 %v2649
    %3997 = vmatmul.bf16.gmra.mxu0 %v650
    %v3998 = vpop.f32.mrf.mxu0
    %v3999 = vadd.f32 %v3985, %v3998
    %v4000 = vpop.f32.mrf.mxu0
    %v4001 = vadd.f32 %v3987, %v4000
    %4002 = vdwg.mxu0
    %4003 = vmatpush.bf16.msra.mxu0 %v2258
    %4004 = vmatpush.bf16.msra.mxu0 %v2250
    %4005 = vmatpush.bf16.msra.mxu0 %v2242
    %4006 = vmatpush.bf16.msra.mxu0 %v2234
    %4007 = vmatpush.bf16.msra.mxu0 %v2226
    %4008 = vmatpush.bf16.msra.mxu0 %v2218
    %4009 = vmatpush.bf16.msra.mxu0 %v2210
    %4010 = vmatpush.bf16.msra.mxu0 %v2202
    %4011 = vmatmul.bf16.gmra.mxu0 %v643
    %v4012 = vpop.f32.mrf.mxu0
    %v4013 = vadd.f32 %v610, %v4012
    %v4014 = vpop.f32.mrf.mxu0
    %v4015 = vadd.f32 %v610, %v4014
    %4016 = vdwg.mxu0
    %4017 = vmatpush.bf16.msra.mxu0 %v2322
    %4018 = vmatpush.bf16.msra.mxu0 %v2314
    %4019 = vmatpush.bf16.msra.mxu0 %v2306
    %4020 = vmatpush.bf16.msra.mxu0 %v2298
    %4021 = vmatpush.bf16.msra.mxu0 %v2290
    %4022 = vmatpush.bf16.msra.mxu0 %v2282
    %4023 = vmatpush.bf16.msra.mxu0 %v2274
    %4024 = vmatpush.bf16.msra.mxu0 %v2266
    %4025 = vmatmul.bf16.gmra.mxu0 %v644
    %v4026 = vpop.f32.mrf.mxu0
    %v4027 = vadd.f32 %v4013, %v4026
    %v4028 = vpop.f32.mrf.mxu0
    %v4029 = vadd.f32 %v4015, %v4028
    %4030 = vdwg.mxu0
    %4031 = vmatpush.bf16.msra.mxu0 %v2386
    %4032 = vmatpush.bf16.msra.mxu0 %v2378
    %4033 = vmatpush.bf16.msra.mxu0 %v2370
    %4034 = vmatpush.bf16.msra.mxu0 %v2362
    %4035 = vmatpush.bf16.msra.mxu0 %v2354
    %4036 = vmatpush.bf16.msra.mxu0 %v2346
    %4037 = vmatpush.bf16.msra.mxu0 %v2338
    %4038 = vmatpush.bf16.msra.mxu0 %v2330
    %4039 = vmatmul.bf16.gmra.mxu0 %v645
    %v4040 = vpop.f32.mrf.mxu0
    %v4041 = vadd.f32 %v4027, %v4040
    %v4042 = vpop.f32.mrf.mxu0
    %v4043 = vadd.f32 %v4029, %v4042
    %4044 = vdwg.mxu0
    %4045 = vmatpush.bf16.msra.mxu0 %v2450
    %4046 = vmatpush.bf16.msra.mxu0 %v2442
    %4047 = vmatpush.bf16.msra.mxu0 %v2434
    %4048 = vmatpush.bf16.msra.mxu0 %v2426
    %4049 = vmatpush.bf16.msra.mxu0 %v2418
    %4050 = vmatpush.bf16.msra.mxu0 %v2410
    %4051 = vmatpush.bf16.msra.mxu0 %v2402
    %4052 = vmatpush.bf16.msra.mxu0 %v2394
    %4053 = vmatmul.bf16.gmra.mxu0 %v646
    %v4054 = vpop.f32.mrf.mxu0
    %v4055 = vadd.f32 %v4041, %v4054
    %v4056 = vpop.f32.mrf.mxu0
    %v4057 = vadd.f32 %v4043, %v4056
    %4058 = vdwg.mxu0
    %4059 = vmatpush.bf16.msra.mxu0 %v2514
    %4060 = vmatpush.bf16.msra.mxu0 %v2506
    %4061 = vmatpush.bf16.msra.mxu0 %v2498
    %4062 = vmatpush.bf16.msra.mxu0 %v2490
    %4063 = vmatpush.bf16.msra.mxu0 %v2482
    %4064 = vmatpush.bf16.msra.mxu0 %v2474
    %4065 = vmatpush.bf16.msra.mxu0 %v2466
    %4066 = vmatpush.bf16.msra.mxu0 %v2458
    %4067 = vmatmul.bf16.gmra.mxu0 %v647
    %v4068 = vpop.f32.mrf.mxu0
    %v4069 = vadd.f32 %v4055, %v4068
    %v4070 = vpop.f32.mrf.mxu0
    %v4071 = vadd.f32 %v4057, %v4070
    %4072 = vdwg.mxu0
    %4073 = vmatpush.bf16.msra.mxu0 %v2578
    %4074 = vmatpush.bf16.msra.mxu0 %v2570
    %4075 = vmatpush.bf16.msra.mxu0 %v2562
    %4076 = vmatpush.bf16.msra.mxu0 %v2554
    %4077 = vmatpush.bf16.msra.mxu0 %v2546
    %4078 = vmatpush.bf16.msra.mxu0 %v2538
    %4079 = vmatpush.bf16.msra.mxu0 %v2530
    %4080 = vmatpush.bf16.msra.mxu0 %v2522
    %4081 = vmatmul.bf16.gmra.mxu0 %v648
    %v4082 = vpop.f32.mrf.mxu0
    %v4083 = vadd.f32 %v4069, %v4082
    %v4084 = vpop.f32.mrf.mxu0
    %v4085 = vadd.f32 %v4071, %v4084
    %4086 = vdwg.mxu0
    %4087 = vmatpush.bf16.msra.mxu0 %v2642
    %4088 = vmatpush.bf16.msra.mxu0 %v2634
    %4089 = vmatpush.bf16.msra.mxu0 %v2626
    %4090 = vmatpush.bf16.msra.mxu0 %v2618
    %4091 = vmatpush.bf16.msra.mxu0 %v2610
    %4092 = vmatpush.bf16.msra.mxu0 %v2602
    %4093 = vmatpush.bf16.msra.mxu0 %v2594
    %4094 = vmatpush.bf16.msra.mxu0 %v2586
    %4095 = vmatmul.bf16.gmra.mxu0 %v649
    %v4096 = vpop.f32.mrf.mxu0
    %v4097 = vadd.f32 %v4083, %v4096
    %v4098 = vpop.f32.mrf.mxu0
    %v4099 = vadd.f32 %v4085, %v4098
    %4100 = vdwg.mxu0
    %4101 = vmatpush.bf16.msra.mxu0 %v2706
    %4102 = vmatpush.bf16.msra.mxu0 %v2698
    %4103 = vmatpush.bf16.msra.mxu0 %v2690
    %4104 = vmatpush.bf16.msra.mxu0 %v2682
    %4105 = vmatpush.bf16.msra.mxu0 %v2674
    %4106 = vmatpush.bf16.msra.mxu0 %v2666
    %4107 = vmatpush.bf16.msra.mxu0 %v2658
    %4108 = vmatpush.bf16.msra.mxu0 %v2650
    %4109 = vmatmul.bf16.gmra.mxu0 %v650
    %v4110 = vpop.f32.mrf.mxu0
    %v4111 = vadd.f32 %v4097, %v4110
    %v4112 = vpop.f32.mrf.mxu0
    %v4113 = vadd.f32 %v4099, %v4112
    %4114 = vdwg.mxu0
    %v4115 = vmax.f32 %v3327, 0.0
    %v4116 = vmax.f32 %v3439, 0.0
    %v4117 = vmax.f32 %v3551, 0.0
    %v4118 = vmax.f32 %v3663, 0.0
    %v4119 = vmax.f32 %v3775, 0.0
    %v4120 = vmax.f32 %v3887, 0.0
    %v4121 = vmax.f32 %v3999, 0.0
    %v4122 = vmax.f32 %v4111, 0.0
    %v4123 = vmax.f32 %v3329, 0.0
    %v4124 = vmax.f32 %v3441, 0.0
    %v4125 = vmax.f32 %v3553, 0.0
    %v4126 = vmax.f32 %v3665, 0.0
    %v4127 = vmax.f32 %v3777, 0.0
    %v4128 = vmax.f32 %v3889, 0.0
    %v4129 = vmax.f32 %v4001, 0.0
    %v4130 = vmax.f32 %v4113, 0.0
    %4131 = vst [vmem:[%s6] sm:$0xff] %v4115
    %4132 = vst [vmem:[%s6 + $0x8] sm:$0xff] %v4116
    %4133 = vst [vmem:[%s6 + $0x10] sm:$0xff] %v4117
    %4134 = vst [vmem:[%s6 + $0x18] sm:$0xff] %v4118
    %4135 = vst [vmem:[%s6 + $0x20] sm:$0xff] %v4119
    %4136 = vst [vmem:[%s6 + $0x28] sm:$0xff] %v4120
    %4137 = vst [vmem:[%s6 + $0x30] sm:$0xff] %v4121
    %4138 = vst [vmem:[%s6 + $0x38] sm:$0xff] %v4122
    %4139 = vst [vmem:[%s6 + $0x40] sm:$0xff] %v4123
    %4140 = vst [vmem:[%s6 + $0x48] sm:$0xff] %v4124
    %4141 = vst [vmem:[%s6 + $0x50] sm:$0xff] %v4125
    %4142 = vst [vmem:[%s6 + $0x58] sm:$0xff] %v4126
    %4143 = vst [vmem:[%s6 + $0x60] sm:$0xff] %v4127
    %4144 = vst [vmem:[%s6 + $0x68] sm:$0xff] %v4128
    %4145 = vst [vmem:[%s6 + $0x70] sm:$0xff] %v4129
    %4146 = vst [vmem:[%s6 + $0x78] sm:$0xff] %v4130
    %v4147 = vpack.c.bf16 %v4123, %v4115
    %v4148 = vpack.c.bf16 %v4124, %v4116
    %v4149 = vpack.c.bf16 %v4125, %v4117
    %v4150 = vpack.c.bf16 %v4126, %v4118
    %v4151 = vpack.c.bf16 %v4127, %v4119
    %v4152 = vpack.c.bf16 %v4128, %v4120
    %v4153 = vpack.c.bf16 %v4129, %v4121
    %v4154 = vpack.c.bf16 %v4130, %v4122
    %v4155 = vld [vmem:[#allocation6] sm:$0xf]
    %v4156 = vld [vmem:[#allocation6 + $0x4] sm:$0xf]
    %v4157 = vld [vmem:[#allocation6 + $0x8] sm:$0xf]
    %v4158 = vld [vmem:[#allocation6 + $0xc] sm:$0xf]
    %v4159 = vld [vmem:[#allocation6 + $0x10] sm:$0xf]
    %v4160 = vld [vmem:[#allocation6 + $0x14] sm:$0xf]
    %v4161 = vld [vmem:[#allocation6 + $0x18] sm:$0xf]
    %v4162 = vld [vmem:[#allocation6 + $0x1c] sm:$0xf]
    %v4163 = vld [vmem:[#allocation6 + $0x20] sm:$0xf]
    %v4164 = vld [vmem:[#allocation6 + $0x24] sm:$0xf]
    %v4165 = vld [vmem:[#allocation6 + $0x28] sm:$0xf]
    %v4166 = vld [vmem:[#allocation6 + $0x2c] sm:$0xf]
    %v4167 = vld [vmem:[#allocation6 + $0x30] sm:$0xf]
    %v4168 = vld [vmem:[#allocation6 + $0x34] sm:$0xf]
    %v4169 = vld [vmem:[#allocation6 + $0x38] sm:$0xf]
    %v4170 = vld [vmem:[#allocation6 + $0x3c] sm:$0xf]
    %v4171 = vld [vmem:[#allocation6 + $0x40] sm:$0xf]
    %v4172 = vld [vmem:[#allocation6 + $0x44] sm:$0xf]
    %v4173 = vld [vmem:[#allocation6 + $0x48] sm:$0xf]
    %v4174 = vld [vmem:[#allocation6 + $0x4c] sm:$0xf]
    %v4175 = vld [vmem:[#allocation6 + $0x50] sm:$0xf]
    %v4176 = vld [vmem:[#allocation6 + $0x54] sm:$0xf]
    %v4177 = vld [vmem:[#allocation6 + $0x58] sm:$0xf]
    %v4178 = vld [vmem:[#allocation6 + $0x5c] sm:$0xf]
    %v4179 = vld [vmem:[#allocation6 + $0x60] sm:$0xf]
    %v4180 = vld [vmem:[#allocation6 + $0x64] sm:$0xf]
    %v4181 = vld [vmem:[#allocation6 + $0x68] sm:$0xf]
    %v4182 = vld [vmem:[#allocation6 + $0x6c] sm:$0xf]
    %v4183 = vld [vmem:[#allocation6 + $0x70] sm:$0xf]
    %v4184 = vld [vmem:[#allocation6 + $0x74] sm:$0xf]
    %v4185 = vld [vmem:[#allocation6 + $0x78] sm:$0xf]
    %v4186 = vld [vmem:[#allocation6 + $0x7c] sm:$0xf]
    %v4187 = vld [vmem:[#allocation6 + $0x80] sm:$0xf]
    %v4188 = vld [vmem:[#allocation6 + $0x84] sm:$0xf]
    %v4189 = vld [vmem:[#allocation6 + $0x88] sm:$0xf]
    %v4190 = vld [vmem:[#allocation6 + $0x8c] sm:$0xf]
    %v4191 = vld [vmem:[#allocation6 + $0x90] sm:$0xf]
    %v4192 = vld [vmem:[#allocation6 + $0x94] sm:$0xf]
    %v4193 = vld [vmem:[#allocation6 + $0x98] sm:$0xf]
    %v4194 = vld [vmem:[#allocation6 + $0x9c] sm:$0xf]
    %v4195 = vld [vmem:[#allocation6 + $0xa0] sm:$0xf]
    %v4196 = vld [vmem:[#allocation6 + $0xa4] sm:$0xf]
    %v4197 = vld [vmem:[#allocation6 + $0xa8] sm:$0xf]
    %v4198 = vld [vmem:[#allocation6 + $0xac] sm:$0xf]
    %v4199 = vld [vmem:[#allocation6 + $0xb0] sm:$0xf]
    %v4200 = vld [vmem:[#allocation6 + $0xb4] sm:$0xf]
    %v4201 = vld [vmem:[#allocation6 + $0xb8] sm:$0xf]
    %v4202 = vld [vmem:[#allocation6 + $0xbc] sm:$0xf]
    %v4203 = vld [vmem:[#allocation6 + $0xc0] sm:$0xf]
    %v4204 = vld [vmem:[#allocation6 + $0xc4] sm:$0xf]
    %v4205 = vld [vmem:[#allocation6 + $0xc8] sm:$0xf]
    %v4206 = vld [vmem:[#allocation6 + $0xcc] sm:$0xf]
    %v4207 = vld [vmem:[#allocation6 + $0xd0] sm:$0xf]
    %v4208 = vld [vmem:[#allocation6 + $0xd4] sm:$0xf]
    %v4209 = vld [vmem:[#allocation6 + $0xd8] sm:$0xf]
    %v4210 = vld [vmem:[#allocation6 + $0xdc] sm:$0xf]
    %v4211 = vld [vmem:[#allocation6 + $0xe0] sm:$0xf]
    %v4212 = vld [vmem:[#allocation6 + $0xe4] sm:$0xf]
    %v4213 = vld [vmem:[#allocation6 + $0xe8] sm:$0xf]
    %v4214 = vld [vmem:[#allocation6 + $0xec] sm:$0xf]
    %v4215 = vld [vmem:[#allocation6 + $0xf0] sm:$0xf]
    %v4216 = vld [vmem:[#allocation6 + $0xf4] sm:$0xf]
    %v4217 = vld [vmem:[#allocation6 + $0xf8] sm:$0xf]
    %v4218 = vld [vmem:[#allocation6 + $0xfc] sm:$0xf]
    %v4219 = vld [vmem:[#allocation6 + $0x100] sm:$0xf]
    %v4220 = vld [vmem:[#allocation6 + $0x104] sm:$0xf]
    %v4221 = vld [vmem:[#allocation6 + $0x108] sm:$0xf]
    %v4222 = vld [vmem:[#allocation6 + $0x10c] sm:$0xf]
    %v4223 = vld [vmem:[#allocation6 + $0x110] sm:$0xf]
    %v4224 = vld [vmem:[#allocation6 + $0x114] sm:$0xf]
    %v4225 = vld [vmem:[#allocation6 + $0x118] sm:$0xf]
    %v4226 = vld [vmem:[#allocation6 + $0x11c] sm:$0xf]
    %v4227 = vld [vmem:[#allocation6 + $0x120] sm:$0xf]
    %v4228 = vld [vmem:[#allocation6 + $0x124] sm:$0xf]
    %v4229 = vld [vmem:[#allocation6 + $0x128] sm:$0xf]
    %v4230 = vld [vmem:[#allocation6 + $0x12c] sm:$0xf]
    %v4231 = vld [vmem:[#allocation6 + $0x130] sm:$0xf]
    %v4232 = vld [vmem:[#allocation6 + $0x134] sm:$0xf]
    %v4233 = vld [vmem:[#allocation6 + $0x138] sm:$0xf]
    %v4234 = vld [vmem:[#allocation6 + $0x13c] sm:$0xf]
    %v4235 = vld [vmem:[#allocation6 + $0x140] sm:$0xf]
    %v4236 = vld [vmem:[#allocation6 + $0x144] sm:$0xf]
    %v4237 = vld [vmem:[#allocation6 + $0x148] sm:$0xf]
    %v4238 = vld [vmem:[#allocation6 + $0x14c] sm:$0xf]
    %v4239 = vld [vmem:[#allocation6 + $0x150] sm:$0xf]
    %v4240 = vld [vmem:[#allocation6 + $0x154] sm:$0xf]
    %v4241 = vld [vmem:[#allocation6 + $0x158] sm:$0xf]
    %v4242 = vld [vmem:[#allocation6 + $0x15c] sm:$0xf]
    %v4243 = vld [vmem:[#allocation6 + $0x160] sm:$0xf]
    %v4244 = vld [vmem:[#allocation6 + $0x164] sm:$0xf]
    %v4245 = vld [vmem:[#allocation6 + $0x168] sm:$0xf]
    %v4246 = vld [vmem:[#allocation6 + $0x16c] sm:$0xf]
    %v4247 = vld [vmem:[#allocation6 + $0x170] sm:$0xf]
    %v4248 = vld [vmem:[#allocation6 + $0x174] sm:$0xf]
    %v4249 = vld [vmem:[#allocation6 + $0x178] sm:$0xf]
    %v4250 = vld [vmem:[#allocation6 + $0x17c] sm:$0xf]
    %v4251 = vld [vmem:[#allocation6 + $0x180] sm:$0xf]
    %v4252 = vld [vmem:[#allocation6 + $0x184] sm:$0xf]
    %v4253 = vld [vmem:[#allocation6 + $0x188] sm:$0xf]
    %v4254 = vld [vmem:[#allocation6 + $0x18c] sm:$0xf]
    %v4255 = vld [vmem:[#allocation6 + $0x190] sm:$0xf]
    %v4256 = vld [vmem:[#allocation6 + $0x194] sm:$0xf]
    %v4257 = vld [vmem:[#allocation6 + $0x198] sm:$0xf]
    %v4258 = vld [vmem:[#allocation6 + $0x19c] sm:$0xf]
    %v4259 = vld [vmem:[#allocation6 + $0x1a0] sm:$0xf]
    %v4260 = vld [vmem:[#allocation6 + $0x1a4] sm:$0xf]
    %v4261 = vld [vmem:[#allocation6 + $0x1a8] sm:$0xf]
    %v4262 = vld [vmem:[#allocation6 + $0x1ac] sm:$0xf]
    %v4263 = vld [vmem:[#allocation6 + $0x1b0] sm:$0xf]
    %v4264 = vld [vmem:[#allocation6 + $0x1b4] sm:$0xf]
    %v4265 = vld [vmem:[#allocation6 + $0x1b8] sm:$0xf]
    %v4266 = vld [vmem:[#allocation6 + $0x1bc] sm:$0xf]
    %v4267 = vld [vmem:[#allocation6 + $0x1c0] sm:$0xf]
    %v4268 = vld [vmem:[#allocation6 + $0x1c4] sm:$0xf]
    %v4269 = vld [vmem:[#allocation6 + $0x1c8] sm:$0xf]
    %v4270 = vld [vmem:[#allocation6 + $0x1cc] sm:$0xf]
    %v4271 = vld [vmem:[#allocation6 + $0x1d0] sm:$0xf]
    %v4272 = vld [vmem:[#allocation6 + $0x1d4] sm:$0xf]
    %v4273 = vld [vmem:[#allocation6 + $0x1d8] sm:$0xf]
    %v4274 = vld [vmem:[#allocation6 + $0x1dc] sm:$0xf]
    %v4275 = vld [vmem:[#allocation6 + $0x1e0] sm:$0xf]
    %v4276 = vld [vmem:[#allocation6 + $0x1e4] sm:$0xf]
    %v4277 = vld [vmem:[#allocation6 + $0x1e8] sm:$0xf]
    %v4278 = vld [vmem:[#allocation6 + $0x1ec] sm:$0xf]
    %v4279 = vld [vmem:[#allocation6 + $0x1f0] sm:$0xf]
    %v4280 = vld [vmem:[#allocation6 + $0x1f4] sm:$0xf]
    %v4281 = vld [vmem:[#allocation6 + $0x1f8] sm:$0xf]
    %v4282 = vld [vmem:[#allocation6 + $0x1fc] sm:$0xf]
    %v4283 = vld [vmem:[#allocation7] sm:$0x1]
    %v4285 = vperm.slane %v4283, 0
    %v4415 = vunpack.c.l.b16 %v4155
    %v4416 = vunpack.c.l.b16 %v4156
    %v4417 = vunpack.c.l.b16 %v4157
    %v4418 = vunpack.c.l.b16 %v4158
    %v4419 = vunpack.c.l.b16 %v4159
    %v4420 = vunpack.c.l.b16 %v4160
    %v4421 = vunpack.c.l.b16 %v4161
    %v4422 = vunpack.c.l.b16 %v4162
    %v4423 = vunpack.c.l.b16 %v4163
    %v4424 = vunpack.c.l.b16 %v4164
    %v4425 = vunpack.c.l.b16 %v4165
    %v4426 = vunpack.c.l.b16 %v4166
    %v4427 = vunpack.c.l.b16 %v4167
    %v4428 = vunpack.c.l.b16 %v4168
    %v4429 = vunpack.c.l.b16 %v4169
    %v4430 = vunpack.c.l.b16 %v4170
    %v4431 = vunpack.c.l.b16 %v4171
    %v4432 = vunpack.c.l.b16 %v4172
    %v4433 = vunpack.c.l.b16 %v4173
    %v4434 = vunpack.c.l.b16 %v4174
    %v4435 = vunpack.c.l.b16 %v4175
    %v4436 = vunpack.c.l.b16 %v4176
    %v4437 = vunpack.c.l.b16 %v4177
    %v4438 = vunpack.c.l.b16 %v4178
    %v4439 = vunpack.c.l.b16 %v4179
    %v4440 = vunpack.c.l.b16 %v4180
    %v4441 = vunpack.c.l.b16 %v4181
    %v4442 = vunpack.c.l.b16 %v4182
    %v4443 = vunpack.c.l.b16 %v4183
    %v4444 = vunpack.c.l.b16 %v4184
    %v4445 = vunpack.c.l.b16 %v4185
    %v4446 = vunpack.c.l.b16 %v4186
    %v4447 = vunpack.c.l.b16 %v4187
    %v4448 = vunpack.c.l.b16 %v4188
    %v4449 = vunpack.c.l.b16 %v4189
    %v4450 = vunpack.c.l.b16 %v4190
    %v4451 = vunpack.c.l.b16 %v4191
    %v4452 = vunpack.c.l.b16 %v4192
    %v4453 = vunpack.c.l.b16 %v4193
    %v4454 = vunpack.c.l.b16 %v4194
    %v4455 = vunpack.c.l.b16 %v4195
    %v4456 = vunpack.c.l.b16 %v4196
    %v4457 = vunpack.c.l.b16 %v4197
    %v4458 = vunpack.c.l.b16 %v4198
    %v4459 = vunpack.c.l.b16 %v4199
    %v4460 = vunpack.c.l.b16 %v4200
    %v4461 = vunpack.c.l.b16 %v4201
    %v4462 = vunpack.c.l.b16 %v4202
    %v4463 = vunpack.c.l.b16 %v4203
    %v4464 = vunpack.c.l.b16 %v4204
    %v4465 = vunpack.c.l.b16 %v4205
    %v4466 = vunpack.c.l.b16 %v4206
    %v4467 = vunpack.c.l.b16 %v4207
    %v4468 = vunpack.c.l.b16 %v4208
    %v4469 = vunpack.c.l.b16 %v4209
    %v4470 = vunpack.c.l.b16 %v4210
    %v4471 = vunpack.c.l.b16 %v4211
    %v4472 = vunpack.c.l.b16 %v4212
    %v4473 = vunpack.c.l.b16 %v4213
    %v4474 = vunpack.c.l.b16 %v4214
    %v4475 = vunpack.c.l.b16 %v4215
    %v4476 = vunpack.c.l.b16 %v4216
    %v4477 = vunpack.c.l.b16 %v4217
    %v4478 = vunpack.c.l.b16 %v4218
    %v4479 = vunpack.c.l.b16 %v4219
    %v4480 = vunpack.c.l.b16 %v4220
    %v4481 = vunpack.c.l.b16 %v4221
    %v4482 = vunpack.c.l.b16 %v4222
    %v4483 = vunpack.c.l.b16 %v4223
    %v4484 = vunpack.c.l.b16 %v4224
    %v4485 = vunpack.c.l.b16 %v4225
    %v4486 = vunpack.c.l.b16 %v4226
    %v4487 = vunpack.c.l.b16 %v4227
    %v4488 = vunpack.c.l.b16 %v4228
    %v4489 = vunpack.c.l.b16 %v4229
    %v4490 = vunpack.c.l.b16 %v4230
    %v4491 = vunpack.c.l.b16 %v4231
    %v4492 = vunpack.c.l.b16 %v4232
    %v4493 = vunpack.c.l.b16 %v4233
    %v4494 = vunpack.c.l.b16 %v4234
    %v4495 = vunpack.c.l.b16 %v4235
    %v4496 = vunpack.c.l.b16 %v4236
    %v4497 = vunpack.c.l.b16 %v4237
    %v4498 = vunpack.c.l.b16 %v4238
    %v4499 = vunpack.c.l.b16 %v4239
    %v4500 = vunpack.c.l.b16 %v4240
    %v4501 = vunpack.c.l.b16 %v4241
    %v4502 = vunpack.c.l.b16 %v4242
    %v4503 = vunpack.c.l.b16 %v4243
    %v4504 = vunpack.c.l.b16 %v4244
    %v4505 = vunpack.c.l.b16 %v4245
    %v4506 = vunpack.c.l.b16 %v4246
    %v4507 = vunpack.c.l.b16 %v4247
    %v4508 = vunpack.c.l.b16 %v4248
    %v4509 = vunpack.c.l.b16 %v4249
    %v4510 = vunpack.c.l.b16 %v4250
    %v4511 = vunpack.c.l.b16 %v4251
    %v4512 = vunpack.c.l.b16 %v4252
    %v4513 = vunpack.c.l.b16 %v4253
    %v4514 = vunpack.c.l.b16 %v4254
    %v4515 = vunpack.c.l.b16 %v4255
    %v4516 = vunpack.c.l.b16 %v4256
    %v4517 = vunpack.c.l.b16 %v4257
    %v4518 = vunpack.c.l.b16 %v4258
    %v4519 = vunpack.c.l.b16 %v4259
    %v4520 = vunpack.c.l.b16 %v4260
    %v4521 = vunpack.c.l.b16 %v4261
    %v4522 = vunpack.c.l.b16 %v4262
    %v4523 = vunpack.c.l.b16 %v4263
    %v4524 = vunpack.c.l.b16 %v4264
    %v4525 = vunpack.c.l.b16 %v4265
    %v4526 = vunpack.c.l.b16 %v4266
    %v4527 = vunpack.c.l.b16 %v4267
    %v4528 = vunpack.c.l.b16 %v4268
    %v4529 = vunpack.c.l.b16 %v4269
    %v4530 = vunpack.c.l.b16 %v4270
    %v4531 = vunpack.c.l.b16 %v4271
    %v4532 = vunpack.c.l.b16 %v4272
    %v4533 = vunpack.c.l.b16 %v4273
    %v4534 = vunpack.c.l.b16 %v4274
    %v4535 = vunpack.c.l.b16 %v4275
    %v4536 = vunpack.c.l.b16 %v4276
    %v4537 = vunpack.c.l.b16 %v4277
    %v4538 = vunpack.c.l.b16 %v4278
    %v4539 = vunpack.c.l.b16 %v4279
    %v4540 = vunpack.c.l.b16 %v4280
    %v4541 = vunpack.c.l.b16 %v4281
    %v4542 = vunpack.c.l.b16 %v4282
    %v4543 = vpack.c.b16 %v4416, %v4415
    %v4544 = vpack.c.b16 %v4418, %v4417
    %v4545 = vpack.c.b16 %v4420, %v4419
    %v4546 = vpack.c.b16 %v4422, %v4421
    %v4547 = vpack.c.b16 %v4424, %v4423
    %v4548 = vpack.c.b16 %v4426, %v4425
    %v4549 = vpack.c.b16 %v4428, %v4427
    %v4550 = vpack.c.b16 %v4430, %v4429
    %v4551 = vpack.c.b16 %v4432, %v4431
    %v4552 = vpack.c.b16 %v4434, %v4433
    %v4553 = vpack.c.b16 %v4436, %v4435
    %v4554 = vpack.c.b16 %v4438, %v4437
    %v4555 = vpack.c.b16 %v4440, %v4439
    %v4556 = vpack.c.b16 %v4442, %v4441
    %v4557 = vpack.c.b16 %v4444, %v4443
    %v4558 = vpack.c.b16 %v4446, %v4445
    %v4559 = vpack.c.b16 %v4448, %v4447
    %v4560 = vpack.c.b16 %v4450, %v4449
    %v4561 = vpack.c.b16 %v4452, %v4451
    %v4562 = vpack.c.b16 %v4454, %v4453
    %v4563 = vpack.c.b16 %v4456, %v4455
    %v4564 = vpack.c.b16 %v4458, %v4457
    %v4565 = vpack.c.b16 %v4460, %v4459
    %v4566 = vpack.c.b16 %v4462, %v4461
    %v4567 = vpack.c.b16 %v4464, %v4463
    %v4568 = vpack.c.b16 %v4466, %v4465
    %v4569 = vpack.c.b16 %v4468, %v4467
    %v4570 = vpack.c.b16 %v4470, %v4469
    %v4571 = vpack.c.b16 %v4472, %v4471
    %v4572 = vpack.c.b16 %v4474, %v4473
    %v4573 = vpack.c.b16 %v4476, %v4475
    %v4574 = vpack.c.b16 %v4478, %v4477
    %v4575 = vpack.c.b16 %v4480, %v4479
    %v4576 = vpack.c.b16 %v4482, %v4481
    %v4577 = vpack.c.b16 %v4484, %v4483
    %v4578 = vpack.c.b16 %v4486, %v4485
    %v4579 = vpack.c.b16 %v4488, %v4487
    %v4580 = vpack.c.b16 %v4490, %v4489
    %v4581 = vpack.c.b16 %v4492, %v4491
    %v4582 = vpack.c.b16 %v4494, %v4493
    %v4583 = vpack.c.b16 %v4496, %v4495
    %v4584 = vpack.c.b16 %v4498, %v4497
    %v4585 = vpack.c.b16 %v4500, %v4499
    %v4586 = vpack.c.b16 %v4502, %v4501
    %v4587 = vpack.c.b16 %v4504, %v4503
    %v4588 = vpack.c.b16 %v4506, %v4505
    %v4589 = vpack.c.b16 %v4508, %v4507
    %v4590 = vpack.c.b16 %v4510, %v4509
    %v4591 = vpack.c.b16 %v4512, %v4511
    %v4592 = vpack.c.b16 %v4514, %v4513
    %v4593 = vpack.c.b16 %v4516, %v4515
    %v4594 = vpack.c.b16 %v4518, %v4517
    %v4595 = vpack.c.b16 %v4520, %v4519
    %v4596 = vpack.c.b16 %v4522, %v4521
    %v4597 = vpack.c.b16 %v4524, %v4523
    %v4598 = vpack.c.b16 %v4526, %v4525
    %v4599 = vpack.c.b16 %v4528, %v4527
    %v4600 = vpack.c.b16 %v4530, %v4529
    %v4601 = vpack.c.b16 %v4532, %v4531
    %v4602 = vpack.c.b16 %v4534, %v4533
    %v4603 = vpack.c.b16 %v4536, %v4535
    %v4604 = vpack.c.b16 %v4538, %v4537
    %v4605 = vpack.c.b16 %v4540, %v4539
    %v4606 = vpack.c.b16 %v4542, %v4541
    %4671 = vmatpush.bf16.msra.mxu0 %v4550
    %4672 = vmatpush.bf16.msra.mxu0 %v4549
    %4673 = vmatpush.bf16.msra.mxu0 %v4548
    %4674 = vmatpush.bf16.msra.mxu0 %v4547
    %4675 = vmatpush.bf16.msra.mxu0 %v4546
    %4676 = vmatpush.bf16.msra.mxu0 %v4545
    %4677 = vmatpush.bf16.msra.mxu0 %v4544
    %4678 = vmatpush.bf16.msra.mxu0 %v4543
    %4679 = vmatmul.bf16.gmra.mxu0 %v4147
    %v4680 = vpop.f32.mrf.mxu0
    %v4681 = vadd.f32 %v4285, %v4680
    %v4682 = vpop.f32.mrf.mxu0
    %v4683 = vadd.f32 %v4285, %v4682
    %4684 = vdwg.mxu0
    %4685 = vmatpush.bf16.msra.mxu0 %v4558
    %4686 = vmatpush.bf16.msra.mxu0 %v4557
    %4687 = vmatpush.bf16.msra.mxu0 %v4556
    %4688 = vmatpush.bf16.msra.mxu0 %v4555
    %4689 = vmatpush.bf16.msra.mxu0 %v4554
    %4690 = vmatpush.bf16.msra.mxu0 %v4553
    %4691 = vmatpush.bf16.msra.mxu0 %v4552
    %4692 = vmatpush.bf16.msra.mxu0 %v4551
    %4693 = vmatmul.bf16.gmra.mxu0 %v4148
    %v4694 = vpop.f32.mrf.mxu0
    %v4695 = vadd.f32 %v4681, %v4694
    %v4696 = vpop.f32.mrf.mxu0
    %v4697 = vadd.f32 %v4683, %v4696
    %4698 = vdwg.mxu0
    %4699 = vmatpush.bf16.msra.mxu0 %v4566
    %4700 = vmatpush.bf16.msra.mxu0 %v4565
    %4701 = vmatpush.bf16.msra.mxu0 %v4564
    %4702 = vmatpush.bf16.msra.mxu0 %v4563
    %4703 = vmatpush.bf16.msra.mxu0 %v4562
    %4704 = vmatpush.bf16.msra.mxu0 %v4561
    %4705 = vmatpush.bf16.msra.mxu0 %v4560
    %4706 = vmatpush.bf16.msra.mxu0 %v4559
    %4707 = vmatmul.bf16.gmra.mxu0 %v4149
    %v4708 = vpop.f32.mrf.mxu0
    %v4709 = vadd.f32 %v4695, %v4708
    %v4710 = vpop.f32.mrf.mxu0
    %v4711 = vadd.f32 %v4697, %v4710
    %4712 = vdwg.mxu0
    %4713 = vmatpush.bf16.msra.mxu0 %v4574
    %4714 = vmatpush.bf16.msra.mxu0 %v4573
    %4715 = vmatpush.bf16.msra.mxu0 %v4572
    %4716 = vmatpush.bf16.msra.mxu0 %v4571
    %4717 = vmatpush.bf16.msra.mxu0 %v4570
    %4718 = vmatpush.bf16.msra.mxu0 %v4569
    %4719 = vmatpush.bf16.msra.mxu0 %v4568
    %4720 = vmatpush.bf16.msra.mxu0 %v4567
    %4721 = vmatmul.bf16.gmra.mxu0 %v4150
    %v4722 = vpop.f32.mrf.mxu0
    %v4723 = vadd.f32 %v4709, %v4722
    %v4724 = vpop.f32.mrf.mxu0
    %v4725 = vadd.f32 %v4711, %v4724
    %4726 = vdwg.mxu0
    %4727 = vmatpush.bf16.msra.mxu0 %v4582
    %4728 = vmatpush.bf16.msra.mxu0 %v4581
    %4729 = vmatpush.bf16.msra.mxu0 %v4580
    %4730 = vmatpush.bf16.msra.mxu0 %v4579
    %4731 = vmatpush.bf16.msra.mxu0 %v4578
    %4732 = vmatpush.bf16.msra.mxu0 %v4577
    %4733 = vmatpush.bf16.msra.mxu0 %v4576
    %4734 = vmatpush.bf16.msra.mxu0 %v4575
    %4735 = vmatmul.bf16.gmra.mxu0 %v4151
    %v4736 = vpop.f32.mrf.mxu0
    %v4737 = vadd.f32 %v4723, %v4736
    %v4738 = vpop.f32.mrf.mxu0
    %v4739 = vadd.f32 %v4725, %v4738
    %4740 = vdwg.mxu0
    %4741 = vmatpush.bf16.msra.mxu0 %v4590
    %4742 = vmatpush.bf16.msra.mxu0 %v4589
    %4743 = vmatpush.bf16.msra.mxu0 %v4588
    %4744 = vmatpush.bf16.msra.mxu0 %v4587
    %4745 = vmatpush.bf16.msra.mxu0 %v4586
    %4746 = vmatpush.bf16.msra.mxu0 %v4585
    %4747 = vmatpush.bf16.msra.mxu0 %v4584
    %4748 = vmatpush.bf16.msra.mxu0 %v4583
    %4749 = vmatmul.bf16.gmra.mxu0 %v4152
    %v4750 = vpop.f32.mrf.mxu0
    %v4751 = vadd.f32 %v4737, %v4750
    %v4752 = vpop.f32.mrf.mxu0
    %v4753 = vadd.f32 %v4739, %v4752
    %4754 = vdwg.mxu0
    %4755 = vmatpush.bf16.msra.mxu0 %v4598
    %4756 = vmatpush.bf16.msra.mxu0 %v4597
    %4757 = vmatpush.bf16.msra.mxu0 %v4596
    %4758 = vmatpush.bf16.msra.mxu0 %v4595
    %4759 = vmatpush.bf16.msra.mxu0 %v4594
    %4760 = vmatpush.bf16.msra.mxu0 %v4593
    %4761 = vmatpush.bf16.msra.mxu0 %v4592
    %4762 = vmatpush.bf16.msra.mxu0 %v4591
    %4763 = vmatmul.bf16.gmra.mxu0 %v4153
    %v4764 = vpop.f32.mrf.mxu0
    %v4765 = vadd.f32 %v4751, %v4764
    %v4766 = vpop.f32.mrf.mxu0
    %v4767 = vadd.f32 %v4753, %v4766
    %4768 = vdwg.mxu0
    %4769 = vmatpush.bf16.msra.mxu0 %v4606
    %4770 = vmatpush.bf16.msra.mxu0 %v4605
    %4771 = vmatpush.bf16.msra.mxu0 %v4604
    %4772 = vmatpush.bf16.msra.mxu0 %v4603
    %4773 = vmatpush.bf16.msra.mxu0 %v4602
    %4774 = vmatpush.bf16.msra.mxu0 %v4601
    %4775 = vmatpush.bf16.msra.mxu0 %v4600
    %4776 = vmatpush.bf16.msra.mxu0 %v4599
    %4777 = vmatmul.bf16.gmra.mxu0 %v4154
    %v4778 = vpop.f32.mrf.mxu0
    %v4779 = vadd.f32 %v4765, %v4778
    %v4780 = vpop.f32.mrf.mxu0
    %v4781 = vadd.f32 %v4767, %v4780
    %4782 = vdwg.mxu0
    %4783 = vst [vmem:[%s5] sm:$0xff] %v4779
    %4784 = vst [vmem:[%s5 + $0x8] sm:$0xff] %v4781
    // Predicated region
    $region38: #{_adapter_forward_impl.1} parent=1 // pred_check
      _
    $region39: #{_adapter_forward_impl.1} parent=1 // pred_check_branch
      %4786 = sbr.rel (0) target = $region41
    $region40: #{_adapter_forward_impl.1} parent=1 // pred_region
      _
    $region41: #{_adapter_forward_impl.1} parent=1 // pred_fallthru
      _
    // Predicated region
    $region42: #{_adapter_forward_impl.1} parent=1 // pred_check
      _
    $region43: #{_adapter_forward_impl.1} parent=1 // pred_check_branch
      %4788 = sbr.rel (0) target = $region45
    $region44: #{_adapter_forward_impl.1} parent=1 // pred_region
      _
    $region45: #{_adapter_forward_impl.1} parent=1 // pred_fallthru
      _
    // Predicated region
    $region46: #{_adapter_forward_impl.1} parent=1 // pred_check
      _
    $region47: #{_adapter_forward_impl.1} parent=1 // pred_check_branch
      %4790 = sbr.rel (0) target = $region49
    $region48: #{_adapter_forward_impl.1} parent=1 // pred_region
      _
    $region49: #{_adapter_forward_impl.1} parent=1 // pred_fallthru
      _
    // Predicated region
    $region50: #{_adapter_forward_impl.1} parent=1 // pred_check
      _
    $region51: #{_adapter_forward_impl.1} parent=1 // pred_check_branch
      %4792 = sbr.rel (0) target = $region53
    $region52: #{_adapter_forward_impl.1} parent=1 // pred_region
      _
    $region53: #{_adapter_forward_impl.1} parent=1 // pred_fallthru
      _
    %4793 = vsyncpa [#allocation3], 1
    %4794 = vsyncpa [#allocation5], 1
    %4795 = vsyncpa [#allocation8], 1

</llo_original>
